<compile_context>
chip_gen: v5e
topology: v5e:2x2
jax: 0.10.0
libtpu: 0.0.40
codegen_flags: <defaults>
</compile_context>

<pallas_src>
import functools
import math

import jax
import jax.numpy as jnp
from jax import lax
from jax.experimental import pallas as pl
from jax.experimental.pallas import tpu as pltpu

EPS = 1e-5                                  # torch.nn.LayerNorm default
_SQRT_2_OVER_PI = 0.7978845608028654


# --------------------------------------------------------------------------- helpers
def _layer_norm(x, w, b):
    mu = jnp.mean(x, axis=-1, keepdims=True)
    var = jnp.mean(jnp.square(x - mu), axis=-1, keepdims=True)
    return (x - mu) * lax.rsqrt(var + EPS) * w + b


def _gelu_tanh(x):
    return 0.5 * x * (1.0 + jnp.tanh(_SQRT_2_OVER_PI * (x + 0.044715 * x * x * x)))


def _pick_sublane_tile(n, target):
    """Largest tile <= target dividing n; prefer multiples of 16 (bf16 packs 2 rows
    per sublane), fall back to multiples of 8, else n itself."""
    if n <= target:
        return n
    for step in (16, 8):
        t = target - target % step
        while t >= step:
            if n % t == 0:
                return t
            t -= step
    return n


def _pick_lane_tile(n, target):
    """Largest tile <= target dividing n that is a multiple of 128 (else n itself)."""
    if n <= target:
        return n
    for t in range(target - target % 128, 127, -128):
        if n % t == 0:
            return t
    return n


def _nbytes(shape, dtype):
    return math.prod(shape) * jnp.dtype(dtype).itemsize


def _vmem_limit(blocks, temps, scratch=()):
    """Scoped-VMEM budget: double-buffered pipeline blocks + scratch + in-kernel
    temporaries, plus modest headroom (instead of a flat +32 MiB)."""
    b = sum(_nbytes(s, d) for s, d in blocks)
    t = sum(_nbytes(s, d) for s, d in temps)
    sc = sum(_nbytes(s, d) for s, d in scratch)
    return int(2 * b + sc + t) + (12 << 20)


def _device_defaults():
    """Generation-aware defaults: (row_tile, mlp_tile, q_tile, score_budget_bytes).
    v7x has 64 MiB VMEM/TC -> smaller q/row tiles and a tighter score budget;
    v5e/v6e (128 MiB) take the bigger tiles (~85% of HBM roofline at 512 rows)."""
    kind = ""
    try:
        kind = jax.devices()[0].device_kind.lower()
    except Exception:
        pass
    if "v7" in kind:
        return 256, 512, 128, 12 << 20
    return 512, 1024, 256, 24 << 20


# --------------------------------------------------------------------------- kernels
def ln_qkv_kernel(x_ref, ln1w_ref, ln1b_ref, wqkv_ref, qkv_ref):
    # x: (tR, D) ; wqkv: (D, 3D) bf16 with the Q columns pre-scaled by 1/sqrt(dh).
    h = _layer_norm(x_ref[...].astype(jnp.float32), ln1w_ref[...], ln1b_ref[...])
    qkv_ref[...] = jnp.dot(h.astype(jnp.bfloat16), wqkv_ref[...],
                           preferred_element_type=jnp.float32).astype(qkv_ref.dtype)


def attn_proj_ln2_kernel(q_ref, k_ref, v_ref, x_ref, woh_ref, bo_ref,
                         ln2w_ref, ln2b_ref, x1_ref, h2_ref):
    # q: (H, tQ, dh) bf16 (scale already folded into the Q projection weights)
    # k, v: (H, S, dh) bf16 ; x: (tQ, D) ; woh: (H, dh, D) bf16.
    s = jnp.einsum('hqd,hkd->hqk', q_ref[...], k_ref[...],
                   preferred_element_type=jnp.float32)              # (H, tQ, S)
    s = s - jnp.max(s, axis=-1, keepdims=True)
    p = jnp.exp(s)                                                  # unnormalized
    l = jnp.sum(p, axis=-1, keepdims=True)                          # (H, tQ, 1)
    o = jnp.einsum('hqk,hkd->hqd', p.astype(jnp.bfloat16), v_ref[...],
                   preferred_element_type=jnp.float32)              # (H, tQ, dh)
    # Deferred softmax normalization on the small (H, tQ, dh) tensor.
    o = o * pl.reciprocal(l, approx=True)
    # Head merge + out-projection without any (H,tQ,dh)->(tQ,D) relayout:
    #   sum_h o[h] @ wo[h*dh:(h+1)*dh, :]  ==  concat_h(o) @ wo
    proj_h = jnp.einsum('hqd,hdc->hqc', o.astype(jnp.bfloat16), woh_ref[...],
                        preferred_element_type=jnp.float32)         # (H, tQ, D)
    proj = jnp.sum(proj_h, axis=0) + bo_ref[...]                    # (tQ, D)
    x1 = x_ref[...].astype(jnp.float32) + proj                      # first residual
    x1_ref[...] = x1.astype(x1_ref.dtype)
    h2_ref[...] = _layer_norm(x1, ln2w_ref[...], ln2b_ref[...]).astype(h2_ref.dtype)


def mlp_kernel(x1_ref, h2_ref, w1_ref, b1_ref, w2_ref, b2_ref, out_ref, acc_sc):
    # grid = (row tiles [parallel], mlp_dim chunks [arbitrary / accumulated])
    m_idx = pl.program_id(1)

    @pl.when(m_idx == 0)
    def _init():
        acc_sc[...] = x1_ref[...].astype(jnp.float32) + b2_ref[...]  # 2nd residual + bias

    t = jnp.dot(h2_ref[...], w1_ref[...],
                preferred_element_type=jnp.float32) + b1_ref[...]    # (tR, tM)
    acc_sc[...] += jnp.dot(_gelu_tanh(t).astype(jnp.bfloat16), w2_ref[...],
                           preferred_element_type=jnp.float32)

    @pl.when(m_idx == pl.num_programs(1) - 1)
    def _finalize():
        out_ref[...] = acc_sc[...].astype(out_ref.dtype)


# --------------------------------------------------------------------------- wrapper
@functools.partial(jax.jit,
                   static_argnames=("num_heads", "row_tile", "mlp_tile", "q_tile"))
def flash_attention_block(x, params, num_heads, *,
                          row_tile=None, mlp_tile=None, q_tile=None):
    B, S, D = x.shape
    assert D % num_heads == 0
    H = num_heads
    dh = D // H
    M = params["w1"].shape[1]
    R = B * S
    scale = dh ** -0.5                       # F.scaled_dot_product_attention default

    d_row, d_mlp, d_q, score_budget = _device_defaults()
    row_tile = d_row if row_tile is None else row_tile
    mlp_tile = d_mlp if mlp_tile is None else mlp_tile
    q_tile = d_q if q_tile is None else q_tile

    tR = _pick_sublane_tile(R, row_tile)
    tQ = _pick_sublane_tile(S, q_tile)
    tM = _pick_lane_tile(M, mlp_tile)
    # Kernel 2 is not a streaming "flash" kernel: the full (H, tQ, S) f32 scores live
    # in VMEM, so bound tQ by a generation-specific score budget.
    # TODO(synk): for very long S, add a KV-tile grid axis with online softmax.
    while tQ > 16 and tQ % 16 == 0 and H * tQ * S * 4 > score_budget:
        tQ //= 2
    nR, nQ, nM = R // tR, S // tQ, M // tM

    f32, bf16 = jnp.float32, jnp.bfloat16
    vec = lambda p: p.reshape(1, -1)         # 1-D params -> (1, N) for TPU layout

    x2d = x.reshape(R, D)
    ln1w, ln1b = vec(params["ln1_w"]), vec(params["ln1_b"])
    ln2w, ln2b = vec(params["ln2_w"]), vec(params["ln2_b"])
    # Fold 1/sqrt(dh) into the Q projection columns (one-time op on weights), then
    # cast matmul operands to bf16 (f32 accumulation inside the kernels).
    wqkv = params["wqkv"].at[:, :D].multiply(scale).astype(bf16)
    woh = params["wo"].astype(bf16).reshape(H, dh, D)    # rows grouped (head, dh)
    w1 = params["w1"].astype(bf16)
    w2 = params["w2"].astype(bf16)
    bo, b1, b2 = vec(params["bo"]), vec(params["b1"]), vec(params["b2"])

    # ---- kernel 1: LN1 + fused QKV projection, row-tiled over (B*S) ----------------
    # TODO(synk): grid-invariant weight specs (wqkv/ln1, wo/ln2/b2 below) could use
    # pipeline_mode=pl.Buffered(1) to drop their second pipeline buffer once that
    # BlockSpec kwarg is available on the targeted jax version.
    full2d = lambda a: pl.BlockSpec(a.shape, lambda r: (0, 0))
    qkv_limit = _vmem_limit(
        blocks=[((tR, D), x.dtype), ((1, D), f32), ((1, D), f32),
                ((D, 3 * D), bf16), ((tR, 3 * D), bf16)],
        temps=[((tR, D), f32), ((tR, D), bf16), ((tR, 3 * D), f32)])
    qkv = pl.pallas_call(
        ln_qkv_kernel,
        out_shape=jax.ShapeDtypeStruct((R, 3 * D), bf16),
        grid_spec=pltpu.PrefetchScalarGridSpec(
            num_scalar_prefetch=0,
            grid=(nR,),
            in_specs=[pl.BlockSpec((tR, D), lambda r: (r, 0)),
                      full2d(ln1w), full2d(ln1b), full2d(wqkv)],
            out_specs=pl.BlockSpec((tR, 3 * D), lambda r: (r, 0))),
        compiler_params=pltpu.CompilerParams(
            dimension_semantics=("parallel",), vmem_limit_bytes=qkv_limit),
    )(x2d, ln1w, ln1b, wqkv)

    # ---- head split (XLA reshape/transpose). The merge-side HBM round trip is gone
    # (fused into kernel 2); the split stays in XLA so the attention kernel keeps the
    # proven leading-batch-dim einsum layout.
    # TODO(synk): the split could also be pulled in-kernel by indexing the
    # (B,S,3,H,dh) view with BlockSpecs + an in-VMEM regroup.
    qkv_h = qkv.reshape(B, S, 3, H, dh)
    qkv_h = jnp.transpose(qkv_h, (2, 0, 3, 1, 4)).reshape(3, B * H, S, dh)
    q, k, v = qkv_h[0], qkv_h[1], qkv_h[2]               # (B*H, S, dh) bf16

    # ---- kernel 2: attention + out-proj + residual + LN2, grid = (image, q-tile) ---
    row_block = lambda b, qi: (b * nQ + qi, 0)           # flattened (B*S) row blocks
    attn_limit = _vmem_limit(
        blocks=[((H, tQ, dh), bf16), ((H, S, dh), bf16), ((H, S, dh), bf16),
                ((tQ, D), x.dtype), ((H, dh, D), bf16),
                ((1, D), f32), ((1, D), f32), ((1, D), f32),
                ((tQ, D), f32), ((tQ, D), bf16)],
        temps=[((H, tQ, S), f32), ((H, tQ, S), f32), ((H, tQ, S), bf16),
               ((H, tQ, dh), f32), ((H, tQ, D), f32), ((tQ, D), f32)])
    x1, h2 = pl.pallas_call(
        attn_proj_ln2_kernel,
        out_shape=(jax.ShapeDtypeStruct((R, D), f32),     # x1 = x + out_proj(attn)
                   jax.ShapeDtypeStruct((R, D), bf16)),   # h2 = LN2(x1)
        grid_spec=pltpu.PrefetchScalarGridSpec(
            num_scalar_prefetch=0,
            grid=(B, nQ),
            in_specs=[pl.BlockSpec((H, tQ, dh), lambda b, qi: (b, qi, 0)),   # q tile
                      pl.BlockSpec((H, S, dh), lambda b, qi: (b, 0, 0)),     # k
                      pl.BlockSpec((H, S, dh), lambda b, qi: (b, 0, 0)),     # v
                      pl.BlockSpec((tQ, D), row_block),                      # x rows
                      pl.BlockSpec((H, dh, D), lambda b, qi: (0, 0, 0)),     # wo
                      pl.BlockSpec((1, D), lambda b, qi: (0, 0)),            # bo
                      pl.BlockSpec((1, D), lambda b, qi: (0, 0)),            # ln2 w
                      pl.BlockSpec((1, D), lambda b, qi: (0, 0))],           # ln2 b
            out_specs=[pl.BlockSpec((tQ, D), row_block),
                       pl.BlockSpec((tQ, D), row_block)]),
        compiler_params=pltpu.CompilerParams(
            dimension_semantics=("parallel", "parallel"),
            vmem_limit_bytes=attn_limit),
    )(q, k, v, x2d, woh, bo, ln2w, ln2b)

    # ---- kernel 3: chunked MLP + second residual ------------------------------------
    mlp_limit = _vmem_limit(
        blocks=[((tR, D), f32), ((tR, D), bf16), ((D, tM), bf16), ((1, tM), f32),
                ((tM, D), bf16), ((1, D), f32), ((tR, D), x.dtype)],
        temps=[((tR, tM), f32), ((tR, tM), f32), ((tR, tM), bf16), ((tR, D), f32)],
        scratch=[((tR, D), f32)])
    out2d = pl.pallas_call(
        mlp_kernel,
        out_shape=jax.ShapeDtypeStruct((R, D), x.dtype),
        grid_spec=pltpu.PrefetchScalarGridSpec(
            num_scalar_prefetch=0,
            grid=(nR, nM),
            in_specs=[pl.BlockSpec((tR, D), lambda r, m: (r, 0)),    # x1 (residual)
                      pl.BlockSpec((tR, D), lambda r, m: (r, 0)),    # h2 = LN2(x1)
                      pl.BlockSpec((D, tM), lambda r, m: (0, m)),    # w1 chunk
                      pl.BlockSpec((1, tM), lambda r, m: (0, m)),    # b1 chunk
                      pl.BlockSpec((tM, D), lambda r, m: (m, 0)),    # w2 chunk
                      pl.BlockSpec((1, D), lambda r, m: (0, 0))],    # b2
            out_specs=pl.BlockSpec((tR, D), lambda r, m: (r, 0)),
            scratch_shapes=[pltpu.VMEM((tR, D), jnp.float32)]),      # f32 accumulator
        compiler_params=pltpu.CompilerParams(
            dimension_semantics=("parallel", "arbitrary"),
            vmem_limit_bytes=mlp_limit),
    )(x1, h2, w1, b1, w2, b2)

    # TODO(synk): nonzero dropout (drop_weights / drop_output / MLP dropouts) would
    # need pltpu.prng_seed / prng_random_bits in-kernel; rate=0.0 -> identity here.
    return out2d.reshape(B, S, D)


# --------------------------------------------------------------------------- reference
def reference(x, params, num_heads):
    """Pure-JAX f32 reference mirroring the PyTorch forward (exact-erf GELU)."""
    def ln(z, w, b):
        mu = z.mean(-1, keepdims=True)
        var = ((z - mu) ** 2).mean(-1, keepdims=True)
        return (z - mu) / jnp.sqrt(var + EPS) * w + b

    B, S, D = x.shape
    dh = D // num_heads
    h = ln(x, params["ln1_w"], params["ln1_b"])
    qkv = (h @ params["wqkv"]).reshape(B, S, 3, num_heads, dh)
    q = jnp.transpose(qkv[:, :, 0], (0, 2, 1, 3))
    k = jnp.transpose(qkv[:, :, 1], (0, 2, 1, 3))
    v = jnp.transpose(qkv[:, :, 2], (0, 2, 1, 3))
    s = jnp.einsum("bhqd,bhkd->bhqk", q, k) * (dh ** -0.5)
    p = jax.nn.softmax(s, axis=-1)
    o = jnp.einsum("bhqk,bhkd->bhqd", p, v)
    o = jnp.transpose(o, (0, 2, 1, 3)).reshape(B, S, D)
    x1 = x + (o @ params["wo"] + params["bo"])
    h2 = ln(x1, params["ln2_w"], params["ln2_b"])
    m = jax.nn.gelu(h2 @ params["w1"] + params["b1"], approximate=False)
    m = m @ params["w2"] + params["b2"]
    return x1 + m


def init_params(key, hidden, mlp_dim):
    ks = jax.random.split(key, 5)
    std = 0.02
    return {
        "ln1_w": jnp.ones((hidden,), jnp.float32),
        "ln1_b": jnp.zeros((hidden,), jnp.float32),
        # qkv: Linear(hidden, 3*hidden, bias=False); stored as (D, 3D) so forward is
        # x @ wqkv (== x @ W_torch.T); columns ordered (qkv, head, dh) like torch.
        "wqkv": std * jax.random.normal(ks[0], (hidden, 3 * hidden), jnp.float32),
        "wo": std * jax.random.normal(ks[1], (hidden, hidden), jnp.float32),
        "bo": jnp.zeros((hidden,), jnp.float32),
        "ln2_w": jnp.ones((hidden,), jnp.float32),
        "ln2_b": jnp.zeros((hidden,), jnp.float32),
        "w1": std * jax.random.normal(ks[2], (hidden, mlp_dim), jnp.float32),
        "b1": 0.01 * jax.random.normal(ks[3], (mlp_dim,), jnp.float32),
        "w2": std * jax.random.normal(ks[4], (mlp_dim, hidden), jnp.float32),
        "b2": jnp.zeros((hidden,), jnp.float32),
    }


if __name__ == "__main__":
    B, S, hidden, mlp_dim, num_heads = 2, 128, 128, 512, 4

    key = jax.random.PRNGKey(0)
    kx, kp = jax.random.split(key)
    x = jax.random.normal(kx, (B, S, hidden), jnp.float32)
    params = init_params(kp, hidden, mlp_dim)

    # Tiles chosen so the toy shapes exercise row tiling, a multi-step q-tile grid
    # with the flattened-row index_map, and the mlp_dim-chunked accumulator
    # (nR=2, nQ=2, nM=2).
    out = flash_attention_block(x, params, num_heads=num_heads,
                                row_tile=128, mlp_tile=256, q_tile=64)
    out = jax.block_until_ready(out)

    ref = reference(x, params, num_heads)
    assert out.shape == (B, S, hidden)
    max_err = float(jnp.max(jnp.abs(out - ref)))
    # bf16 MXU operands + tanh-GELU + approx reciprocal vs. the pure-f32 reference.
    assert max_err < 2e-2, f"mismatch vs. pure-JAX reference: max abs err {max_err}"

    print("KERNEL_OK")
</pallas_src>

<mosaic_0001>
module attributes {stable_mosaic.version = 11 : i64} {
  func.func @ln_qkv_kernel(%arg0: i32, %arg1: memref<128x128xf32, #tpu.memory_space<vmem>>, %arg2: memref<1x128xf32, #tpu.memory_space<vmem>>, %arg3: memref<1x128xf32, #tpu.memory_space<vmem>>, %arg4: memref<128x384xbf16, #tpu.memory_space<vmem>>, %arg5: memref<128x384xbf16, #tpu.memory_space<vmem>>) attributes {dimension_semantics = [#tpu.dimension_semantics<parallel>], iteration_bounds = array<i64: 2>, scalar_prefetch = 0 : i64, scratch_operands = 0 : i64, tpu.core_type = #tpu.core_type<tc>, window_params = [{transform_indices = @transform_0, window_bounds = array<i64: 128, 128>}, {pipeline_mode = #tpu.pipeline_mode<synchronous>, transform_indices = @transform_1, window_bounds = array<i64: 1, 128>}, {pipeline_mode = #tpu.pipeline_mode<synchronous>, transform_indices = @transform_2, window_bounds = array<i64: 1, 128>}, {pipeline_mode = #tpu.pipeline_mode<synchronous>, transform_indices = @transform_3, window_bounds = array<i64: 128, 384>}, {transform_indices = @transform_4, window_bounds = array<i64: 128, 384>}]} {
    %c0 = arith.constant 0 : index
    %c0_0 = arith.constant 0 : index
    %0 = vector.load %arg1[%c0, %c0_0] : memref<128x128xf32, #tpu.memory_space<vmem>>, vector<128x128xf32>
    %c0_1 = arith.constant 0 : index
    %c0_2 = arith.constant 0 : index
    %1 = vector.load %arg2[%c0_1, %c0_2] : memref<1x128xf32, #tpu.memory_space<vmem>>, vector<1x128xf32>
    %c0_3 = arith.constant 0 : index
    %c0_4 = arith.constant 0 : index
    %2 = vector.load %arg3[%c0_3, %c0_4] : memref<1x128xf32, #tpu.memory_space<vmem>>, vector<1x128xf32>
    %cst = arith.constant dense<0.000000e+00> : vector<128xf32>
    %3 = vector.multi_reduction <add>, %0, %cst [1] : vector<128x128xf32> to vector<128xf32>
    %4 = vector.shape_cast %3 : vector<128xf32> to vector<128x1xf32>
    %cst_5 = arith.constant 1.280000e+02 : f32
    %5 = vector.broadcast %cst_5 : f32 to vector<128x1xf32>
    %6 = arith.divf %4, %5 : vector<128x1xf32>
    %7 = vector.broadcast %6 : vector<128x1xf32> to vector<128x128xf32>
    %8 = arith.subf %0, %7 : vector<128x128xf32>
    %9 = arith.mulf %8, %8 : vector<128x128xf32>
    %cst_6 = arith.constant dense<0.000000e+00> : vector<128xf32>
    %10 = vector.multi_reduction <add>, %9, %cst_6 [1] : vector<128x128xf32> to vector<128xf32>
    %11 = vector.shape_cast %10 : vector<128xf32> to vector<128x1xf32>
    %cst_7 = arith.constant 1.280000e+02 : f32
    %12 = vector.broadcast %cst_7 : f32 to vector<128x1xf32>
    %13 = arith.divf %11, %12 : vector<128x1xf32>
    %14 = vector.broadcast %6 : vector<128x1xf32> to vector<128x128xf32>
    %15 = arith.subf %0, %14 : vector<128x128xf32>
    %cst_8 = arith.constant 9.99999974E-6 : f32
    %16 = vector.broadcast %cst_8 : f32 to vector<128x1xf32>
    %17 = arith.addf %13, %16 : vector<128x1xf32>
    %18 = math.rsqrt %17 : vector<128x1xf32>
    %19 = vector.broadcast %18 : vector<128x1xf32> to vector<128x128xf32>
    %20 = arith.mulf %15, %19 : vector<128x128xf32>
    %21 = vector.broadcast %1 : vector<1x128xf32> to vector<128x128xf32>
    %22 = arith.mulf %20, %21 : vector<128x128xf32>
    %23 = vector.broadcast %2 : vector<1x128xf32> to vector<128x128xf32>
    %24 = arith.addf %22, %23 : vector<128x128xf32>
    %25 = arith.truncf %24 : vector<128x128xf32> to vector<128x128xbf16>
    %c0_9 = arith.constant 0 : index
    %c0_10 = arith.constant 0 : index
    %26 = vector.load %arg4[%c0_9, %c0_10] : memref<128x384xbf16, #tpu.memory_space<vmem>>, vector<128x384xbf16>
    %cst_11 = arith.constant dense<0.000000e+00> : vector<128x384xf32>
    %27 = tpu.matmul %25, %26, %cst_11 {dimension_numbers = #tpu.dot_dimension_numbers<[1], [0], [0], [1], [0, 0, 1, 1], [], []>} : vector<128x128xbf16>, vector<128x384xbf16>, vector<128x384xf32> -> vector<128x384xf32>
    %28 = arith.truncf %27 : vector<128x384xf32> to vector<128x384xbf16>
    %c0_12 = arith.constant 0 : index
    %c0_13 = arith.constant 0 : index
    %29 = vector.load %arg5[%c0_12, %c0_13] : memref<128x384xbf16, #tpu.memory_space<vmem>>, vector<128x384xbf16>
    tpu.vector_store %arg5[%c0_12, %c0_13], %28 {strides = array<i32>} : memref<128x384xbf16, #tpu.memory_space<vmem>>, vector<128x384xbf16>,
    return
  }
  func.func @transform_0(%arg0: i32) -> (i32, i32) {
    %c0_i32 = arith.constant 0 : i32
    %c0_i32_0 = arith.constant 0 : i32
    return %arg0, %c0_i32 : i32, i32
  }
  func.func @transform_1(%arg0: i32) -> (i32, i32) {
    %c0_i32 = arith.constant 0 : i32
    %c0_i32_0 = arith.constant 0 : i32
    %c0_i32_1 = arith.constant 0 : i32
    return %c0_i32, %c0_i32_0 : i32, i32
  }
  func.func @transform_2(%arg0: i32) -> (i32, i32) {
    %c0_i32 = arith.constant 0 : i32
    %c0_i32_0 = arith.constant 0 : i32
    %c0_i32_1 = arith.constant 0 : i32
    return %c0_i32, %c0_i32_0 : i32, i32
  }
  func.func @transform_3(%arg0: i32) -> (i32, i32) {
    %c0_i32 = arith.constant 0 : i32
    %c0_i32_0 = arith.constant 0 : i32
    %c0_i32_1 = arith.constant 0 : i32
    return %c0_i32, %c0_i32_0 : i32, i32
  }
  func.func @transform_4(%arg0: i32) -> (i32, i32) {
    %c0_i32 = arith.constant 0 : i32
    %c0_i32_0 = arith.constant 0 : i32
    return %arg0, %c0_i32 : i32, i32
  }
}

module attributes {stable_mosaic.version = 11 : i64} {
  func.func @attn_proj_ln2_kernel(%arg0: i32, %arg1: i32, %arg2: memref<4x64x32xbf16, #tpu.memory_space<vmem>>, %arg3: memref<4x128x32xbf16, #tpu.memory_space<vmem>>, %arg4: memref<4x128x32xbf16, #tpu.memory_space<vmem>>, %arg5: memref<64x128xf32, #tpu.memory_space<vmem>>, %arg6: memref<4x32x128xbf16, #tpu.memory_space<vmem>>, %arg7: memref<1x128xf32, #tpu.memory_space<vmem>>, %arg8: memref<1x128xf32, #tpu.memory_space<vmem>>, %arg9: memref<1x128xf32, #tpu.memory_space<vmem>>, %arg10: memref<64x128xf32, #tpu.memory_space<vmem>>, %arg11: memref<64x128xbf16, #tpu.memory_space<vmem>>) attributes {dimension_semantics = [#tpu.dimension_semantics<parallel>, #tpu.dimension_semantics<parallel>], iteration_bounds = array<i64: 2, 2>, scalar_prefetch = 0 : i64, scratch_operands = 0 : i64, tpu.core_type = #tpu.core_type<tc>, window_params = [{transform_indices = @transform_0, window_bounds = array<i64: 4, 64, 32>}, {transform_indices = @transform_1, window_bounds = array<i64: 4, 128, 32>}, {transform_indices = @transform_2, window_bounds = array<i64: 4, 128, 32>}, {transform_indices = @transform_3, window_bounds = array<i64: 64, 128>}, {pipeline_mode = #tpu.pipeline_mode<synchronous>, transform_indices = @transform_4, window_bounds = array<i64: 4, 32, 128>}, {pipeline_mode = #tpu.pipeline_mode<synchronous>, transform_indices = @transform_5, window_bounds = array<i64: 1, 128>}, {pipeline_mode = #tpu.pipeline_mode<synchronous>, transform_indices = @transform_6, window_bounds = array<i64: 1, 128>}, {pipeline_mode = #tpu.pipeline_mode<synchronous>, transform_indices = @transform_7, window_bounds = array<i64: 1, 128>}, {transform_indices = @transform_8, window_bounds = array<i64: 64, 128>}, {transform_indices = @transform_9, window_bounds = array<i64: 64, 128>}]} {
    %c0 = arith.constant 0 : index
    %c0_0 = arith.constant 0 : index
    %c0_1 = arith.constant 0 : index
    %0 = vector.load %arg2[%c0, %c0_0, %c0_1] : memref<4x64x32xbf16, #tpu.memory_space<vmem>>, vector<4x64x32xbf16>
    %c0_2 = arith.constant 0 : index
    %c0_3 = arith.constant 0 : index
    %c0_4 = arith.constant 0 : index
    %1 = vector.load %arg3[%c0_2, %c0_3, %c0_4] : memref<4x128x32xbf16, #tpu.memory_space<vmem>>, vector<4x128x32xbf16>
    "tpu.trace_start"() <{level = 10 : i32, message = "hqd,hkd->hqk"}> : () -> ()
    %cst = arith.constant dense<0.000000e+00> : vector<4x64x128xf32>
    %2 = tpu.matmul %0, %1, %cst {dimension_numbers = #tpu.dot_dimension_numbers<[2], [2], [1], [1], [0, 0, 0, 1, 1, 1], [0], [0]>} : vector<4x64x32xbf16>, vector<4x128x32xbf16>, vector<4x64x128xf32> -> vector<4x64x128xf32>
    "tpu.trace_stop"() : () -> ()
    %cst_5 = arith.constant dense<0xFF800000> : vector<4x64xf32>
    %3 = vector.multi_reduction <maximumf>, %2, %cst_5 [2] : vector<4x64x128xf32> to vector<4x64xf32>
    %4 = vector.shape_cast %3 : vector<4x64xf32> to vector<4x64x1xf32>
    %5 = vector.broadcast %4 : vector<4x64x1xf32> to vector<4x64x128xf32>
    %6 = arith.subf %2, %5 : vector<4x64x128xf32>
    %7 = math.exp %6 : vector<4x64x128xf32>
    %cst_6 = arith.constant dense<0.000000e+00> : vector<4x64xf32>
    %8 = vector.multi_reduction <add>, %7, %cst_6 [2] : vector<4x64x128xf32> to vector<4x64xf32>
    %9 = vector.shape_cast %8 : vector<4x64xf32> to vector<4x64x1xf32>
    %10 = arith.truncf %7 : vector<4x64x128xf32> to vector<4x64x128xbf16>
    %c0_7 = arith.constant 0 : index
    %c0_8 = arith.constant 0 : index
    %c0_9 = arith.constant 0 : index
    %11 = vector.load %arg4[%c0_7, %c0_8, %c0_9] : memref<4x128x32xbf16, #tpu.memory_space<vmem>>, vector<4x128x32xbf16>
    "tpu.trace_start"() <{level = 10 : i32, message = "hqk,hkd->hqd"}> : () -> ()
    %cst_10 = arith.constant dense<0.000000e+00> : vector<4x64x32xf32>
    %12 = tpu.matmul %10, %11, %cst_10 {dimension_numbers = #tpu.dot_dimension_numbers<[2], [1], [1], [2], [0, 0, 0, 1, 1, 2], [0], [0]>} : vector<4x64x128xbf16>, vector<4x128x32xbf16>, vector<4x64x32xf32> -> vector<4x64x32xf32>
    "tpu.trace_stop"() : () -> ()
    %13 = tpu.reciprocal %9 {approx = true} : vector<4x64x1xf32> -> vector<4x64x1xf32>
    %14 = vector.broadcast %13 : vector<4x64x1xf32> to vector<4x64x32xf32>
    %15 = arith.mulf %12, %14 : vector<4x64x32xf32>
    %16 = arith.truncf %15 : vector<4x64x32xf32> to vector<4x64x32xbf16>
    %c0_11 = arith.constant 0 : index
    %c0_12 = arith.constant 0 : index
    %c0_13 = arith.constant 0 : index
    %17 = vector.load %arg6[%c0_11, %c0_12, %c0_13] : memref<4x32x128xbf16, #tpu.memory_space<vmem>>, vector<4x32x128xbf16>
    "tpu.trace_start"() <{level = 10 : i32, message = "hqd,hdc->hqc"}> : () -> ()
    %cst_14 = arith.constant dense<0.000000e+00> : vector<4x64x128xf32>
    %18 = tpu.matmul %16, %17, %cst_14 {dimension_numbers = #tpu.dot_dimension_numbers<[2], [1], [1], [2], [0, 0, 0, 1, 1, 2], [0], [0]>} : vector<4x64x32xbf16>, vector<4x32x128xbf16>, vector<4x64x128xf32> -> vector<4x64x128xf32>
    "tpu.trace_stop"() : () -> ()
    %cst_15 = arith.constant dense<0.000000e+00> : vector<64x128xf32>
    %19 = vector.multi_reduction <add>, %18, %cst_15 [0] : vector<4x64x128xf32> to vector<64x128xf32>
    %c0_16 = arith.constant 0 : index
    %c0_17 = arith.constant 0 : index
    %20 = vector.load %arg7[%c0_16, %c0_17] : memref<1x128xf32, #tpu.memory_space<vmem>>, vector<1x128xf32>
    %21 = vector.broadcast %20 : vector<1x128xf32> to vector<64x128xf32>
    %22 = arith.addf %19, %21 : vector<64x128xf32>
    %c0_18 = arith.constant 0 : index
    %c0_19 = arith.constant 0 : index
    %23 = vector.load %arg5[%c0_18, %c0_19] : memref<64x128xf32, #tpu.memory_space<vmem>>, vector<64x128xf32>
    %24 = arith.addf %23, %22 : vector<64x128xf32>
    %c0_20 = arith.constant 0 : index
    %c0_21 = arith.constant 0 : index
    %25 = vector.load %arg10[%c0_20, %c0_21] : memref<64x128xf32, #tpu.memory_space<vmem>>, vector<64x128xf32>
    tpu.vector_store %arg10[%c0_20, %c0_21], %24 {strides = array<i32>} : memref<64x128xf32, #tpu.memory_space<vmem>>, vector<64x128xf32>,
    %c0_22 = arith.constant 0 : index
    %c0_23 = arith.constant 0 : index
    %26 = vector.load %arg8[%c0_22, %c0_23] : memref<1x128xf32, #tpu.memory_space<vmem>>, vector<1x128xf32>
    %c0_24 = arith.constant 0 : index
    %c0_25 = arith.constant 0 : index
    %27 = vector.load %arg9[%c0_24, %c0_25] : memref<1x128xf32, #tpu.memory_space<vmem>>, vector<1x128xf32>
    %cst_26 = arith.constant dense<0.000000e+00> : vector<64xf32>
    %28 = vector.multi_reduction <add>, %24, %cst_26 [1] : vector<64x128xf32> to vector<64xf32>
    %29 = vector.shape_cast %28 : vector<64xf32> to vector<64x1xf32>
    %cst_27 = arith.constant 1.280000e+02 : f32
    %30 = vector.broadcast %cst_27 : f32 to vector<64x1xf32>
    %31 = arith.divf %29, %30 : vector<64x1xf32>
    %32 = vector.broadcast %31 : vector<64x1xf32> to vector<64x128xf32>
    %33 = arith.subf %24, %32 : vector<64x128xf32>
    %34 = arith.mulf %33, %33 : vector<64x128xf32>
    %cst_28 = arith.constant dense<0.000000e+00> : vector<64xf32>
    %35 = vector.multi_reduction <add>, %34, %cst_28 [1] : vector<64x128xf32> to vector<64xf32>
    %36 = vector.shape_cast %35 : vector<64xf32> to vector<64x1xf32>
    %cst_29 = arith.constant 1.280000e+02 : f32
    %37 = vector.broadcast %cst_29 : f32 to vector<64x1xf32>
    %38 = arith.divf %36, %37 : vector<64x1xf32>
    %39 = vector.broadcast %31 : vector<64x1xf32> to vector<64x128xf32>
    %40 = arith.subf %24, %39 : vector<64x128xf32>
    %cst_30 = arith.constant 9.99999974E-6 : f32
    %41 = vector.broadcast %cst_30 : f32 to vector<64x1xf32>
    %42 = arith.addf %38, %41 : vector<64x1xf32>
    %43 = math.rsqrt %42 : vector<64x1xf32>
    %44 = vector.broadcast %43 : vector<64x1xf32> to vector<64x128xf32>
    %45 = arith.mulf %40, %44 : vector<64x128xf32>
    %46 = vector.broadcast %26 : vector<1x128xf32> to vector<64x128xf32>
    %47 = arith.mulf %45, %46 : vector<64x128xf32>
    %48 = vector.broadcast %27 : vector<1x128xf32> to vector<64x128xf32>
    %49 = arith.addf %47, %48 : vector<64x128xf32>
    %50 = arith.truncf %49 : vector<64x128xf32> to vector<64x128xbf16>
    %c0_31 = arith.constant 0 : index
    %c0_32 = arith.constant 0 : index
    %51 = vector.load %arg11[%c0_31, %c0_32] : memref<64x128xbf16, #tpu.memory_space<vmem>>, vector<64x128xbf16>
    tpu.vector_store %arg11[%c0_31, %c0_32], %50 {strides = array<i32>} : memref<64x128xbf16, #tpu.memory_space<vmem>>, vector<64x128xbf16>,
    return
  }
  func.func @transform_0(%arg0: i32, %arg1: i32) -> (i32, i32, i32) {
    %c0_i32 = arith.constant 0 : i32
    %c0_i32_0 = arith.constant 0 : i32
    return %arg0, %arg1, %c0_i32 : i32, i32, i32
  }
  func.func @transform_1(%arg0: i32, %arg1: i32) -> (i32, i32, i32) {
    %c0_i32 = arith.constant 0 : i32
    %c0_i32_0 = arith.constant 0 : i32
    %c0_i32_1 = arith.constant 0 : i32
    return %arg0, %c0_i32, %c0_i32_0 : i32, i32, i32
  }
  func.func @transform_2(%arg0: i32, %arg1: i32) -> (i32, i32, i32) {
    %c0_i32 = arith.constant 0 : i32
    %c0_i32_0 = arith.constant 0 : i32
    %c0_i32_1 = arith.constant 0 : i32
    return %arg0, %c0_i32, %c0_i32_0 : i32, i32, i32
  }
  func.func @transform_3(%arg0: i32, %arg1: i32) -> (i32, i32) {
    %c2_i32 = arith.constant 2 : i32
    %0 = arith.muli %arg0, %c2_i32 : i32
    %1 = arith.addi %0, %arg1 : i32
    %c0_i32 = arith.constant 0 : i32
    %c0_i32_0 = arith.constant 0 : i32
    return %1, %c0_i32 : i32, i32
  }
  func.func @transform_4(%arg0: i32, %arg1: i32) -> (i32, i32, i32) {
    %c0_i32 = arith.constant 0 : i32
    %c0_i32_0 = arith.constant 0 : i32
    %c0_i32_1 = arith.constant 0 : i32
    %c0_i32_2 = arith.constant 0 : i32
    return %c0_i32, %c0_i32_0, %c0_i32_1 : i32, i32, i32
  }
  func.func @transform_5(%arg0: i32, %arg1: i32) -> (i32, i32) {
    %c0_i32 = arith.constant 0 : i32
    %c0_i32_0 = arith.constant 0 : i32
    %c0_i32_1 = arith.constant 0 : i32
    return %c0_i32, %c0_i32_0 : i32, i32
  }
  func.func @transform_6(%arg0: i32, %arg1: i32) -> (i32, i32) {
    %c0_i32 = arith.constant 0 : i32
    %c0_i32_0 = arith.constant 0 : i32
    %c0_i32_1 = arith.constant 0 : i32
    return %c0_i32, %c0_i32_0 : i32, i32
  }
  func.func @transform_7(%arg0: i32, %arg1: i32) -> (i32, i32) {
    %c0_i32 = arith.constant 0 : i32
    %c0_i32_0 = arith.constant 0 : i32
    %c0_i32_1 = arith.constant 0 : i32
    return %c0_i32, %c0_i32_0 : i32, i32
  }
  func.func @transform_8(%arg0: i32, %arg1: i32) -> (i32, i32) {
    %c2_i32 = arith.constant 2 : i32
    %0 = arith.muli %arg0, %c2_i32 : i32
    %1 = arith.addi %0, %arg1 : i32
    %c0_i32 = arith.constant 0 : i32
    %c0_i32_0 = arith.constant 0 : i32
    return %1, %c0_i32 : i32, i32
  }
  func.func @transform_9(%arg0: i32, %arg1: i32) -> (i32, i32) {
    %c2_i32 = arith.constant 2 : i32
    %0 = arith.muli %arg0, %c2_i32 : i32
    %1 = arith.addi %0, %arg1 : i32
    %c0_i32 = arith.constant 0 : i32
    %c0_i32_0 = arith.constant 0 : i32
    return %1, %c0_i32 : i32, i32
  }
}

module attributes {stable_mosaic.version = 11 : i64} {
  func.func @mlp_kernel(%arg0: i32, %arg1: i32, %arg2: memref<128x128xf32, #tpu.memory_space<vmem>>, %arg3: memref<128x128xbf16, #tpu.memory_space<vmem>>, %arg4: memref<128x256xbf16, #tpu.memory_space<vmem>>, %arg5: memref<1x256xf32, #tpu.memory_space<vmem>>, %arg6: memref<256x128xbf16, #tpu.memory_space<vmem>>, %arg7: memref<1x128xf32, #tpu.memory_space<vmem>>, %arg8: memref<128x128xf32, #tpu.memory_space<vmem>>, %arg9: memref<128x128xf32, #tpu.memory_space<vmem>>) attributes {dimension_semantics = [#tpu.dimension_semantics<parallel>, #tpu.dimension_semantics<arbitrary>], iteration_bounds = array<i64: 2, 2>, scalar_prefetch = 0 : i64, scratch_operands = 1 : i64, tpu.core_type = #tpu.core_type<tc>, window_params = [{transform_indices = @transform_0, window_bounds = array<i64: 128, 128>}, {transform_indices = @transform_1, window_bounds = array<i64: 128, 128>}, {transform_indices = @transform_2, window_bounds = array<i64: 128, 256>}, {transform_indices = @transform_3, window_bounds = array<i64: 1, 256>}, {transform_indices = @transform_4, window_bounds = array<i64: 256, 128>}, {pipeline_mode = #tpu.pipeline_mode<synchronous>, transform_indices = @transform_5, window_bounds = array<i64: 1, 128>}, {transform_indices = @transform_6, window_bounds = array<i64: 128, 128>}]} {
    %c0_i32 = arith.constant 0 : i32
    %0 = arith.cmpi eq, %arg1, %c0_i32 : i32
    %1 = arith.extui %0 : i1 to i32
    %c0_i32_0 = arith.constant 0 : i32
    %2 = arith.cmpi ne, %1, %c0_i32_0 : i32
    scf.if %2 {
      %c0_18 = arith.constant 0 : index
      %c0_19 = arith.constant 0 : index
      %31 = vector.load %arg2[%c0_18, %c0_19] : memref<128x128xf32, #tpu.memory_space<vmem>>, vector<128x128xf32>
      %c0_20 = arith.constant 0 : index
      %c0_21 = arith.constant 0 : index
      %32 = vector.load %arg7[%c0_20, %c0_21] : memref<1x128xf32, #tpu.memory_space<vmem>>, vector<1x128xf32>
      %33 = vector.broadcast %32 : vector<1x128xf32> to vector<128x128xf32>
      %34 = arith.addf %31, %33 : vector<128x128xf32>
      %c0_22 = arith.constant 0 : index
      %c0_23 = arith.constant 0 : index
      %35 = vector.load %arg9[%c0_22, %c0_23] : memref<128x128xf32, #tpu.memory_space<vmem>>, vector<128x128xf32>
      tpu.vector_store %arg9[%c0_22, %c0_23], %34 {strides = array<i32>} : memref<128x128xf32, #tpu.memory_space<vmem>>, vector<128x128xf32>,
    } else {
    }
    %c0 = arith.constant 0 : index
    %c0_1 = arith.constant 0 : index
    %3 = vector.load %arg3[%c0, %c0_1] : memref<128x128xbf16, #tpu.memory_space<vmem>>, vector<128x128xbf16>
    %c0_2 = arith.constant 0 : index
    %c0_3 = arith.constant 0 : index
    %4 = vector.load %arg4[%c0_2, %c0_3] : memref<128x256xbf16, #tpu.memory_space<vmem>>, vector<128x256xbf16>
    %cst = arith.constant dense<0.000000e+00> : vector<128x256xf32>
    %5 = tpu.matmul %3, %4, %cst {dimension_numbers = #tpu.dot_dimension_numbers<[1], [0], [0], [1], [0, 0, 1, 1], [], []>} : vector<128x128xbf16>, vector<128x256xbf16>, vector<128x256xf32> -> vector<128x256xf32>
    %c0_4 = arith.constant 0 : index
    %c0_5 = arith.constant 0 : index
    %6 = vector.load %arg5[%c0_4, %c0_5] : memref<1x256xf32, #tpu.memory_space<vmem>>, vector<1x256xf32>
    %7 = vector.broadcast %6 : vector<1x256xf32> to vector<128x256xf32>
    %8 = arith.addf %5, %7 : vector<128x256xf32>
    %c0_6 = arith.constant 0 : index
    %c0_7 = arith.constant 0 : index
    %9 = vector.load %arg9[%c0_6, %c0_7] : memref<128x128xf32, #tpu.memory_space<vmem>>, vector<128x128xf32>
    %cst_8 = arith.constant 5.000000e-01 : f32
    %10 = vector.broadcast %cst_8 : f32 to vector<128x256xf32>
    %11 = arith.mulf %10, %8 : vector<128x256xf32>
    %cst_9 = arith.constant 4.471500e-02 : f32
    %12 = vector.broadcast %cst_9 : f32 to vector<128x256xf32>
    %13 = arith.mulf %12, %8 : vector<128x256xf32>
    %14 = arith.mulf %13, %8 : vector<128x256xf32>
    %15 = arith.mulf %14, %8 : vector<128x256xf32>
    %16 = arith.addf %8, %15 : vector<128x256xf32>
    %cst_10 = arith.constant 0.797884583 : f32
    %17 = vector.broadcast %cst_10 : f32 to vector<128x256xf32>
    %18 = arith.mulf %17, %16 : vector<128x256xf32>
    %19 = math.tanh %18 : vector<128x256xf32>
    %cst_11 = arith.constant 1.000000e+00 : f32
    %20 = vector.broadcast %cst_11 : f32 to vector<128x256xf32>
    %21 = arith.addf %20, %19 : vector<128x256xf32>
    %22 = arith.mulf %11, %21 : vector<128x256xf32>
    %23 = arith.truncf %22 : vector<128x256xf32> to vector<128x256xbf16>
    %c0_12 = arith.constant 0 : index
    %c0_13 = arith.constant 0 : index
    %24 = vector.load %arg6[%c0_12, %c0_13] : memref<256x128xbf16, #tpu.memory_space<vmem>>, vector<256x128xbf16>
    %cst_14 = arith.constant dense<0.000000e+00> : vector<128x128xf32>
    %25 = tpu.matmul %23, %24, %cst_14 {dimension_numbers = #tpu.dot_dimension_numbers<[1], [0], [0], [1], [0, 0, 1, 1], [], []>} : vector<128x256xbf16>, vector<256x128xbf16>, vector<128x128xf32> -> vector<128x128xf32>
    %26 = arith.addf %9, %25 : vector<128x128xf32>
    %c0_15 = arith.constant 0 : index
    %c0_16 = arith.constant 0 : index
    %27 = vector.load %arg9[%c0_15, %c0_16] : memref<128x128xf32, #tpu.memory_space<vmem>>, vector<128x128xf32>
    tpu.vector_store %arg9[%c0_15, %c0_16], %26 {strides = array<i32>} : memref<128x128xf32, #tpu.memory_space<vmem>>, vector<128x128xf32>,
    %c1_i32 = arith.constant 1 : i32
    %28 = arith.cmpi eq, %arg1, %c1_i32 : i32
    %29 = arith.extui %28 : i1 to i32
    %c0_i32_17 = arith.constant 0 : i32
    %30 = arith.cmpi ne, %29, %c0_i32_17 : i32
    scf.if %30 {
      %c0_18 = arith.constant 0 : index
      %c0_19 = arith.constant 0 : index
      %31 = vector.load %arg9[%c0_18, %c0_19] : memref<128x128xf32, #tpu.memory_space<vmem>>, vector<128x128xf32>
      %c0_20 = arith.constant 0 : index
      %c0_21 = arith.constant 0 : index
      %32 = vector.load %arg8[%c0_20, %c0_21] : memref<128x128xf32, #tpu.memory_space<vmem>>, vector<128x128xf32>
      tpu.vector_store %arg8[%c0_20, %c0_21], %31 {strides = array<i32>} : memref<128x128xf32, #tpu.memory_space<vmem>>, vector<128x128xf32>,
    } else {
    }
    return
  }
  func.func @transform_0(%arg0: i32, %arg1: i32) -> (i32, i32) {
    %c0_i32 = arith.constant 0 : i32
    %c0_i32_0 = arith.constant 0 : i32
    return %arg0, %c0_i32 : i32, i32
  }
  func.func @transform_1(%arg0: i32, %arg1: i32) -> (i32, i32) {
    %c0_i32 = arith.constant 0 : i32
    %c0_i32_0 = arith.constant 0 : i32
    return %arg0, %c0_i32 : i32, i32
  }
  func.func @transform_2(%arg0: i32, %arg1: i32) -> (i32, i32) {
    %c0_i32 = arith.constant 0 : i32
    %c0_i32_0 = arith.constant 0 : i32
    return %c0_i32, %arg1 : i32, i32
  }
  func.func @transform_3(%arg0: i32, %arg1: i32) -> (i32, i32) {
    %c0_i32 = arith.constant 0 : i32
    %c0_i32_0 = arith.constant 0 : i32
    return %c0_i32, %arg1 : i32, i32
  }
  func.func @transform_4(%arg0: i32, %arg1: i32) -> (i32, i32) {
    %c0_i32 = arith.constant 0 : i32
    %c0_i32_0 = arith.constant 0 : i32
    return %arg1, %c0_i32 : i32, i32
  }
  func.func @transform_5(%arg0: i32, %arg1: i32) -> (i32, i32) {
    %c0_i32 = arith.constant 0 : i32
    %c0_i32_0 = arith.constant 0 : i32
    %c0_i32_1 = arith.constant 0 : i32
    return %c0_i32, %c0_i32_0 : i32, i32
  }
  func.func @transform_6(%arg0: i32, %arg1: i32) -> (i32, i32) {
    %c0_i32 = arith.constant 0 : i32
    %c0_i32_0 = arith.constant 0 : i32
    return %arg0, %c0_i32 : i32, i32
  }
}

</mosaic_0001>

<llo_original>
// kernel: flash_attention_block.3
$region0: #{flash_attention_block.3}
  #allocation0 [shape = 'u32[]', space=smem, size = 0x4, offset = 0x4, fixed_abs, tag = 'smem constant byte address 0x4 - core index']
  #allocation1 [shape = 'u32[72,128]{1,0:T(1,128)}', space=vmem, size = 0x9000, scoped, tag = 'internal scratch']
  %s0 = inlined_call_operand.vmem [shape: f32[256,128], index: 0, kind: input, shape index: {}]
  %s1 = inlined_call_operand.vmem [shape: f32[1,128], index: 1, kind: input, shape index: {}]
  %s2 = inlined_call_operand.vmem [shape: f32[1,128], index: 2, kind: input, shape index: {}]
  %s3 = inlined_call_operand.vmem [shape: bf16[128,384], index: 3, kind: input, shape index: {}]
  %s4 = inlined_call_operand.vmem [shape: bf16[256,384], index: 4, kind: output, shape index: {}]
  %s5 = sld [smem:[#allocation0]]
  $region49: #{flash_attention_block.3} parent=0
    _
  %s7 = ssub.s32 1, %s5
  %s8 = scalar_select 0, %s7, %s5
  loop: start=0, step=1, limit=4
  $region2: #{flash_attention_block.3} parent=0 // loop_pre_header
    _
  $region3: #{flash_attention_block.3} parent=0 // loop_header
    %s10 = sphi 0, %s14
    %p11 = scmp.ge.s32.totalorder %s10, 4
    %s20 = sphi 0, %s22
    %s23 = sphi 0, %s20
    %s24 = sphi 0, %s23
    %s40 = sphi 0, %s24
    %s44 = sphi 0, %s44
    %s46 = sphi 0, %s44
    %s47 = sphi 0, %s46
    %s61 = sphi 0, %s47
    %s65 = sphi 0, %s65
    %s67 = sphi 0, %s65
    %s68 = sphi 0, %s67
    %s82 = sphi 0, %s68
    %s86 = sphi 0, %s86
    %s88 = sphi 0, %s86
    %s89 = sphi 0, %s88
    %s103 = sphi 0, %s89
    %s109 = sphi 0, %s111
    %s112 = sphi 0, %s109
    %s113 = sphi 0, %s112
    %s129 = sphi 0, %s113
  $region4: #{flash_attention_block.3} parent=0 // loop_header_branch
    %13 = sbr.rel (%p11) target = $region8
  $region5: #{flash_attention_block.3} parent=0 // loop_body
    %s15 = ssub.s32 %s10, 1
    %s16 = ssub.s32 %s10, 2
    %s17 = sadd.s32 %s10, 1
    %s18 = ssub.s32 %s10, %s17
    %p19 = scmp.eq.s32.totalorder %s18, 0
    %s21 = sadd.s32 %s20, 1
    %s22 = scalar_select %p19, %s20, %s21
    %p25 = pneg %p19
    %p26 = scmp.eq.s32.totalorder %s10, 1
    %p27 = por %p25, %p26
    %p28 = scmp.ne.s32.totalorder %s20, %s23
    %p29 = scmp.eq.s32.totalorder %s10, 0
    %p30 = por %p28, %p29
    %p31 = scmp.ne.s32.totalorder %s20, %s23
    %p32 = scmp.eq.s32.totalorder %s15, 1
    %p33 = por %p31, %p32
    %p34 = scmp.ne.s32.totalorder %s23, %s24
    %p35 = scmp.eq.s32.totalorder %s15, 0
    %p36 = por %p34, %p35
    %p37 = scmp.ne.s32.totalorder %s23, %s24
    %p38 = scmp.eq.s32.totalorder %s16, 1
    %p39 = por %p37, %p38
    %p41 = scmp.ne.s32.totalorder %s24, %s40
    %p42 = scmp.eq.s32.totalorder %s16, 0
    %p43 = por %p41, %p42
    %s45 = sadd.s32 %s44, 1
    %p48 = scmp.eq.s32.totalorder %s10, 1
    %p49 = scmp.ne.s32.totalorder %s44, %s46
    %p50 = scmp.eq.s32.totalorder %s10, 0
    %p51 = por %p49, %p50
    %p52 = scmp.ne.s32.totalorder %s44, %s46
    %p53 = scmp.eq.s32.totalorder %s15, 1
    %p54 = por %p52, %p53
    %p55 = scmp.ne.s32.totalorder %s46, %s47
    %p56 = scmp.eq.s32.totalorder %s15, 0
    %p57 = por %p55, %p56
    %p58 = scmp.ne.s32.totalorder %s46, %s47
    %p59 = scmp.eq.s32.totalorder %s16, 1
    %p60 = por %p58, %p59
    %p62 = scmp.ne.s32.totalorder %s47, %s61
    %p63 = scmp.eq.s32.totalorder %s16, 0
    %p64 = por %p62, %p63
    %s66 = sadd.s32 %s65, 1
    %p69 = scmp.eq.s32.totalorder %s10, 1
    %p70 = scmp.ne.s32.totalorder %s65, %s67
    %p71 = scmp.eq.s32.totalorder %s10, 0
    %p72 = por %p70, %p71
    %p73 = scmp.ne.s32.totalorder %s65, %s67
    %p74 = scmp.eq.s32.totalorder %s15, 1
    %p75 = por %p73, %p74
    %p76 = scmp.ne.s32.totalorder %s67, %s68
    %p77 = scmp.eq.s32.totalorder %s15, 0
    %p78 = por %p76, %p77
    %p79 = scmp.ne.s32.totalorder %s67, %s68
    %p80 = scmp.eq.s32.totalorder %s16, 1
    %p81 = por %p79, %p80
    %p83 = scmp.ne.s32.totalorder %s68, %s82
    %p84 = scmp.eq.s32.totalorder %s16, 0
    %p85 = por %p83, %p84
    %s87 = sadd.s32 %s86, 1
    %p90 = scmp.eq.s32.totalorder %s10, 1
    %p91 = scmp.ne.s32.totalorder %s86, %s88
    %p92 = scmp.eq.s32.totalorder %s10, 0
    %p93 = por %p91, %p92
    %p94 = scmp.ne.s32.totalorder %s86, %s88
    %p95 = scmp.eq.s32.totalorder %s15, 1
    %p96 = por %p94, %p95
    %p97 = scmp.ne.s32.totalorder %s88, %s89
    %p98 = scmp.eq.s32.totalorder %s15, 0
    %p99 = por %p97, %p98
    %p100 = scmp.ne.s32.totalorder %s88, %s89
    %p101 = scmp.eq.s32.totalorder %s16, 1
    %p102 = por %p100, %p101
    %p104 = scmp.ne.s32.totalorder %s89, %s103
    %p105 = scmp.eq.s32.totalorder %s16, 0
    %p106 = por %p104, %p105
    %s107 = ssub.s32 %s10, %s17
    %p108 = scmp.eq.s32.totalorder %s107, 0
    %s110 = sadd.s32 %s109, 1
    %s111 = scalar_select %p108, %s109, %s110
    %p114 = pneg %p108
    %p115 = scmp.eq.s32.totalorder %s10, 1
    %p116 = por %p114, %p115
    %p117 = scmp.ne.s32.totalorder %s109, %s112
    %p118 = scmp.eq.s32.totalorder %s10, 0
    %p119 = por %p117, %p118
    %p120 = scmp.ne.s32.totalorder %s109, %s112
    %p121 = scmp.eq.s32.totalorder %s15, 1
    %p122 = por %p120, %p121
    %p123 = scmp.ne.s32.totalorder %s112, %s113
    %p124 = scmp.eq.s32.totalorder %s15, 0
    %p125 = por %p123, %p124
    %p126 = scmp.ne.s32.totalorder %s112, %s113
    %p127 = scmp.eq.s32.totalorder %s16, 1
    %p128 = por %p126, %p127
    %p130 = scmp.ne.s32.totalorder %s113, %s129
    %p131 = scmp.eq.s32.totalorder %s16, 0
    %p132 = por %p130, %p131
    %p133 = scmp.le.s32.totalorder 1, %s10
    %p134 = scmp.lt.s32.totalorder %s10, 3
    %p135 = pnand %p133, %p134
    %p136 = pneg %p135
    // Predicated region
    $region9: #{flash_attention_block.3} parent=5 // pred_check
      _
    $region10: #{flash_attention_block.3} parent=5 // pred_check_branch
      %138 = sbr.rel (%p135) target = $region12
    $region11: #{flash_attention_block.3} parent=5 // pred_region
      %s139 = ssub.s32 %s10, 1
      // Predicated region
      $region13: #{flash_attention_block.3} parent=11 // pred_check
        %p140 = pneg %p57
      $region14: #{flash_attention_block.3} parent=11 // pred_check_branch
        %142 = sbr.rel (%p140) target = $region16
      $region15: #{flash_attention_block.3} parent=11 // pred_region
        _
      $region16: #{flash_attention_block.3} parent=11 // pred_fallthru
        _
      // Predicated region
      $region17: #{flash_attention_block.3} parent=11 // pred_check
        %p143 = pneg %p78
      $region18: #{flash_attention_block.3} parent=11 // pred_check_branch
        %145 = sbr.rel (%p143) target = $region20
      $region19: #{flash_attention_block.3} parent=11 // pred_region
        _
      $region20: #{flash_attention_block.3} parent=11 // pred_fallthru
        _
      // Predicated region
      $region21: #{flash_attention_block.3} parent=11 // pred_check
        %p146 = pneg %p99
      $region22: #{flash_attention_block.3} parent=11 // pred_check_branch
        %148 = sbr.rel (%p146) target = $region24
      $region23: #{flash_attention_block.3} parent=11 // pred_region
        _
      $region24: #{flash_attention_block.3} parent=11 // pred_fallthru
        _
    $region12: #{flash_attention_block.3} parent=5 // pred_fallthru
      _
    %p149 = scmp.lt.s32.totalorder %s10, 2
    // Predicated region
    $region25: #{flash_attention_block.3} parent=5 // pred_check
      %p150 = pneg %p149
    $region26: #{flash_attention_block.3} parent=5 // pred_check_branch
      %152 = sbr.rel (%p150) target = $region28
    $region27: #{flash_attention_block.3} parent=5 // pred_region
      // Predicated region
      $region29: #{flash_attention_block.3} parent=27 // pred_check
        %p153 = pneg %p30
      $region30: #{flash_attention_block.3} parent=27 // pred_check_branch
        %155 = sbr.rel (%p153) target = $region32
      $region31: #{flash_attention_block.3} parent=27 // pred_region
        %s156 = smul.u32 16, %s10
        %p157 = scmp.lt.s32.totalorder %s156, 31
        %s158 = scalar_select %p157, %s156, 31
        %s159 = smul.addr %s158, 8
        %s160 = scalar_lea.vmem %s0, %s159
        %s161 = smul.u32 16, %s10
      $region32: #{flash_attention_block.3} parent=27 // pred_fallthru
        _
    $region28: #{flash_attention_block.3} parent=5 // pred_fallthru
      _
    %p162 = scmp.le.s32.totalorder 1, %s10
    %p163 = scmp.lt.s32.totalorder %s10, 3
    %p164 = pnand %p162, %p163
    %p165 = pneg %p164
    // Predicated region
    $region33: #{flash_attention_block.3} parent=5 // pred_check
      _
    $region34: #{flash_attention_block.3} parent=5 // pred_check_branch
      %167 = sbr.rel (%p164) target = $region36
    $region35: #{flash_attention_block.3} parent=5 // pred_region
      %s168 = ssub.s32 %s10, 1
      %s169 = smul.u32 16, %s15
      %p170 = scmp.lt.s32.totalorder %s169, 31
      %s171 = scalar_select %p170, %s169, 31
      %s172 = smul.addr %s171, 8
      %s173 = scalar_lea.vmem %s0, %s172
      %p174 = pneg %p36
      %p175 = pneg %p33
      %p176 = pneg %p57
      %p177 = pneg %p54
      %p178 = pneg %p78
      %p179 = pneg %p75
      %p180 = pneg %p99
      %p181 = pneg %p96
      %p182 = pneg %p125
      %p183 = pneg %p122
      %s184 = smul.u32 16, %s15
      %p185 = scmp.lt.s32.totalorder %s184, 31
      %s186 = scalar_select %p185, %s184, 31
      %s187 = smul.addr %s186, 3
      %s188 = smul.addr %s187, 4
      %s189 = scalar_lea.vmem %s4, %s188
      %s190 = smul.u32 16, %s15
      %p191 = scmp.lt.s32.totalorder %s190, 31
      %s192 = scalar_select %p191, %s190, 31
      %s193 = smul.addr %s192, 8
      %s194 = scalar_lea.vmem %s0, %s193
      %s195 = smul.u32 16, %s15
      %s196 = smul.u32 16, %s15
      %p197 = scmp.lt.s32.totalorder %s196, 31
      %s198 = scalar_select %p197, %s196, 31
      %s199 = smul.addr %s198, 3
      %s200 = smul.addr %s199, 4
      %s201 = scalar_lea.vmem %s4, %s200
      %s202 = smul.u32 16, %s15
      %v203 = vld [vmem:[%s194] sm:$0xff]
      %v204 = vld [vmem:[%s194 + $0x8] sm:$0xff]
      %v205 = vld [vmem:[%s194 + $0x10] sm:$0xff]
      %v206 = vld [vmem:[%s194 + $0x18] sm:$0xff]
      %v207 = vld [vmem:[%s194 + $0x20] sm:$0xff]
      %v208 = vld [vmem:[%s194 + $0x28] sm:$0xff]
      %v209 = vld [vmem:[%s194 + $0x30] sm:$0xff]
      %v210 = vld [vmem:[%s194 + $0x38] sm:$0xff]
      %v211 = vld [vmem:[%s194 + $0x40] sm:$0xff]
      %v212 = vld [vmem:[%s194 + $0x48] sm:$0xff]
      %v213 = vld [vmem:[%s194 + $0x50] sm:$0xff]
      %v214 = vld [vmem:[%s194 + $0x58] sm:$0xff]
      %v215 = vld [vmem:[%s194 + $0x60] sm:$0xff]
      %v216 = vld [vmem:[%s194 + $0x68] sm:$0xff]
      %v217 = vld [vmem:[%s194 + $0x70] sm:$0xff]
      %v218 = vld [vmem:[%s194 + $0x78] sm:$0xff]
      %v219 = vld [vmem:[%s1] sm:$0x1]
      %v220 = vld [vmem:[%s2] sm:$0x1]
      %221 = vadd.xlane.f32.xlu0 %v203
      %v222 = vpop.xlane.xlu0 %221
      %223 = vadd.xlane.f32.xlu0 %v204
      %v224 = vpop.xlane.xlu0 %223
      %225 = vadd.xlane.f32.xlu0 %v205
      %v226 = vpop.xlane.xlu0 %225
      %227 = vadd.xlane.f32.xlu0 %v206
      %v228 = vpop.xlane.xlu0 %227
      %229 = vadd.xlane.f32.xlu0 %v207
      %v230 = vpop.xlane.xlu0 %229
      %231 = vadd.xlane.f32.xlu0 %v208
      %v232 = vpop.xlane.xlu0 %231
      %233 = vadd.xlane.f32.xlu0 %v209
      %v234 = vpop.xlane.xlu0 %233
      %235 = vadd.xlane.f32.xlu0 %v210
      %v236 = vpop.xlane.xlu0 %235
      %237 = vadd.xlane.f32.xlu0 %v211
      %v238 = vpop.xlane.xlu0 %237
      %239 = vadd.xlane.f32.xlu0 %v212
      %v240 = vpop.xlane.xlu0 %239
      %241 = vadd.xlane.f32.xlu0 %v213
      %v242 = vpop.xlane.xlu0 %241
      %243 = vadd.xlane.f32.xlu0 %v214
      %v244 = vpop.xlane.xlu0 %243
      %245 = vadd.xlane.f32.xlu0 %v215
      %v246 = vpop.xlane.xlu0 %245
      %247 = vadd.xlane.f32.xlu0 %v216
      %v248 = vpop.xlane.xlu0 %247
      %249 = vadd.xlane.f32.xlu0 %v217
      %v250 = vpop.xlane.xlu0 %249
      %251 = vadd.xlane.f32.xlu0 %v218
      %v252 = vpop.xlane.xlu0 %251
      %v253 = vrcp.pop 128.0
      %v254 = vmul.f32 128.0, %v253
      %v255 = vsub.f32 1.0, %v254
      %v256 = vmul.f32 %v253, %v255
      %v257 = vadd.f32 %v253, %v256
      %vm258 = vweird.f32 %v253
      %v259 = vsel %vm258, %v253, %v257
      %v260 = vmul.f32 %v222, %v259
      %v261 = vmul.f32 %v224, %v259
      %v262 = vmul.f32 %v226, %v259
      %v263 = vmul.f32 %v228, %v259
      %v264 = vmul.f32 %v230, %v259
      %v265 = vmul.f32 %v232, %v259
      %v266 = vmul.f32 %v234, %v259
      %v267 = vmul.f32 %v236, %v259
      %v268 = vmul.f32 %v238, %v259
      %v269 = vmul.f32 %v240, %v259
      %v270 = vmul.f32 %v242, %v259
      %v271 = vmul.f32 %v244, %v259
      %v272 = vmul.f32 %v246, %v259
      %v273 = vmul.f32 %v248, %v259
      %v274 = vmul.f32 %v250, %v259
      %v275 = vmul.f32 %v252, %v259
      %v276 = vsub.f32 %v203, %v260
      %v277 = vsub.f32 %v204, %v261
      %v278 = vsub.f32 %v205, %v262
      %v279 = vsub.f32 %v206, %v263
      %v280 = vsub.f32 %v207, %v264
      %v281 = vsub.f32 %v208, %v265
      %v282 = vsub.f32 %v209, %v266
      %v283 = vsub.f32 %v210, %v267
      %v284 = vsub.f32 %v211, %v268
      %v285 = vsub.f32 %v212, %v269
      %v286 = vsub.f32 %v213, %v270
      %v287 = vsub.f32 %v214, %v271
      %v288 = vsub.f32 %v215, %v272
      %v289 = vsub.f32 %v216, %v273
      %v290 = vsub.f32 %v217, %v274
      %v291 = vsub.f32 %v218, %v275
      %v292 = vmul.f32 %v276, %v276
      %v293 = vmul.f32 %v277, %v277
      %v294 = vmul.f32 %v278, %v278
      %v295 = vmul.f32 %v279, %v279
      %v296 = vmul.f32 %v280, %v280
      %v297 = vmul.f32 %v281, %v281
      %v298 = vmul.f32 %v282, %v282
      %v299 = vmul.f32 %v283, %v283
      %v300 = vmul.f32 %v284, %v284
      %v301 = vmul.f32 %v285, %v285
      %v302 = vmul.f32 %v286, %v286
      %v303 = vmul.f32 %v287, %v287
      %v304 = vmul.f32 %v288, %v288
      %v305 = vmul.f32 %v289, %v289
      %v306 = vmul.f32 %v290, %v290
      %v307 = vmul.f32 %v291, %v291
      %308 = vadd.xlane.f32.xlu0 %v292
      %v309 = vpop.xlane.xlu0 %308
      %310 = vadd.xlane.f32.xlu0 %v293
      %v311 = vpop.xlane.xlu0 %310
      %312 = vadd.xlane.f32.xlu0 %v294
      %v313 = vpop.xlane.xlu0 %312
      %314 = vadd.xlane.f32.xlu0 %v295
      %v315 = vpop.xlane.xlu0 %314
      %316 = vadd.xlane.f32.xlu0 %v296
      %v317 = vpop.xlane.xlu0 %316
      %318 = vadd.xlane.f32.xlu0 %v297
      %v319 = vpop.xlane.xlu0 %318
      %320 = vadd.xlane.f32.xlu0 %v298
      %v321 = vpop.xlane.xlu0 %320
      %322 = vadd.xlane.f32.xlu0 %v299
      %v323 = vpop.xlane.xlu0 %322
      %324 = vadd.xlane.f32.xlu0 %v300
      %v325 = vpop.xlane.xlu0 %324
      %326 = vadd.xlane.f32.xlu0 %v301
      %v327 = vpop.xlane.xlu0 %326
      %328 = vadd.xlane.f32.xlu0 %v302
      %v329 = vpop.xlane.xlu0 %328
      %330 = vadd.xlane.f32.xlu0 %v303
      %v331 = vpop.xlane.xlu0 %330
      %332 = vadd.xlane.f32.xlu0 %v304
      %v333 = vpop.xlane.xlu0 %332
      %334 = vadd.xlane.f32.xlu0 %v305
      %v335 = vpop.xlane.xlu0 %334
      %336 = vadd.xlane.f32.xlu0 %v306
      %v337 = vpop.xlane.xlu0 %336
      %338 = vadd.xlane.f32.xlu0 %v307
      %v339 = vpop.xlane.xlu0 %338
      %v340 = vmul.f32 %v309, %v259
      %v341 = vmul.f32 %v311, %v259
      %v342 = vmul.f32 %v313, %v259
      %v343 = vmul.f32 %v315, %v259
      %v344 = vmul.f32 %v317, %v259
      %v345 = vmul.f32 %v319, %v259
      %v346 = vmul.f32 %v321, %v259
      %v347 = vmul.f32 %v323, %v259
      %v348 = vmul.f32 %v325, %v259
      %v349 = vmul.f32 %v327, %v259
      %v350 = vmul.f32 %v329, %v259
      %v351 = vmul.f32 %v331, %v259
      %v352 = vmul.f32 %v333, %v259
      %v353 = vmul.f32 %v335, %v259
      %v354 = vmul.f32 %v337, %v259
      %v355 = vmul.f32 %v339, %v259
      %v356 = vadd.f32 %v340, 1e-05
      %v357 = vadd.f32 %v341, 1e-05
      %v358 = vadd.f32 %v342, 1e-05
      %v359 = vadd.f32 %v343, 1e-05
      %v360 = vadd.f32 %v344, 1e-05
      %v361 = vadd.f32 %v345, 1e-05
      %v362 = vadd.f32 %v346, 1e-05
      %v363 = vadd.f32 %v347, 1e-05
      %v364 = vadd.f32 %v348, 1e-05
      %v365 = vadd.f32 %v349, 1e-05
      %v366 = vadd.f32 %v350, 1e-05
      %v367 = vadd.f32 %v351, 1e-05
      %v368 = vadd.f32 %v352, 1e-05
      %v369 = vadd.f32 %v353, 1e-05
      %v370 = vadd.f32 %v354, 1e-05
      %v371 = vadd.f32 %v355, 1e-05
      %v372 = vrsqrt.pop %v356
      %v373 = vmul.f32 %v372, %v356
      %v374 = vmul.f32 %v373, %v372
      %v375 = vmul.f32 0.5, %v374
      %v376 = vsub.f32 1.5, %v375
      %v377 = vmul.f32 %v372, %v376
      %vm378 = vweird.f32 %v356
      %vm379 = vweird.f32 %v372
      %vm380 = vmor %vm378, %vm379
      %v381 = vsel %vm380, %v372, %v377
      %v382 = vrsqrt.pop %v357
      %v383 = vmul.f32 %v382, %v357
      %v384 = vmul.f32 %v383, %v382
      %v385 = vmul.f32 0.5, %v384
      %v386 = vsub.f32 1.5, %v385
      %v387 = vmul.f32 %v382, %v386
      %vm388 = vweird.f32 %v357
      %vm389 = vweird.f32 %v382
      %vm390 = vmor %vm388, %vm389
      %v391 = vsel %vm390, %v382, %v387
      %v392 = vrsqrt.pop %v358
      %v393 = vmul.f32 %v392, %v358
      %v394 = vmul.f32 %v393, %v392
      %v395 = vmul.f32 0.5, %v394
      %v396 = vsub.f32 1.5, %v395
      %v397 = vmul.f32 %v392, %v396
      %vm398 = vweird.f32 %v358
      %vm399 = vweird.f32 %v392
      %vm400 = vmor %vm398, %vm399
      %v401 = vsel %vm400, %v392, %v397
      %v402 = vrsqrt.pop %v359
      %v403 = vmul.f32 %v402, %v359
      %v404 = vmul.f32 %v403, %v402
      %v405 = vmul.f32 0.5, %v404
      %v406 = vsub.f32 1.5, %v405
      %v407 = vmul.f32 %v402, %v406
      %vm408 = vweird.f32 %v359
      %vm409 = vweird.f32 %v402
      %vm410 = vmor %vm408, %vm409
      %v411 = vsel %vm410, %v402, %v407
      %v412 = vrsqrt.pop %v360
      %v413 = vmul.f32 %v412, %v360
      %v414 = vmul.f32 %v413, %v412
      %v415 = vmul.f32 0.5, %v414
      %v416 = vsub.f32 1.5, %v415
      %v417 = vmul.f32 %v412, %v416
      %vm418 = vweird.f32 %v360
      %vm419 = vweird.f32 %v412
      %vm420 = vmor %vm418, %vm419
      %v421 = vsel %vm420, %v412, %v417
      %v422 = vrsqrt.pop %v361
      %v423 = vmul.f32 %v422, %v361
      %v424 = vmul.f32 %v423, %v422
      %v425 = vmul.f32 0.5, %v424
      %v426 = vsub.f32 1.5, %v425
      %v427 = vmul.f32 %v422, %v426
      %vm428 = vweird.f32 %v361
      %vm429 = vweird.f32 %v422
      %vm430 = vmor %vm428, %vm429
      %v431 = vsel %vm430, %v422, %v427
      %v432 = vrsqrt.pop %v362
      %v433 = vmul.f32 %v432, %v362
      %v434 = vmul.f32 %v433, %v432
      %v435 = vmul.f32 0.5, %v434
      %v436 = vsub.f32 1.5, %v435
      %v437 = vmul.f32 %v432, %v436
      %vm438 = vweird.f32 %v362
      %vm439 = vweird.f32 %v432
      %vm440 = vmor %vm438, %vm439
      %v441 = vsel %vm440, %v432, %v437
      %v442 = vrsqrt.pop %v363
      %v443 = vmul.f32 %v442, %v363
      %v444 = vmul.f32 %v443, %v442
      %v445 = vmul.f32 0.5, %v444
      %v446 = vsub.f32 1.5, %v445
      %v447 = vmul.f32 %v442, %v446
      %vm448 = vweird.f32 %v363
      %vm449 = vweird.f32 %v442
      %vm450 = vmor %vm448, %vm449
      %v451 = vsel %vm450, %v442, %v447
      %v452 = vrsqrt.pop %v364
      %v453 = vmul.f32 %v452, %v364
      %v454 = vmul.f32 %v453, %v452
      %v455 = vmul.f32 0.5, %v454
      %v456 = vsub.f32 1.5, %v455
      %v457 = vmul.f32 %v452, %v456
      %vm458 = vweird.f32 %v364
      %vm459 = vweird.f32 %v452
      %vm460 = vmor %vm458, %vm459
      %v461 = vsel %vm460, %v452, %v457
      %v462 = vrsqrt.pop %v365
      %v463 = vmul.f32 %v462, %v365
      %v464 = vmul.f32 %v463, %v462
      %v465 = vmul.f32 0.5, %v464
      %v466 = vsub.f32 1.5, %v465
      %v467 = vmul.f32 %v462, %v466
      %vm468 = vweird.f32 %v365
      %vm469 = vweird.f32 %v462
      %vm470 = vmor %vm468, %vm469
      %v471 = vsel %vm470, %v462, %v467
      %v472 = vrsqrt.pop %v366
      %v473 = vmul.f32 %v472, %v366
      %v474 = vmul.f32 %v473, %v472
      %v475 = vmul.f32 0.5, %v474
      %v476 = vsub.f32 1.5, %v475
      %v477 = vmul.f32 %v472, %v476
      %vm478 = vweird.f32 %v366
      %vm479 = vweird.f32 %v472
      %vm480 = vmor %vm478, %vm479
      %v481 = vsel %vm480, %v472, %v477
      %v482 = vrsqrt.pop %v367
      %v483 = vmul.f32 %v482, %v367
      %v484 = vmul.f32 %v483, %v482
      %v485 = vmul.f32 0.5, %v484
      %v486 = vsub.f32 1.5, %v485
      %v487 = vmul.f32 %v482, %v486
      %vm488 = vweird.f32 %v367
      %vm489 = vweird.f32 %v482
      %vm490 = vmor %vm488, %vm489
      %v491 = vsel %vm490, %v482, %v487
      %v492 = vrsqrt.pop %v368
      %v493 = vmul.f32 %v492, %v368
      %v494 = vmul.f32 %v493, %v492
      %v495 = vmul.f32 0.5, %v494
      %v496 = vsub.f32 1.5, %v495
      %v497 = vmul.f32 %v492, %v496
      %vm498 = vweird.f32 %v368
      %vm499 = vweird.f32 %v492
      %vm500 = vmor %vm498, %vm499
      %v501 = vsel %vm500, %v492, %v497
      %v502 = vrsqrt.pop %v369
      %v503 = vmul.f32 %v502, %v369
      %v504 = vmul.f32 %v503, %v502
      %v505 = vmul.f32 0.5, %v504
      %v506 = vsub.f32 1.5, %v505
      %v507 = vmul.f32 %v502, %v506
      %vm508 = vweird.f32 %v369
      %vm509 = vweird.f32 %v502
      %vm510 = vmor %vm508, %vm509
      %v511 = vsel %vm510, %v502, %v507
      %v512 = vrsqrt.pop %v370
      %v513 = vmul.f32 %v512, %v370
      %v514 = vmul.f32 %v513, %v512
      %v515 = vmul.f32 0.5, %v514
      %v516 = vsub.f32 1.5, %v515
      %v517 = vmul.f32 %v512, %v516
      %vm518 = vweird.f32 %v370
      %vm519 = vweird.f32 %v512
      %vm520 = vmor %vm518, %vm519
      %v521 = vsel %vm520, %v512, %v517
      %v522 = vrsqrt.pop %v371
      %v523 = vmul.f32 %v522, %v371
      %v524 = vmul.f32 %v523, %v522
      %v525 = vmul.f32 0.5, %v524
      %v526 = vsub.f32 1.5, %v525
      %v527 = vmul.f32 %v522, %v526
      %vm528 = vweird.f32 %v371
      %vm529 = vweird.f32 %v522
      %vm530 = vmor %vm528, %vm529
      %v531 = vsel %vm530, %v522, %v527
      %v532 = vmul.f32 %v276, %v381
      %v533 = vmul.f32 %v277, %v391
      %v534 = vmul.f32 %v278, %v401
      %v535 = vmul.f32 %v279, %v411
      %v536 = vmul.f32 %v280, %v421
      %v537 = vmul.f32 %v281, %v431
      %v538 = vmul.f32 %v282, %v441
      %v539 = vmul.f32 %v283, %v451
      %v540 = vmul.f32 %v284, %v461
      %v541 = vmul.f32 %v285, %v471
      %v542 = vmul.f32 %v286, %v481
      %v543 = vmul.f32 %v287, %v491
      %v544 = vmul.f32 %v288, %v501
      %v545 = vmul.f32 %v289, %v511
      %v546 = vmul.f32 %v290, %v521
      %v547 = vmul.f32 %v291, %v531
      %v549 = vperm.slane %v219, 0
      %v551 = vmul.f32 %v532, %v549
      %v552 = vmul.f32 %v533, %v549
      %v553 = vmul.f32 %v534, %v549
      %v554 = vmul.f32 %v535, %v549
      %v555 = vmul.f32 %v536, %v549
      %v556 = vmul.f32 %v537, %v549
      %v557 = vmul.f32 %v538, %v549
      %v558 = vmul.f32 %v539, %v549
      %v559 = vmul.f32 %v540, %v549
      %v560 = vmul.f32 %v541, %v549
      %v561 = vmul.f32 %v542, %v549
      %v562 = vmul.f32 %v543, %v549
      %v563 = vmul.f32 %v544, %v549
      %v564 = vmul.f32 %v545, %v549
      %v565 = vmul.f32 %v546, %v549
      %v566 = vmul.f32 %v547, %v549
      %v568 = vperm.slane %v220, 0
      %v570 = vadd.f32 %v551, %v568
      %v571 = vadd.f32 %v552, %v568
      %v572 = vadd.f32 %v553, %v568
      %v573 = vadd.f32 %v554, %v568
      %v574 = vadd.f32 %v555, %v568
      %v575 = vadd.f32 %v556, %v568
      %v576 = vadd.f32 %v557, %v568
      %v577 = vadd.f32 %v558, %v568
      %v578 = vadd.f32 %v559, %v568
      %v579 = vadd.f32 %v560, %v568
      %v580 = vadd.f32 %v561, %v568
      %v581 = vadd.f32 %v562, %v568
      %v582 = vadd.f32 %v563, %v568
      %v583 = vadd.f32 %v564, %v568
      %v584 = vadd.f32 %v565, %v568
      %v585 = vadd.f32 %v566, %v568
      %v586 = vpack.c.bf16 %v571, %v570
      %v587 = vpack.c.bf16 %v573, %v572
      %v588 = vpack.c.bf16 %v575, %v574
      %v589 = vpack.c.bf16 %v577, %v576
      %v590 = vpack.c.bf16 %v579, %v578
      %v591 = vpack.c.bf16 %v581, %v580
      %v592 = vpack.c.bf16 %v583, %v582
      %v593 = vpack.c.bf16 %v585, %v584
      %v594 = vld [vmem:[%s3] sm:$0xff]
      %v595 = vld [vmem:[%s3 + $0x8] sm:$0xf]
      %v596 = vld [vmem:[%s3 + $0xc] sm:$0xff]
      %v597 = vld [vmem:[%s3 + $0x14] sm:$0xf]
      %v598 = vld [vmem:[%s3 + $0x18] sm:$0xff]
      %v599 = vld [vmem:[%s3 + $0x20] sm:$0xf]
      %v600 = vld [vmem:[%s3 + $0x24] sm:$0xff]
      %v601 = vld [vmem:[%s3 + $0x2c] sm:$0xf]
      %v602 = vld [vmem:[%s3 + $0x30] sm:$0xff]
      %v603 = vld [vmem:[%s3 + $0x38] sm:$0xf]
      %v604 = vld [vmem:[%s3 + $0x3c] sm:$0xff]
      %v605 = vld [vmem:[%s3 + $0x44] sm:$0xf]
      %v606 = vld [vmem:[%s3 + $0x48] sm:$0xff]
      %v607 = vld [vmem:[%s3 + $0x50] sm:$0xf]
      %v608 = vld [vmem:[%s3 + $0x54] sm:$0xff]
      %v609 = vld [vmem:[%s3 + $0x5c] sm:$0xf]
      %v610 = vld [vmem:[%s3 + $0x60] sm:$0xff]
      %v611 = vld [vmem:[%s3 + $0x68] sm:$0xf]
      %v612 = vld [vmem:[%s3 + $0x6c] sm:$0xff]
      %v613 = vld [vmem:[%s3 + $0x74] sm:$0xf]
      %v614 = vld [vmem:[%s3 + $0x78] sm:$0xff]
      %v615 = vld [vmem:[%s3 + $0x80] sm:$0xf]
      %v616 = vld [vmem:[%s3 + $0x84] sm:$0xff]
      %v617 = vld [vmem:[%s3 + $0x8c] sm:$0xf]
      %v618 = vld [vmem:[%s3 + $0x90] sm:$0xff]
      %v619 = vld [vmem:[%s3 + $0x98] sm:$0xf]
      %v620 = vld [vmem:[%s3 + $0x9c] sm:$0xff]
      %v621 = vld [vmem:[%s3 + $0xa4] sm:$0xf]
      %v622 = vld [vmem:[%s3 + $0xa8] sm:$0xff]
      %v623 = vld [vmem:[%s3 + $0xb0] sm:$0xf]
      %v624 = vld [vmem:[%s3 + $0xb4] sm:$0xff]
      %v625 = vld [vmem:[%s3 + $0xbc] sm:$0xf]
      %v658 = vunpack.c.l.b16 %v594
      %v659 = vunpack.c.h.b16 %v594
      %v660 = vunpack.c.l.b16 %v595
      %v661 = vunpack.c.l.b16 %v596
      %v662 = vunpack.c.h.b16 %v596
      %v663 = vunpack.c.l.b16 %v597
      %v664 = vunpack.c.l.b16 %v598
      %v665 = vunpack.c.h.b16 %v598
      %v666 = vunpack.c.l.b16 %v599
      %v667 = vunpack.c.l.b16 %v600
      %v668 = vunpack.c.h.b16 %v600
      %v669 = vunpack.c.l.b16 %v601
      %v670 = vunpack.c.l.b16 %v602
      %v671 = vunpack.c.h.b16 %v602
      %v672 = vunpack.c.l.b16 %v603
      %v673 = vunpack.c.l.b16 %v604
      %v674 = vunpack.c.h.b16 %v604
      %v675 = vunpack.c.l.b16 %v605
      %v676 = vunpack.c.l.b16 %v606
      %v677 = vunpack.c.h.b16 %v606
      %v678 = vunpack.c.l.b16 %v607
      %v679 = vunpack.c.l.b16 %v608
      %v680 = vunpack.c.h.b16 %v608
      %v681 = vunpack.c.l.b16 %v609
      %v682 = vunpack.c.l.b16 %v610
      %v683 = vunpack.c.h.b16 %v610
      %v684 = vunpack.c.l.b16 %v611
      %v685 = vunpack.c.l.b16 %v612
      %v686 = vunpack.c.h.b16 %v612
      %v687 = vunpack.c.l.b16 %v613
      %v688 = vunpack.c.l.b16 %v614
      %v689 = vunpack.c.h.b16 %v614
      %v690 = vunpack.c.l.b16 %v615
      %v691 = vunpack.c.l.b16 %v616
      %v692 = vunpack.c.h.b16 %v616
      %v693 = vunpack.c.l.b16 %v617
      %v694 = vunpack.c.l.b16 %v618
      %v695 = vunpack.c.h.b16 %v618
      %v696 = vunpack.c.l.b16 %v619
      %v697 = vunpack.c.l.b16 %v620
      %v698 = vunpack.c.h.b16 %v620
      %v699 = vunpack.c.l.b16 %v621
      %v700 = vunpack.c.l.b16 %v622
      %v701 = vunpack.c.h.b16 %v622
      %v702 = vunpack.c.l.b16 %v623
      %v703 = vunpack.c.l.b16 %v624
      %v704 = vunpack.c.h.b16 %v624
      %v705 = vunpack.c.l.b16 %v625
      %v706 = vpack.c.b16 %v661, %v658
      %v707 = vpack.c.b16 %v662, %v659
      %v708 = vpack.c.b16 %v663, %v660
      %v709 = vpack.c.b16 %v667, %v664
      %v710 = vpack.c.b16 %v668, %v665
      %v711 = vpack.c.b16 %v669, %v666
      %v712 = vpack.c.b16 %v673, %v670
      %v713 = vpack.c.b16 %v674, %v671
      %v714 = vpack.c.b16 %v675, %v672
      %v715 = vpack.c.b16 %v679, %v676
      %v716 = vpack.c.b16 %v680, %v677
      %v717 = vpack.c.b16 %v681, %v678
      %v718 = vpack.c.b16 %v685, %v682
      %v719 = vpack.c.b16 %v686, %v683
      %v720 = vpack.c.b16 %v687, %v684
      %v721 = vpack.c.b16 %v691, %v688
      %v722 = vpack.c.b16 %v692, %v689
      %v723 = vpack.c.b16 %v693, %v690
      %v724 = vpack.c.b16 %v697, %v694
      %v725 = vpack.c.b16 %v698, %v695
      %v726 = vpack.c.b16 %v699, %v696
      %v727 = vpack.c.b16 %v703, %v700
      %v728 = vpack.c.b16 %v704, %v701
      %v729 = vpack.c.b16 %v705, %v702
      %754 = vmatpush.bf16.msra.mxu0 %v727
      %755 = vmatpush.bf16.msra.mxu0 %v724
      %756 = vmatpush.bf16.msra.mxu0 %v721
      %757 = vmatpush.bf16.msra.mxu0 %v718
      %758 = vmatpush.bf16.msra.mxu0 %v715
      %759 = vmatpush.bf16.msra.mxu0 %v712
      %760 = vmatpush.bf16.msra.mxu0 %v709
      %761 = vmatpush.bf16.msra.mxu0 %v706
      %762 = vmatmul.bf16.gmra.mxu0 %v586
      %v763 = vpop.f32.mrf.mxu0
      %v764 = vadd.f32 0.0, %v763
      %v765 = vpop.f32.mrf.mxu0
      %v766 = vadd.f32 0.0, %v765
      %767 = vmatmul.bf16.gmra.mxu0 %v587
      %v768 = vpop.f32.mrf.mxu0
      %v769 = vadd.f32 0.0, %v768
      %v770 = vpop.f32.mrf.mxu0
      %v771 = vadd.f32 0.0, %v770
      %772 = vmatmul.bf16.gmra.mxu0 %v588
      %v773 = vpop.f32.mrf.mxu0
      %v774 = vadd.f32 0.0, %v773
      %v775 = vpop.f32.mrf.mxu0
      %v776 = vadd.f32 0.0, %v775
      %777 = vmatmul.bf16.gmra.mxu0 %v589
      %v778 = vpop.f32.mrf.mxu0
      %v779 = vadd.f32 0.0, %v778
      %v780 = vpop.f32.mrf.mxu0
      %v781 = vadd.f32 0.0, %v780
      %782 = vmatmul.bf16.gmra.mxu0 %v590
      %v783 = vpop.f32.mrf.mxu0
      %v784 = vadd.f32 0.0, %v783
      %v785 = vpop.f32.mrf.mxu0
      %v786 = vadd.f32 0.0, %v785
      %787 = vmatmul.bf16.gmra.mxu0 %v591
      %v788 = vpop.f32.mrf.mxu0
      %v789 = vadd.f32 0.0, %v788
      %v790 = vpop.f32.mrf.mxu0
      %v791 = vadd.f32 0.0, %v790
      %792 = vmatmul.bf16.gmra.mxu0 %v592
      %v793 = vpop.f32.mrf.mxu0
      %v794 = vadd.f32 0.0, %v793
      %v795 = vpop.f32.mrf.mxu0
      %v796 = vadd.f32 0.0, %v795
      %797 = vmatmul.bf16.gmra.mxu0 %v593
      %v798 = vpop.f32.mrf.mxu0
      %v799 = vadd.f32 0.0, %v798
      %v800 = vpop.f32.mrf.mxu0
      %v801 = vadd.f32 0.0, %v800
      %802 = vdwg.mxu0
      %803 = vmatpush.bf16.msra.mxu0 %v728
      %804 = vmatpush.bf16.msra.mxu0 %v725
      %805 = vmatpush.bf16.msra.mxu0 %v722
      %806 = vmatpush.bf16.msra.mxu0 %v719
      %807 = vmatpush.bf16.msra.mxu0 %v716
      %808 = vmatpush.bf16.msra.mxu0 %v713
      %809 = vmatpush.bf16.msra.mxu0 %v710
      %810 = vmatpush.bf16.msra.mxu0 %v707
      %811 = vmatmul.bf16.gmra.mxu0 %v586
      %v812 = vpop.f32.mrf.mxu0
      %v813 = vadd.f32 0.0, %v812
      %v814 = vpop.f32.mrf.mxu0
      %v815 = vadd.f32 0.0, %v814
      %816 = vmatmul.bf16.gmra.mxu0 %v587
      %v817 = vpop.f32.mrf.mxu0
      %v818 = vadd.f32 0.0, %v817
      %v819 = vpop.f32.mrf.mxu0
      %v820 = vadd.f32 0.0, %v819
      %821 = vmatmul.bf16.gmra.mxu0 %v588
      %v822 = vpop.f32.mrf.mxu0
      %v823 = vadd.f32 0.0, %v822
      %v824 = vpop.f32.mrf.mxu0
      %v825 = vadd.f32 0.0, %v824
      %826 = vmatmul.bf16.gmra.mxu0 %v589
      %v827 = vpop.f32.mrf.mxu0
      %v828 = vadd.f32 0.0, %v827
      %v829 = vpop.f32.mrf.mxu0
      %v830 = vadd.f32 0.0, %v829
      %831 = vmatmul.bf16.gmra.mxu0 %v590
      %v832 = vpop.f32.mrf.mxu0
      %v833 = vadd.f32 0.0, %v832
      %v834 = vpop.f32.mrf.mxu0
      %v835 = vadd.f32 0.0, %v834
      %836 = vmatmul.bf16.gmra.mxu0 %v591
      %v837 = vpop.f32.mrf.mxu0
      %v838 = vadd.f32 0.0, %v837
      %v839 = vpop.f32.mrf.mxu0
      %v840 = vadd.f32 0.0, %v839
      %841 = vmatmul.bf16.gmra.mxu0 %v592
      %v842 = vpop.f32.mrf.mxu0
      %v843 = vadd.f32 0.0, %v842
      %v844 = vpop.f32.mrf.mxu0
      %v845 = vadd.f32 0.0, %v844
      %846 = vmatmul.bf16.gmra.mxu0 %v593
      %v847 = vpop.f32.mrf.mxu0
      %v848 = vadd.f32 0.0, %v847
      %v849 = vpop.f32.mrf.mxu0
      %v850 = vadd.f32 0.0, %v849
      %851 = vdwg.mxu0
      %852 = vmatpush.bf16.msra.mxu0 %v729
      %853 = vmatpush.bf16.msra.mxu0 %v726
      %854 = vmatpush.bf16.msra.mxu0 %v723
      %855 = vmatpush.bf16.msra.mxu0 %v720
      %856 = vmatpush.bf16.msra.mxu0 %v717
      %857 = vmatpush.bf16.msra.mxu0 %v714
      %858 = vmatpush.bf16.msra.mxu0 %v711
      %859 = vmatpush.bf16.msra.mxu0 %v708
      %860 = vmatmul.bf16.gmra.mxu0 %v586
      %v861 = vpop.f32.mrf.mxu0
      %v862 = vadd.f32 0.0, %v861
      %v863 = vpop.f32.mrf.mxu0
      %v864 = vadd.f32 0.0, %v863
      %865 = vmatmul.bf16.gmra.mxu0 %v587
      %v866 = vpop.f32.mrf.mxu0
      %v867 = vadd.f32 0.0, %v866
      %v868 = vpop.f32.mrf.mxu0
      %v869 = vadd.f32 0.0, %v868
      %870 = vmatmul.bf16.gmra.mxu0 %v588
      %v871 = vpop.f32.mrf.mxu0
      %v872 = vadd.f32 0.0, %v871
      %v873 = vpop.f32.mrf.mxu0
      %v874 = vadd.f32 0.0, %v873
      %875 = vmatmul.bf16.gmra.mxu0 %v589
      %v876 = vpop.f32.mrf.mxu0
      %v877 = vadd.f32 0.0, %v876
      %v878 = vpop.f32.mrf.mxu0
      %v879 = vadd.f32 0.0, %v878
      %880 = vmatmul.bf16.gmra.mxu0 %v590
      %v881 = vpop.f32.mrf.mxu0
      %v882 = vadd.f32 0.0, %v881
      %v883 = vpop.f32.mrf.mxu0
      %v884 = vadd.f32 0.0, %v883
      %885 = vmatmul.bf16.gmra.mxu0 %v591
      %v886 = vpop.f32.mrf.mxu0
      %v887 = vadd.f32 0.0, %v886
      %v888 = vpop.f32.mrf.mxu0
      %v889 = vadd.f32 0.0, %v888
      %890 = vmatmul.bf16.gmra.mxu0 %v592
      %v891 = vpop.f32.mrf.mxu0
      %v892 = vadd.f32 0.0, %v891
      %v893 = vpop.f32.mrf.mxu0
      %v894 = vadd.f32 0.0, %v893
      %895 = vmatmul.bf16.gmra.mxu0 %v593
      %v896 = vpop.f32.mrf.mxu0
      %v897 = vadd.f32 0.0, %v896
      %v898 = vpop.f32.mrf.mxu0
      %v899 = vadd.f32 0.0, %v898
      %900 = vdwg.mxu0
      %v901 = vpack.c.bf16 %v813, %v764
      %v902 = vpack.c.bf16 %v862, %v862
      %v903 = vpack.c.bf16 %v815, %v766
      %v904 = vpack.c.bf16 %v864, %v864
      %v905 = vpack.c.bf16 %v818, %v769
      %v906 = vpack.c.bf16 %v867, %v867
      %v907 = vpack.c.bf16 %v820, %v771
      %v908 = vpack.c.bf16 %v869, %v869
      %v909 = vpack.c.bf16 %v823, %v774
      %v910 = vpack.c.bf16 %v872, %v872
      %v911 = vpack.c.bf16 %v825, %v776
      %v912 = vpack.c.bf16 %v874, %v874
      %v913 = vpack.c.bf16 %v828, %v779
      %v914 = vpack.c.bf16 %v877, %v877
      %v915 = vpack.c.bf16 %v830, %v781
      %v916 = vpack.c.bf16 %v879, %v879
      %v917 = vpack.c.bf16 %v833, %v784
      %v918 = vpack.c.bf16 %v882, %v882
      %v919 = vpack.c.bf16 %v835, %v786
      %v920 = vpack.c.bf16 %v884, %v884
      %v921 = vpack.c.bf16 %v838, %v789
      %v922 = vpack.c.bf16 %v887, %v887
      %v923 = vpack.c.bf16 %v840, %v791
      %v924 = vpack.c.bf16 %v889, %v889
      %v925 = vpack.c.bf16 %v843, %v794
      %v926 = vpack.c.bf16 %v892, %v892
      %v927 = vpack.c.bf16 %v845, %v796
      %v928 = vpack.c.bf16 %v894, %v894
      %v929 = vpack.c.bf16 %v848, %v799
      %v930 = vpack.c.bf16 %v897, %v897
      %v931 = vpack.c.bf16 %v850, %v801
      %v932 = vpack.c.bf16 %v899, %v899
      %933 = vst [vmem:[%s201] sm:$0xff] %v901
      %934 = vst [vmem:[%s201 + $0x8] sm:$0xf] %v902
      %935 = vst [vmem:[%s201 + $0xc] sm:$0xff] %v903
      %936 = vst [vmem:[%s201 + $0x14] sm:$0xf] %v904
      %937 = vst [vmem:[%s201 + $0x18] sm:$0xff] %v905
      %938 = vst [vmem:[%s201 + $0x20] sm:$0xf] %v906
      %939 = vst [vmem:[%s201 + $0x24] sm:$0xff] %v907
      %940 = vst [vmem:[%s201 + $0x2c] sm:$0xf] %v908
      %941 = vst [vmem:[%s201 + $0x30] sm:$0xff] %v909
      %942 = vst [vmem:[%s201 + $0x38] sm:$0xf] %v910
      %943 = vst [vmem:[%s201 + $0x3c] sm:$0xff] %v911
      %944 = vst [vmem:[%s201 + $0x44] sm:$0xf] %v912
      %945 = vst [vmem:[%s201 + $0x48] sm:$0xff] %v913
      %946 = vst [vmem:[%s201 + $0x50] sm:$0xf] %v914
      %947 = vst [vmem:[%s201 + $0x54] sm:$0xff] %v915
      %948 = vst [vmem:[%s201 + $0x5c] sm:$0xf] %v916
      %949 = vst [vmem:[%s201 + $0x60] sm:$0xff] %v917
      %950 = vst [vmem:[%s201 + $0x68] sm:$0xf] %v918
      %951 = vst [vmem:[%s201 + $0x6c] sm:$0xff] %v919
      %952 = vst [vmem:[%s201 + $0x74] sm:$0xf] %v920
      %953 = vst [vmem:[%s201 + $0x78] sm:$0xff] %v921
      %954 = vst [vmem:[%s201 + $0x80] sm:$0xf] %v922
      %955 = vst [vmem:[%s201 + $0x84] sm:$0xff] %v923
      %956 = vst [vmem:[%s201 + $0x8c] sm:$0xf] %v924
      %957 = vst [vmem:[%s201 + $0x90] sm:$0xff] %v925
      %958 = vst [vmem:[%s201 + $0x98] sm:$0xf] %v926
      %959 = vst [vmem:[%s201 + $0x9c] sm:$0xff] %v927
      %960 = vst [vmem:[%s201 + $0xa4] sm:$0xf] %v928
      %961 = vst [vmem:[%s201 + $0xa8] sm:$0xff] %v929
      %962 = vst [vmem:[%s201 + $0xb0] sm:$0xf] %v930
      %963 = vst [vmem:[%s201 + $0xb4] sm:$0xff] %v931
      %964 = vst [vmem:[%s201 + $0xbc] sm:$0xf] %v932
      %s965 = smul.u32 16, %s15
      %p966 = scmp.lt.s32.totalorder %s965, 31
      %s967 = scalar_select %p966, %s965, 31
      %s968 = smul.addr %s967, 3
      %s969 = smul.addr %s968, 4
      %s970 = scalar_lea.vmem %s4, %s969
      // Predicated region
      $region37: #{flash_attention_block.3} parent=35 // pred_check
        %p971 = pneg %p122
      $region38: #{flash_attention_block.3} parent=35 // pred_check_branch
        %973 = sbr.rel (%p971) target = $region40
      $region39: #{flash_attention_block.3} parent=35 // pred_region
        %s974 = smul.u32 16, %s15
      $region40: #{flash_attention_block.3} parent=35 // pred_fallthru
        _
    $region36: #{flash_attention_block.3} parent=5 // pred_fallthru
      _
    %p975 = scmp.le.s32.totalorder 2, %s10
    // Predicated region
    $region41: #{flash_attention_block.3} parent=5 // pred_check
      %p976 = pneg %p975
    $region42: #{flash_attention_block.3} parent=5 // pred_check_branch
      %978 = sbr.rel (%p976) target = $region44
    $region43: #{flash_attention_block.3} parent=5 // pred_region
      %s979 = ssub.s32 %s10, 2
      // Predicated region
      $region45: #{flash_attention_block.3} parent=43 // pred_check
        %p980 = pneg %p128
      $region46: #{flash_attention_block.3} parent=43 // pred_check_branch
        %982 = sbr.rel (%p980) target = $region48
      $region47: #{flash_attention_block.3} parent=43 // pred_region
        %s983 = smul.u32 16, %s16
        %p984 = scmp.lt.s32.totalorder %s983, 31
        %s985 = scalar_select %p984, %s983, 31
        %s986 = smul.addr %s985, 3
        %s987 = smul.addr %s986, 4
        %s988 = scalar_lea.vmem %s4, %s987
      $region48: #{flash_attention_block.3} parent=43 // pred_fallthru
        _
    $region44: #{flash_attention_block.3} parent=5 // pred_fallthru
      _
  $region6: #{flash_attention_block.3} parent=0 // loop_footer
    %s14 = sadd.s32 1, %s10
  $region7: #{flash_attention_block.3} parent=0 // loop_footer_branch
    %9 = sbr.rel target = $region3
  $region8: #{flash_attention_block.3} parent=0 // loop_exit
    _

// kernel: flash_attention_block.5
$region0: #{flash_attention_block.5}
  #allocation0 [shape = 'u32[]', space=smem, size = 0x4, offset = 0x4, fixed_abs, tag = 'smem constant byte address 0x4 - core index']
  #allocation1 [shape = 'u32[72,128]{1,0:T(1,128)}', space=vmem, size = 0x9000, scoped, tag = 'internal scratch']
  #allocation2 [shape = 'f32[128,128]{1,0:T(8,128)}', space=vmem, size = 0x10000, scoped, tag = 'scratch operand']
  %s0 = inlined_call_operand.vmem [shape: f32[256,128], index: 0, kind: input, shape index: {}]
  %s1 = inlined_call_operand.vmem [shape: bf16[256,128], index: 1, kind: input, shape index: {}]
  %s2 = inlined_call_operand.vmem [shape: bf16[128,512], index: 2, kind: input, shape index: {}]
  %s3 = inlined_call_operand.vmem [shape: f32[1,512], index: 3, kind: input, shape index: {}]
  %s4 = inlined_call_operand.vmem [shape: bf16[512,128], index: 4, kind: input, shape index: {}]
  %s5 = inlined_call_operand.vmem [shape: f32[1,128], index: 5, kind: input, shape index: {}]
  %s6 = inlined_call_operand.hbm [shape: f32[256,128], index: 6, kind: output, shape index: {}]
  %s7 = sld [smem:[#allocation0]]
  $region103: #{flash_attention_block.5} parent=0
    _
  %s9 = ssub.s32 1, %s7
  %s10 = scalar_select 0, %s9, %s7
  $region1: #{flash_attention_block.5} parent=0
    #allocation3 [shape = 'u8[131072]{0}', space=vmem, size = 0x20000, scoped, tag = 'input window, operand 2']
    #allocation4 [shape = 'u8[131072]{0}', space=vmem, size = 0x20000, scoped, tag = 'output window, operand 0']
    #allocation5 [shape = 's32[2]{0}', space=sflag, size = 0x8, scoped, tag = 'scoped memory for flash_attention_block.5']
    %11 = vsyncpa [#allocation5], 0
    %s12 = scalar_lea.sflag [#allocation5], 1
    %13 = vsyncpa %s12, 0
    loop: start=0, step=1, limit=6
    $region2: #{flash_attention_block.5} parent=1 // loop_pre_header
      _
    $region3: #{flash_attention_block.5} parent=1 // loop_header
      %s15 = sphi 0, %s19
      %p16 = scmp.ge.s32.totalorder %s15, 6
      %s22 = sphi 0, %s34
      %s23 = sphi 0, %s30
      %s24 = sphi 0, %s22
      %s25 = sphi 0, %s23
      %s26 = sphi 0, %s24
      %s27 = sphi 0, %s25
      %s37 = sphi 0, %s39
      %s40 = sphi 0, %s37
      %s41 = sphi 0, %s40
      %s57 = sphi 0, %s41
      %s63 = sphi 0, %s65
      %s66 = sphi 0, %s63
      %s67 = sphi 0, %s66
      %s83 = sphi 0, %s67
      %s89 = sphi 0, %s91
      %s92 = sphi 0, %s89
      %s93 = sphi 0, %s92
      %s109 = sphi 0, %s93
      %s115 = sphi 0, %s117
      %s118 = sphi 0, %s115
      %s119 = sphi 0, %s118
      %s135 = sphi 0, %s119
      %s141 = sphi 0, %s143
      %s144 = sphi 0, %s141
      %s145 = sphi 0, %s144
      %s161 = sphi 0, %s145
      %s165 = sphi 0, %s165
      %s167 = sphi 0, %s165
      %s168 = sphi 0, %s167
      %s182 = sphi 0, %s168
      %s188 = sphi 0, %s190
      %s191 = sphi 0, %s188
      %s192 = sphi 0, %s191
      %s208 = sphi 0, %s192
    $region4: #{flash_attention_block.5} parent=1 // loop_header_branch
      %18 = sbr.rel (%p16) target = $region8
    $region5: #{flash_attention_block.5} parent=1 // loop_body
      %s20 = ssub.s32 %s15, 1
      %s21 = ssub.s32 %s15, 2
      %s28 = sadd.s32 1, %s23
      %p29 = scmp.ge.s32.totalorder %s28, 2
      %s30 = scalar_select %p29, 0, %s28
      %s31 = sadd.s32 1, %s22
      %s32 = scalar_select %p29, %s31, %s22
      %p33 = scmp.ge.s32.totalorder %s32, 2
      %s34 = scalar_select %p33, 0, %s32
      %s35 = ssub.s32 %s22, %s34
      %p36 = scmp.eq.s32.totalorder %s35, 0
      %s38 = sadd.s32 %s37, 1
      %s39 = scalar_select %p36, %s37, %s38
      %p42 = pneg %p36
      %p43 = scmp.eq.s32.totalorder %s15, 3
      %p44 = por %p42, %p43
      %p45 = scmp.ne.s32.totalorder %s37, %s40
      %p46 = scmp.eq.s32.totalorder %s15, 0
      %p47 = por %p45, %p46
      %p48 = scmp.ne.s32.totalorder %s37, %s40
      %p49 = scmp.eq.s32.totalorder %s20, 3
      %p50 = por %p48, %p49
      %p51 = scmp.ne.s32.totalorder %s40, %s41
      %p52 = scmp.eq.s32.totalorder %s20, 0
      %p53 = por %p51, %p52
      %p54 = scmp.ne.s32.totalorder %s40, %s41
      %p55 = scmp.eq.s32.totalorder %s21, 3
      %p56 = por %p54, %p55
      %p58 = scmp.ne.s32.totalorder %s41, %s57
      %p59 = scmp.eq.s32.totalorder %s21, 0
      %p60 = por %p58, %p59
      %s61 = ssub.s32 %s22, %s34
      %p62 = scmp.eq.s32.totalorder %s61, 0
      %s64 = sadd.s32 %s63, 1
      %s65 = scalar_select %p62, %s63, %s64
      %p68 = pneg %p62
      %p69 = scmp.eq.s32.totalorder %s15, 3
      %p70 = por %p68, %p69
      %p71 = scmp.ne.s32.totalorder %s63, %s66
      %p72 = scmp.eq.s32.totalorder %s15, 0
      %p73 = por %p71, %p72
      %p74 = scmp.ne.s32.totalorder %s63, %s66
      %p75 = scmp.eq.s32.totalorder %s20, 3
      %p76 = por %p74, %p75
      %p77 = scmp.ne.s32.totalorder %s66, %s67
      %p78 = scmp.eq.s32.totalorder %s20, 0
      %p79 = por %p77, %p78
      %p80 = scmp.ne.s32.totalorder %s66, %s67
      %p81 = scmp.eq.s32.totalorder %s21, 3
      %p82 = por %p80, %p81
      %p84 = scmp.ne.s32.totalorder %s67, %s83
      %p85 = scmp.eq.s32.totalorder %s21, 0
      %p86 = por %p84, %p85
      %s87 = ssub.s32 %s23, %s30
      %p88 = scmp.eq.s32.totalorder %s87, 0
      %s90 = sadd.s32 %s89, 1
      %s91 = scalar_select %p88, %s89, %s90
      %p94 = pneg %p88
      %p95 = scmp.eq.s32.totalorder %s15, 3
      %p96 = por %p94, %p95
      %p97 = scmp.ne.s32.totalorder %s89, %s92
      %p98 = scmp.eq.s32.totalorder %s15, 0
      %p99 = por %p97, %p98
      %p100 = scmp.ne.s32.totalorder %s89, %s92
      %p101 = scmp.eq.s32.totalorder %s20, 3
      %p102 = por %p100, %p101
      %p103 = scmp.ne.s32.totalorder %s92, %s93
      %p104 = scmp.eq.s32.totalorder %s20, 0
      %p105 = por %p103, %p104
      %p106 = scmp.ne.s32.totalorder %s92, %s93
      %p107 = scmp.eq.s32.totalorder %s21, 3
      %p108 = por %p106, %p107
      %p110 = scmp.ne.s32.totalorder %s93, %s109
      %p111 = scmp.eq.s32.totalorder %s21, 0
      %p112 = por %p110, %p111
      %s113 = ssub.s32 %s23, %s30
      %p114 = scmp.eq.s32.totalorder %s113, 0
      %s116 = sadd.s32 %s115, 1
      %s117 = scalar_select %p114, %s115, %s116
      %p120 = pneg %p114
      %p121 = scmp.eq.s32.totalorder %s15, 3
      %p122 = por %p120, %p121
      %p123 = scmp.ne.s32.totalorder %s115, %s118
      %p124 = scmp.eq.s32.totalorder %s15, 0
      %p125 = por %p123, %p124
      %p126 = scmp.ne.s32.totalorder %s115, %s118
      %p127 = scmp.eq.s32.totalorder %s20, 3
      %p128 = por %p126, %p127
      %p129 = scmp.ne.s32.totalorder %s118, %s119
      %p130 = scmp.eq.s32.totalorder %s20, 0
      %p131 = por %p129, %p130
      %p132 = scmp.ne.s32.totalorder %s118, %s119
      %p133 = scmp.eq.s32.totalorder %s21, 3
      %p134 = por %p132, %p133
      %p136 = scmp.ne.s32.totalorder %s119, %s135
      %p137 = scmp.eq.s32.totalorder %s21, 0
      %p138 = por %p136, %p137
      %s139 = ssub.s32 %s23, %s30
      %p140 = scmp.eq.s32.totalorder %s139, 0
      %s142 = sadd.s32 %s141, 1
      %s143 = scalar_select %p140, %s141, %s142
      %p146 = pneg %p140
      %p147 = scmp.eq.s32.totalorder %s15, 3
      %p148 = por %p146, %p147
      %p149 = scmp.ne.s32.totalorder %s141, %s144
      %p150 = scmp.eq.s32.totalorder %s15, 0
      %p151 = por %p149, %p150
      %p152 = scmp.ne.s32.totalorder %s141, %s144
      %p153 = scmp.eq.s32.totalorder %s20, 3
      %p154 = por %p152, %p153
      %p155 = scmp.ne.s32.totalorder %s144, %s145
      %p156 = scmp.eq.s32.totalorder %s20, 0
      %p157 = por %p155, %p156
      %p158 = scmp.ne.s32.totalorder %s144, %s145
      %p159 = scmp.eq.s32.totalorder %s21, 3
      %p160 = por %p158, %p159
      %p162 = scmp.ne.s32.totalorder %s145, %s161
      %p163 = scmp.eq.s32.totalorder %s21, 0
      %p164 = por %p162, %p163
      %s166 = sadd.s32 %s165, 1
      %p169 = scmp.eq.s32.totalorder %s15, 3
      %p170 = scmp.ne.s32.totalorder %s165, %s167
      %p171 = scmp.eq.s32.totalorder %s15, 0
      %p172 = por %p170, %p171
      %p173 = scmp.ne.s32.totalorder %s165, %s167
      %p174 = scmp.eq.s32.totalorder %s20, 3
      %p175 = por %p173, %p174
      %p176 = scmp.ne.s32.totalorder %s167, %s168
      %p177 = scmp.eq.s32.totalorder %s20, 0
      %p178 = por %p176, %p177
      %p179 = scmp.ne.s32.totalorder %s167, %s168
      %p180 = scmp.eq.s32.totalorder %s21, 3
      %p181 = por %p179, %p180
      %p183 = scmp.ne.s32.totalorder %s168, %s182
      %p184 = scmp.eq.s32.totalorder %s21, 0
      %p185 = por %p183, %p184
      %s186 = ssub.s32 %s22, %s34
      %p187 = scmp.eq.s32.totalorder %s186, 0
      %s189 = sadd.s32 %s188, 1
      %s190 = scalar_select %p187, %s188, %s189
      %p193 = pneg %p187
      %p194 = scmp.eq.s32.totalorder %s15, 3
      %p195 = por %p193, %p194
      %p196 = scmp.ne.s32.totalorder %s188, %s191
      %p197 = scmp.eq.s32.totalorder %s15, 0
      %p198 = por %p196, %p197
      %p199 = scmp.ne.s32.totalorder %s188, %s191
      %p200 = scmp.eq.s32.totalorder %s20, 3
      %p201 = por %p199, %p200
      %p202 = scmp.ne.s32.totalorder %s191, %s192
      %p203 = scmp.eq.s32.totalorder %s20, 0
      %p204 = por %p202, %p203
      %p205 = scmp.ne.s32.totalorder %s191, %s192
      %p206 = scmp.eq.s32.totalorder %s21, 3
      %p207 = por %p205, %p206
      %p209 = scmp.ne.s32.totalorder %s192, %s208
      %p210 = scmp.eq.s32.totalorder %s21, 0
      %p211 = por %p209, %p210
      %p212 = scmp.le.s32.totalorder 1, %s15
      %p213 = scmp.lt.s32.totalorder %s15, 5
      %p214 = pnand %p212, %p213
      %p215 = pneg %p214
      // Predicated region
      $region9: #{flash_attention_block.5} parent=5 // pred_check
        _
      $region10: #{flash_attention_block.5} parent=5 // pred_check_branch
        %217 = sbr.rel (%p214) target = $region12
      $region11: #{flash_attention_block.5} parent=5 // pred_region
        %s218 = ssub.s32 %s15, 1
        // Predicated region
        $region13: #{flash_attention_block.5} parent=11 // pred_check
          %p219 = pneg %p178
        $region14: #{flash_attention_block.5} parent=11 // pred_check_branch
          %221 = sbr.rel (%p219) target = $region16
        $region15: #{flash_attention_block.5} parent=11 // pred_region
          _
        $region16: #{flash_attention_block.5} parent=11 // pred_fallthru
          _
      $region12: #{flash_attention_block.5} parent=5 // pred_fallthru
        _
      %p222 = scmp.lt.s32.totalorder %s15, 4
      // Predicated region
      $region17: #{flash_attention_block.5} parent=5 // pred_check
        %p223 = pneg %p222
      $region18: #{flash_attention_block.5} parent=5 // pred_check_branch
        %225 = sbr.rel (%p223) target = $region20
      $region19: #{flash_attention_block.5} parent=5 // pred_region
        // Predicated region
        $region21: #{flash_attention_block.5} parent=19 // pred_check
          %p226 = pneg %p47
        $region22: #{flash_attention_block.5} parent=19 // pred_check_branch
          %228 = sbr.rel (%p226) target = $region24
        $region23: #{flash_attention_block.5} parent=19 // pred_region
          %s229 = smul.u32 16, %s22
          %p230 = scmp.lt.s32.totalorder %s229, 31
          %s231 = scalar_select %p230, %s229, 31
          %s232 = smul.addr %s231, 8
          %s233 = scalar_lea.vmem %s0, %s232
          %s234 = smul.u32 16, %s22
        $region24: #{flash_attention_block.5} parent=19 // pred_fallthru
          _
        // Predicated region
        $region25: #{flash_attention_block.5} parent=19 // pred_check
          %p235 = pneg %p73
        $region26: #{flash_attention_block.5} parent=19 // pred_check_branch
          %237 = sbr.rel (%p235) target = $region28
        $region27: #{flash_attention_block.5} parent=19 // pred_region
          %s238 = smul.u32 16, %s22
          %p239 = scmp.lt.s32.totalorder %s238, 31
          %s240 = scalar_select %p239, %s238, 31
          %s241 = smul.addr %s240, 4
          %s242 = scalar_lea.vmem %s1, %s241
          %s243 = smul.u32 16, %s22
        $region28: #{flash_attention_block.5} parent=19 // pred_fallthru
          _
        // Predicated region
        $region29: #{flash_attention_block.5} parent=19 // pred_check
          %p244 = pneg %p99
        $region30: #{flash_attention_block.5} parent=19 // pred_check_branch
          %246 = sbr.rel (%p244) target = $region32
        $region31: #{flash_attention_block.5} parent=19 // pred_region
          %s247 = sand.u32 %s89, 1
          %s248 = sand.u32 %s89, 1
          %s249 = smul.addr %s248, 128
          %s250 = scalar_lea.vmem [#allocation3], %s249
          %s251 = smul.u32 2, %s23
          %s252 = smul.addr %s251, 4
          %s253 = scalar_lea.vmem %s2, %s252
          // Predicated region
          $region33: #{flash_attention_block.5} parent=31 // pred_check
            _
          $region34: #{flash_attention_block.5} parent=31 // pred_check_branch
            %255 = sbr.rel (0) target = $region36
          $region35: #{flash_attention_block.5} parent=31 // pred_region
            // Predicated region
            $region37: #{flash_attention_block.5} parent=35 // pred_check
              _
            $region38: #{flash_attention_block.5} parent=35 // pred_check_branch
              %257 = sbr.rel (0) target = $region40
            $region39: #{flash_attention_block.5} parent=35 // pred_region
              // Predicated region
              $region52: #{flash_attention_block.5} parent=39 // pred_check
                _
              $region53: #{flash_attention_block.5} parent=39 // pred_check_branch
                %303 = sbr.rel (0) target = $region55
              $region54: #{flash_attention_block.5} parent=39 // pred_region
                loop: start=0, step=1, limit=1
                $region56: #{flash_attention_block.5} parent=54 // loop_pre_header
                  _
                $region57: #{flash_attention_block.5} parent=54 // loop_header
                  %s305 = sphi 0, %s309
                  %p306 = scmp.ge.s32.totalorder %s305, 1
                  %s310 = sphi %s253, %s253
                  %s311 = sphi %s250, %s250
                $region58: #{flash_attention_block.5} parent=54 // loop_header_branch
                  %308 = sbr.rel (%p306) target = $region62
                $region59: #{flash_attention_block.5} parent=54 // loop_body
                  %v312 = vld [vmem:[%s310] sm:$0xff]
                  %313 = vst [vmem:[%s311] sm:$0xff] %v312
                  %v314 = vld [vmem:[%s310 + $0x10] sm:$0xff]
                  %315 = vst [vmem:[%s311 + $0x8] sm:$0xff] %v314
                  %v316 = vld [vmem:[%s310 + $0x20] sm:$0xff]
                  %317 = vst [vmem:[%s311 + $0x10] sm:$0xff] %v316
                  %v318 = vld [vmem:[%s310 + $0x30] sm:$0xff]
                  %319 = vst [vmem:[%s311 + $0x18] sm:$0xff] %v318
                  %v320 = vld [vmem:[%s310 + $0x40] sm:$0xff]
                  %321 = vst [vmem:[%s311 + $0x20] sm:$0xff] %v320
                  %v322 = vld [vmem:[%s310 + $0x50] sm:$0xff]
                  %323 = vst [vmem:[%s311 + $0x28] sm:$0xff] %v322
                  %v324 = vld [vmem:[%s310 + $0x60] sm:$0xff]
                  %325 = vst [vmem:[%s311 + $0x30] sm:$0xff] %v324
                  %v326 = vld [vmem:[%s310 + $0x70] sm:$0xff]
                  %327 = vst [vmem:[%s311 + $0x38] sm:$0xff] %v326
                  %v328 = vld [vmem:[%s310 + $0x80] sm:$0xff]
                  %329 = vst [vmem:[%s311 + $0x40] sm:$0xff] %v328
                  %v330 = vld [vmem:[%s310 + $0x90] sm:$0xff]
                  %331 = vst [vmem:[%s311 + $0x48] sm:$0xff] %v330
                  %v332 = vld [vmem:[%s310 + $0xa0] sm:$0xff]
                  %333 = vst [vmem:[%s311 + $0x50] sm:$0xff] %v332
                  %v334 = vld [vmem:[%s310 + $0xb0] sm:$0xff]
                  %335 = vst [vmem:[%s311 + $0x58] sm:$0xff] %v334
                  %v336 = vld [vmem:[%s310 + $0xc0] sm:$0xff]
                  %337 = vst [vmem:[%s311 + $0x60] sm:$0xff] %v336
                  %v338 = vld [vmem:[%s310 + $0xd0] sm:$0xff]
                  %339 = vst [vmem:[%s311 + $0x68] sm:$0xff] %v338
                  %v340 = vld [vmem:[%s310 + $0xe0] sm:$0xff]
                  %341 = vst [vmem:[%s311 + $0x70] sm:$0xff] %v340
                  %v342 = vld [vmem:[%s310 + $0xf0] sm:$0xff]
                  %343 = vst [vmem:[%s311 + $0x78] sm:$0xff] %v342
                $region60: #{flash_attention_block.5} parent=54 // loop_footer
                  %s309 = sadd.s32 1, %s305
                $region61: #{flash_attention_block.5} parent=54 // loop_footer_branch
                  %304 = sbr.rel target = $region57
                $region62: #{flash_attention_block.5} parent=54 // loop_exit
                  _
              $region55: #{flash_attention_block.5} parent=39 // pred_fallthru
                _
              // Predicated region
              $region63: #{flash_attention_block.5} parent=39 // pred_check
                _
              $region64: #{flash_attention_block.5} parent=39 // pred_check_branch
                %345 = sbr.rel target = $region66
              $region65: #{flash_attention_block.5} parent=39 // pred_region
                _
              $region66: #{flash_attention_block.5} parent=39 // pred_fallthru
                _
            $region40: #{flash_attention_block.5} parent=35 // pred_fallthru
              _
            // Predicated region
            $region41: #{flash_attention_block.5} parent=35 // pred_check
              _
            $region42: #{flash_attention_block.5} parent=35 // pred_check_branch
              %259 = sbr.rel target = $region44
            $region43: #{flash_attention_block.5} parent=35 // pred_region
              %s261 = ssub.s32 256, 1
              loop: start=0, step=1, limit=1
              $region45: #{flash_attention_block.5} parent=43 // loop_pre_header
                _
              $region46: #{flash_attention_block.5} parent=43 // loop_header
                %s263 = sphi 0, %s267
                %p264 = scmp.ge.s32.totalorder %s263, 1
                %s268 = sphi %s253, %s253
                %s269 = sphi %s250, %s250
              $region47: #{flash_attention_block.5} parent=43 // loop_header_branch
                %266 = sbr.rel (%p264) target = $region51
              $region48: #{flash_attention_block.5} parent=43 // loop_body
                %v270 = vld [vmem:[%s268] sm:%s261]
                %271 = vst [vmem:[%s269] sm:%s261] %v270
                %v272 = vld [vmem:[%s268 + $0x10] sm:%s261]
                %273 = vst [vmem:[%s269 + $0x8] sm:%s261] %v272
                %v274 = vld [vmem:[%s268 + $0x20] sm:%s261]
                %275 = vst [vmem:[%s269 + $0x10] sm:%s261] %v274
                %v276 = vld [vmem:[%s268 + $0x30] sm:%s261]
                %277 = vst [vmem:[%s269 + $0x18] sm:%s261] %v276
                %v278 = vld [vmem:[%s268 + $0x40] sm:%s261]
                %279 = vst [vmem:[%s269 + $0x20] sm:%s261] %v278
                %v280 = vld [vmem:[%s268 + $0x50] sm:%s261]
                %281 = vst [vmem:[%s269 + $0x28] sm:%s261] %v280
                %v282 = vld [vmem:[%s268 + $0x60] sm:%s261]
                %283 = vst [vmem:[%s269 + $0x30] sm:%s261] %v282
                %v284 = vld [vmem:[%s268 + $0x70] sm:%s261]
                %285 = vst [vmem:[%s269 + $0x38] sm:%s261] %v284
                %v286 = vld [vmem:[%s268 + $0x80] sm:%s261]
                %287 = vst [vmem:[%s269 + $0x40] sm:%s261] %v286
                %v288 = vld [vmem:[%s268 + $0x90] sm:%s261]
                %289 = vst [vmem:[%s269 + $0x48] sm:%s261] %v288
                %v290 = vld [vmem:[%s268 + $0xa0] sm:%s261]
                %291 = vst [vmem:[%s269 + $0x50] sm:%s261] %v290
                %v292 = vld [vmem:[%s268 + $0xb0] sm:%s261]
                %293 = vst [vmem:[%s269 + $0x58] sm:%s261] %v292
                %v294 = vld [vmem:[%s268 + $0xc0] sm:%s261]
                %295 = vst [vmem:[%s269 + $0x60] sm:%s261] %v294
                %v296 = vld [vmem:[%s268 + $0xd0] sm:%s261]
                %297 = vst [vmem:[%s269 + $0x68] sm:%s261] %v296
                %v298 = vld [vmem:[%s268 + $0xe0] sm:%s261]
                %299 = vst [vmem:[%s269 + $0x70] sm:%s261] %v298
                %v300 = vld [vmem:[%s268 + $0xf0] sm:%s261]
                %301 = vst [vmem:[%s269 + $0x78] sm:%s261] %v300
              $region49: #{flash_attention_block.5} parent=43 // loop_footer
                %s267 = sadd.s32 1, %s263
              $region50: #{flash_attention_block.5} parent=43 // loop_footer_branch
                %262 = sbr.rel target = $region46
              $region51: #{flash_attention_block.5} parent=43 // loop_exit
                _
            $region44: #{flash_attention_block.5} parent=35 // pred_fallthru
              _
          $region36: #{flash_attention_block.5} parent=31 // pred_fallthru
            _
          %346 = vnop
        $region32: #{flash_attention_block.5} parent=19 // pred_fallthru
          _
        // Predicated region
        $region67: #{flash_attention_block.5} parent=19 // pred_check
          %p347 = pneg %p125
        $region68: #{flash_attention_block.5} parent=19 // pred_check_branch
          %349 = sbr.rel (%p347) target = $region70
        $region69: #{flash_attention_block.5} parent=19 // pred_region
          %s350 = smul.u32 2, %s23
          %p351 = scmp.lt.s32.totalorder %s350, 3
          %s352 = scalar_select %p351, %s350, 3
          %s353 = scalar_lea.vmem %s3, %s352
          %s354 = smul.u32 2, %s23
        $region70: #{flash_attention_block.5} parent=19 // pred_fallthru
          _
        // Predicated region
        $region71: #{flash_attention_block.5} parent=19 // pred_check
          %p355 = pneg %p151
        $region72: #{flash_attention_block.5} parent=19 // pred_check_branch
          %357 = sbr.rel (%p355) target = $region74
        $region73: #{flash_attention_block.5} parent=19 // pred_region
          %s358 = smul.u32 32, %s23
          %p359 = scmp.lt.s32.totalorder %s358, 63
          %s360 = scalar_select %p359, %s358, 63
          %s361 = smul.addr %s360, 4
          %s362 = scalar_lea.vmem %s4, %s361
          %s363 = smul.u32 32, %s23
        $region74: #{flash_attention_block.5} parent=19 // pred_fallthru
          _
      $region20: #{flash_attention_block.5} parent=5 // pred_fallthru
        _
      %p364 = scmp.le.s32.totalorder 1, %s15
      %p365 = scmp.lt.s32.totalorder %s15, 5
      %p366 = pnand %p364, %p365
      %p367 = pneg %p366
      // Predicated region
      $region75: #{flash_attention_block.5} parent=5 // pred_check
        _
      $region76: #{flash_attention_block.5} parent=5 // pred_check_branch
        %369 = sbr.rel (%p366) target = $region78
      $region77: #{flash_attention_block.5} parent=5 // pred_region
        %s370 = ssub.s32 %s15, 1
        %s371 = sand.u32 %s92, 1
        %s372 = sand.u32 %s92, 1
        %s373 = smul.addr %s372, 128
        %s374 = scalar_lea.vmem [#allocation3], %s373
        // Predicated region
        $region79: #{flash_attention_block.5} parent=77 // pred_check
          %p375 = pneg %p105
        $region80: #{flash_attention_block.5} parent=77 // pred_check_branch
          %377 = sbr.rel (%p375) target = $region82
        $region81: #{flash_attention_block.5} parent=77 // pred_region
          _
        $region82: #{flash_attention_block.5} parent=77 // pred_fallthru
          _
        %s378 = smul.u32 16, %s24
        %p379 = scmp.lt.s32.totalorder %s378, 31
        %s380 = scalar_select %p379, %s378, 31
        %s381 = smul.addr %s380, 8
        %s382 = scalar_lea.vmem %s0, %s381
        %p383 = pneg %p53
        %p384 = pneg %p50
        %s385 = smul.u32 16, %s24
        %p386 = scmp.lt.s32.totalorder %s385, 31
        %s387 = scalar_select %p386, %s385, 31
        %s388 = smul.addr %s387, 4
        %s389 = scalar_lea.vmem %s1, %s388
        %p390 = pneg %p79
        %p391 = pneg %p76
        %s392 = sand.u32 %s92, 1
        %s393 = sand.u32 %s92, 1
        %s394 = smul.addr %s393, 128
        %s395 = scalar_lea.vmem [#allocation3], %s394
        %p396 = pneg %p105
        %p397 = pneg %p102
        %s398 = smul.u32 2, %s25
        %p399 = scmp.lt.s32.totalorder %s398, 3
        %s400 = scalar_select %p399, %s398, 3
        %s401 = scalar_lea.vmem %s3, %s400
        %p402 = pneg %p131
        %p403 = pneg %p128
        %s404 = smul.u32 32, %s25
        %p405 = scmp.lt.s32.totalorder %s404, 63
        %s406 = scalar_select %p405, %s404, 63
        %s407 = smul.addr %s406, 4
        %s408 = scalar_lea.vmem %s4, %s407
        %p409 = pneg %p157
        %p410 = pneg %p154
        %p411 = pneg %p178
        %p412 = pneg %p175
        %p413 = pneg %p204
        %p414 = pneg %p201
        %s415 = sand.u32 %s191, 1
        %s416 = scalar_lea.sflag [#allocation5], %s415
        %s417 = sand.u32 %s191, 1
        %s418 = smul.addr %s417, 128
        %s419 = scalar_lea.vmem [#allocation4], %s418
        %s420 = smul.u32 16, %s24
        %p421 = scmp.lt.s32.totalorder %s420, 31
        %s422 = scalar_select %p421, %s420, 31
        %s423 = smul.addr %s422, 8
        %s424 = scalar_lea.vmem %s0, %s423
        %s425 = smul.u32 16, %s24
        %s426 = smul.u32 16, %s24
        %p427 = scmp.lt.s32.totalorder %s426, 31
        %s428 = scalar_select %p427, %s426, 31
        %s429 = smul.addr %s428, 4
        %s430 = scalar_lea.vmem %s1, %s429
        %s431 = smul.u32 16, %s24
        %s432 = smul.u32 2, %s25
        %s433 = smul.u32 2, %s25
        %p434 = scmp.lt.s32.totalorder %s433, 3
        %s435 = scalar_select %p434, %s433, 3
        %s436 = scalar_lea.vmem %s3, %s435
        %s437 = smul.u32 2, %s25
        %s438 = smul.u32 32, %s25
        %p439 = scmp.lt.s32.totalorder %s438, 63
        %s440 = scalar_select %p439, %s438, 63
        %s441 = smul.addr %s440, 4
        %s442 = scalar_lea.vmem %s4, %s441
        %s443 = smul.u32 32, %s25
        %s444 = smul.u32 16, %s24
        %p445 = scmp.eq.s32.totalorder %s25, 0
        // Predicated region
        $region83: #{flash_attention_block.5} parent=77 // pred_check
          %p446 = pneg %p445
        $region84: #{flash_attention_block.5} parent=77 // pred_check_branch
          %448 = sbr.rel (%p446) target = $region86
        $region85: #{flash_attention_block.5} parent=77 // pred_region
          %v449 = vld [vmem:[%s424] sm:$0xff]
          %v450 = vld [vmem:[%s424 + $0x8] sm:$0xff]
          %v451 = vld [vmem:[%s424 + $0x10] sm:$0xff]
          %v452 = vld [vmem:[%s424 + $0x18] sm:$0xff]
          %v453 = vld [vmem:[%s424 + $0x20] sm:$0xff]
          %v454 = vld [vmem:[%s424 + $0x28] sm:$0xff]
          %v455 = vld [vmem:[%s424 + $0x30] sm:$0xff]
          %v456 = vld [vmem:[%s424 + $0x38] sm:$0xff]
          %v457 = vld [vmem:[%s424 + $0x40] sm:$0xff]
          %v458 = vld [vmem:[%s424 + $0x48] sm:$0xff]
          %v459 = vld [vmem:[%s424 + $0x50] sm:$0xff]
          %v460 = vld [vmem:[%s424 + $0x58] sm:$0xff]
          %v461 = vld [vmem:[%s424 + $0x60] sm:$0xff]
          %v462 = vld [vmem:[%s424 + $0x68] sm:$0xff]
          %v463 = vld [vmem:[%s424 + $0x70] sm:$0xff]
          %v464 = vld [vmem:[%s424 + $0x78] sm:$0xff]
          %v465 = vld [vmem:[%s5] sm:$0x1]
          %v467 = vperm.slane %v465, 0
          %v469 = vadd.f32 %v449, %v467
          %v470 = vadd.f32 %v450, %v467
          %v471 = vadd.f32 %v451, %v467
          %v472 = vadd.f32 %v452, %v467
          %v473 = vadd.f32 %v453, %v467
          %v474 = vadd.f32 %v454, %v467
          %v475 = vadd.f32 %v455, %v467
          %v476 = vadd.f32 %v456, %v467
          %v477 = vadd.f32 %v457, %v467
          %v478 = vadd.f32 %v458, %v467
          %v479 = vadd.f32 %v459, %v467
          %v480 = vadd.f32 %v460, %v467
          %v481 = vadd.f32 %v461, %v467
          %v482 = vadd.f32 %v462, %v467
          %v483 = vadd.f32 %v463, %v467
          %v484 = vadd.f32 %v464, %v467
          %485 = vst [vmem:[#allocation2] sm:$0xff] %v469
          %486 = vst [vmem:[#allocation2 + $0x8] sm:$0xff] %v470
          %487 = vst [vmem:[#allocation2 + $0x10] sm:$0xff] %v471
          %488 = vst [vmem:[#allocation2 + $0x18] sm:$0xff] %v472
          %489 = vst [vmem:[#allocation2 + $0x20] sm:$0xff] %v473
          %490 = vst [vmem:[#allocation2 + $0x28] sm:$0xff] %v474
          %491 = vst [vmem:[#allocation2 + $0x30] sm:$0xff] %v475
          %492 = vst [vmem:[#allocation2 + $0x38] sm:$0xff] %v476
          %493 = vst [vmem:[#allocation2 + $0x40] sm:$0xff] %v477
          %494 = vst [vmem:[#allocation2 + $0x48] sm:$0xff] %v478
          %495 = vst [vmem:[#allocation2 + $0x50] sm:$0xff] %v479
          %496 = vst [vmem:[#allocation2 + $0x58] sm:$0xff] %v480
          %497 = vst [vmem:[#allocation2 + $0x60] sm:$0xff] %v481
          %498 = vst [vmem:[#allocation2 + $0x68] sm:$0xff] %v482
          %499 = vst [vmem:[#allocation2 + $0x70] sm:$0xff] %v483
          %500 = vst [vmem:[#allocation2 + $0x78] sm:$0xff] %v484
        $region86: #{flash_attention_block.5} parent=77 // pred_fallthru
          _
        %v501 = vld [vmem:[%s430] sm:$0xf]
        %v502 = vld [vmem:[%s430 + $0x4] sm:$0xf]
        %v503 = vld [vmem:[%s430 + $0x8] sm:$0xf]
        %v504 = vld [vmem:[%s430 + $0xc] sm:$0xf]
        %v505 = vld [vmem:[%s430 + $0x10] sm:$0xf]
        %v506 = vld [vmem:[%s430 + $0x14] sm:$0xf]
        %v507 = vld [vmem:[%s430 + $0x18] sm:$0xf]
        %v508 = vld [vmem:[%s430 + $0x1c] sm:$0xf]
        %v509 = vld [vmem:[%s430 + $0x20] sm:$0xf]
        %v510 = vld [vmem:[%s430 + $0x24] sm:$0xf]
        %v511 = vld [vmem:[%s430 + $0x28] sm:$0xf]
        %v512 = vld [vmem:[%s430 + $0x2c] sm:$0xf]
        %v513 = vld [vmem:[%s430 + $0x30] sm:$0xf]
        %v514 = vld [vmem:[%s430 + $0x34] sm:$0xf]
        %v515 = vld [vmem:[%s430 + $0x38] sm:$0xf]
        %v516 = vld [vmem:[%s430 + $0x3c] sm:$0xf]
        %v517 = vld [vmem:[%s374] sm:$0xff]
        %v518 = vld [vmem:[%s374 + $0x8] sm:$0xff]
        %v519 = vld [vmem:[%s374 + $0x10] sm:$0xff]
        %v520 = vld [vmem:[%s374 + $0x18] sm:$0xff]
        %v521 = vld [vmem:[%s374 + $0x20] sm:$0xff]
        %v522 = vld [vmem:[%s374 + $0x28] sm:$0xff]
        %v523 = vld [vmem:[%s374 + $0x30] sm:$0xff]
        %v524 = vld [vmem:[%s374 + $0x38] sm:$0xff]
        %v525 = vld [vmem:[%s374 + $0x40] sm:$0xff]
        %v526 = vld [vmem:[%s374 + $0x48] sm:$0xff]
        %v527 = vld [vmem:[%s374 + $0x50] sm:$0xff]
        %v528 = vld [vmem:[%s374 + $0x58] sm:$0xff]
        %v529 = vld [vmem:[%s374 + $0x60] sm:$0xff]
        %v530 = vld [vmem:[%s374 + $0x68] sm:$0xff]
        %v531 = vld [vmem:[%s374 + $0x70] sm:$0xff]
        %v532 = vld [vmem:[%s374 + $0x78] sm:$0xff]
        %v533 = vld [vmem:[%s436] sm:$0x3]
        %v535 = vperm.slane %v533, 0
        %v536 = vperm.slane %v533, 1
        %v555 = vunpack.c.l.b16 %v501
        %v556 = vunpack.c.l.b16 %v502
        %v557 = vunpack.c.l.b16 %v503
        %v558 = vunpack.c.l.b16 %v504
        %v559 = vunpack.c.l.b16 %v505
        %v560 = vunpack.c.l.b16 %v506
        %v561 = vunpack.c.l.b16 %v507
        %v562 = vunpack.c.l.b16 %v508
        %v563 = vunpack.c.l.b16 %v509
        %v564 = vunpack.c.l.b16 %v510
        %v565 = vunpack.c.l.b16 %v511
        %v566 = vunpack.c.l.b16 %v512
        %v567 = vunpack.c.l.b16 %v513
        %v568 = vunpack.c.l.b16 %v514
        %v569 = vunpack.c.l.b16 %v515
        %v570 = vunpack.c.l.b16 %v516
        %v571 = vpack.c.b16 %v556, %v555
        %v572 = vpack.c.b16 %v558, %v557
        %v573 = vpack.c.b16 %v560, %v559
        %v574 = vpack.c.b16 %v562, %v561
        %v575 = vpack.c.b16 %v564, %v563
        %v576 = vpack.c.b16 %v566, %v565
        %v577 = vpack.c.b16 %v568, %v567
        %v578 = vpack.c.b16 %v570, %v569
        %v603 = vunpack.c.l.b16 %v517
        %v604 = vunpack.c.h.b16 %v517
        %v605 = vunpack.c.l.b16 %v518
        %v606 = vunpack.c.h.b16 %v518
        %v607 = vunpack.c.l.b16 %v519
        %v608 = vunpack.c.h.b16 %v519
        %v609 = vunpack.c.l.b16 %v520
        %v610 = vunpack.c.h.b16 %v520
        %v611 = vunpack.c.l.b16 %v521
        %v612 = vunpack.c.h.b16 %v521
        %v613 = vunpack.c.l.b16 %v522
        %v614 = vunpack.c.h.b16 %v522
        %v615 = vunpack.c.l.b16 %v523
        %v616 = vunpack.c.h.b16 %v523
        %v617 = vunpack.c.l.b16 %v524
        %v618 = vunpack.c.h.b16 %v524
        %v619 = vunpack.c.l.b16 %v525
        %v620 = vunpack.c.h.b16 %v525
        %v621 = vunpack.c.l.b16 %v526
        %v622 = vunpack.c.h.b16 %v526
        %v623 = vunpack.c.l.b16 %v527
        %v624 = vunpack.c.h.b16 %v527
        %v625 = vunpack.c.l.b16 %v528
        %v626 = vunpack.c.h.b16 %v528
        %v627 = vunpack.c.l.b16 %v529
        %v628 = vunpack.c.h.b16 %v529
        %v629 = vunpack.c.l.b16 %v530
        %v630 = vunpack.c.h.b16 %v530
        %v631 = vunpack.c.l.b16 %v531
        %v632 = vunpack.c.h.b16 %v531
        %v633 = vunpack.c.l.b16 %v532
        %v634 = vunpack.c.h.b16 %v532
        %v635 = vpack.c.b16 %v605, %v603
        %v636 = vpack.c.b16 %v606, %v604
        %v637 = vpack.c.b16 %v609, %v607
        %v638 = vpack.c.b16 %v610, %v608
        %v639 = vpack.c.b16 %v613, %v611
        %v640 = vpack.c.b16 %v614, %v612
        %v641 = vpack.c.b16 %v617, %v615
        %v642 = vpack.c.b16 %v618, %v616
        %v643 = vpack.c.b16 %v621, %v619
        %v644 = vpack.c.b16 %v622, %v620
        %v645 = vpack.c.b16 %v625, %v623
        %v646 = vpack.c.b16 %v626, %v624
        %v647 = vpack.c.b16 %v629, %v627
        %v648 = vpack.c.b16 %v630, %v628
        %v649 = vpack.c.b16 %v633, %v631
        %v650 = vpack.c.b16 %v634, %v632
        %667 = vmatpush.bf16.msra.mxu0 %v649
        %668 = vmatpush.bf16.msra.mxu0 %v647
        %669 = vmatpush.bf16.msra.mxu0 %v645
        %670 = vmatpush.bf16.msra.mxu0 %v643
        %671 = vmatpush.bf16.msra.mxu0 %v641
        %672 = vmatpush.bf16.msra.mxu0 %v639
        %673 = vmatpush.bf16.msra.mxu0 %v637
        %674 = vmatpush.bf16.msra.mxu0 %v635
        %675 = vmatmul.bf16.gmra.mxu0 %v571
        %v676 = vpop.f32.mrf.mxu0
        %v677 = vadd.f32 %v535, %v676
        %v678 = vpop.f32.mrf.mxu0
        %v679 = vadd.f32 %v535, %v678
        %680 = vmatmul.bf16.gmra.mxu0 %v572
        %v681 = vpop.f32.mrf.mxu0
        %v682 = vadd.f32 %v535, %v681
        %v683 = vpop.f32.mrf.mxu0
        %v684 = vadd.f32 %v535, %v683
        %685 = vmatmul.bf16.gmra.mxu0 %v573
        %v686 = vpop.f32.mrf.mxu0
        %v687 = vadd.f32 %v535, %v686
        %v688 = vpop.f32.mrf.mxu0
        %v689 = vadd.f32 %v535, %v688
        %690 = vmatmul.bf16.gmra.mxu0 %v574
        %v691 = vpop.f32.mrf.mxu0
        %v692 = vadd.f32 %v535, %v691
        %v693 = vpop.f32.mrf.mxu0
        %v694 = vadd.f32 %v535, %v693
        %695 = vmatmul.bf16.gmra.mxu0 %v575
        %v696 = vpop.f32.mrf.mxu0
        %v697 = vadd.f32 %v535, %v696
        %v698 = vpop.f32.mrf.mxu0
        %v699 = vadd.f32 %v535, %v698
        %700 = vmatmul.bf16.gmra.mxu0 %v576
        %v701 = vpop.f32.mrf.mxu0
        %v702 = vadd.f32 %v535, %v701
        %v703 = vpop.f32.mrf.mxu0
        %v704 = vadd.f32 %v535, %v703
        %705 = vmatmul.bf16.gmra.mxu0 %v577
        %v706 = vpop.f32.mrf.mxu0
        %v707 = vadd.f32 %v535, %v706
        %v708 = vpop.f32.mrf.mxu0
        %v709 = vadd.f32 %v535, %v708
        %710 = vmatmul.bf16.gmra.mxu0 %v578
        %v711 = vpop.f32.mrf.mxu0
        %v712 = vadd.f32 %v535, %v711
        %v713 = vpop.f32.mrf.mxu0
        %v714 = vadd.f32 %v535, %v713
        %715 = vdwg.mxu0
        %716 = vmatpush.bf16.msra.mxu0 %v650
        %717 = vmatpush.bf16.msra.mxu0 %v648
        %718 = vmatpush.bf16.msra.mxu0 %v646
        %719 = vmatpush.bf16.msra.mxu0 %v644
        %720 = vmatpush.bf16.msra.mxu0 %v642
        %721 = vmatpush.bf16.msra.mxu0 %v640
        %722 = vmatpush.bf16.msra.mxu0 %v638
        %723 = vmatpush.bf16.msra.mxu0 %v636
        %724 = vmatmul.bf16.gmra.mxu0 %v571
        %v725 = vpop.f32.mrf.mxu0
        %v726 = vadd.f32 %v536, %v725
        %v727 = vpop.f32.mrf.mxu0
        %v728 = vadd.f32 %v536, %v727
        %729 = vmatmul.bf16.gmra.mxu0 %v572
        %v730 = vpop.f32.mrf.mxu0
        %v731 = vadd.f32 %v536, %v730
        %v732 = vpop.f32.mrf.mxu0
        %v733 = vadd.f32 %v536, %v732
        %734 = vmatmul.bf16.gmra.mxu0 %v573
        %v735 = vpop.f32.mrf.mxu0
        %v736 = vadd.f32 %v536, %v735
        %v737 = vpop.f32.mrf.mxu0
        %v738 = vadd.f32 %v536, %v737
        %739 = vmatmul.bf16.gmra.mxu0 %v574
        %v740 = vpop.f32.mrf.mxu0
        %v741 = vadd.f32 %v536, %v740
        %v742 = vpop.f32.mrf.mxu0
        %v743 = vadd.f32 %v536, %v742
        %744 = vmatmul.bf16.gmra.mxu0 %v575
        %v745 = vpop.f32.mrf.mxu0
        %v746 = vadd.f32 %v536, %v745
        %v747 = vpop.f32.mrf.mxu0
        %v748 = vadd.f32 %v536, %v747
        %749 = vmatmul.bf16.gmra.mxu0 %v576
        %v750 = vpop.f32.mrf.mxu0
        %v751 = vadd.f32 %v536, %v750
        %v752 = vpop.f32.mrf.mxu0
        %v753 = vadd.f32 %v536, %v752
        %754 = vmatmul.bf16.gmra.mxu0 %v577
        %v755 = vpop.f32.mrf.mxu0
        %v756 = vadd.f32 %v536, %v755
        %v757 = vpop.f32.mrf.mxu0
        %v758 = vadd.f32 %v536, %v757
        %759 = vmatmul.bf16.gmra.mxu0 %v578
        %v760 = vpop.f32.mrf.mxu0
        %v761 = vadd.f32 %v536, %v760
        %v762 = vpop.f32.mrf.mxu0
        %v763 = vadd.f32 %v536, %v762
        %764 = vdwg.mxu0
        %v765 = vld [vmem:[#allocation2] sm:$0xff]
        %v766 = vld [vmem:[#allocation2 + $0x8] sm:$0xff]
        %v767 = vld [vmem:[#allocation2 + $0x10] sm:$0xff]
        %v768 = vld [vmem:[#allocation2 + $0x18] sm:$0xff]
        %v769 = vld [vmem:[#allocation2 + $0x20] sm:$0xff]
        %v770 = vld [vmem:[#allocation2 + $0x28] sm:$0xff]
        %v771 = vld [vmem:[#allocation2 + $0x30] sm:$0xff]
        %v772 = vld [vmem:[#allocation2 + $0x38] sm:$0xff]
        %v773 = vld [vmem:[#allocation2 + $0x40] sm:$0xff]
        %v774 = vld [vmem:[#allocation2 + $0x48] sm:$0xff]
        %v775 = vld [vmem:[#allocation2 + $0x50] sm:$0xff]
        %v776 = vld [vmem:[#allocation2 + $0x58] sm:$0xff]
        %v777 = vld [vmem:[#allocation2 + $0x60] sm:$0xff]
        %v778 = vld [vmem:[#allocation2 + $0x68] sm:$0xff]
        %v779 = vld [vmem:[#allocation2 + $0x70] sm:$0xff]
        %v780 = vld [vmem:[#allocation2 + $0x78] sm:$0xff]
        %v781 = vmul.f32 %v677, 0.5
        %v782 = vmul.f32 %v726, 0.5
        %v783 = vmul.f32 %v679, 0.5
        %v784 = vmul.f32 %v728, 0.5
        %v785 = vmul.f32 %v682, 0.5
        %v786 = vmul.f32 %v731, 0.5
        %v787 = vmul.f32 %v684, 0.5
        %v788 = vmul.f32 %v733, 0.5
        %v789 = vmul.f32 %v687, 0.5
        %v790 = vmul.f32 %v736, 0.5
        %v791 = vmul.f32 %v689, 0.5
        %v792 = vmul.f32 %v738, 0.5
        %v793 = vmul.f32 %v692, 0.5
        %v794 = vmul.f32 %v741, 0.5
        %v795 = vmul.f32 %v694, 0.5
        %v796 = vmul.f32 %v743, 0.5
        %v797 = vmul.f32 %v697, 0.5
        %v798 = vmul.f32 %v746, 0.5
        %v799 = vmul.f32 %v699, 0.5
        %v800 = vmul.f32 %v748, 0.5
        %v801 = vmul.f32 %v702, 0.5
        %v802 = vmul.f32 %v751, 0.5
        %v803 = vmul.f32 %v704, 0.5
        %v804 = vmul.f32 %v753, 0.5
        %v805 = vmul.f32 %v707, 0.5
        %v806 = vmul.f32 %v756, 0.5
        %v807 = vmul.f32 %v709, 0.5
        %v808 = vmul.f32 %v758, 0.5
        %v809 = vmul.f32 %v712, 0.5
        %v810 = vmul.f32 %v761, 0.5
        %v811 = vmul.f32 %v714, 0.5
        %v812 = vmul.f32 %v763, 0.5
        %v813 = vmul.f32 %v677, 0.044715
        %v814 = vmul.f32 %v726, 0.044715
        %v815 = vmul.f32 %v679, 0.044715
        %v816 = vmul.f32 %v728, 0.044715
        %v817 = vmul.f32 %v682, 0.044715
        %v818 = vmul.f32 %v731, 0.044715
        %v819 = vmul.f32 %v684, 0.044715
        %v820 = vmul.f32 %v733, 0.044715
        %v821 = vmul.f32 %v687, 0.044715
        %v822 = vmul.f32 %v736, 0.044715
        %v823 = vmul.f32 %v689, 0.044715
        %v824 = vmul.f32 %v738, 0.044715
        %v825 = vmul.f32 %v692, 0.044715
        %v826 = vmul.f32 %v741, 0.044715
        %v827 = vmul.f32 %v694, 0.044715
        %v828 = vmul.f32 %v743, 0.044715
        %v829 = vmul.f32 %v697, 0.044715
        %v830 = vmul.f32 %v746, 0.044715
        %v831 = vmul.f32 %v699, 0.044715
        %v832 = vmul.f32 %v748, 0.044715
        %v833 = vmul.f32 %v702, 0.044715
        %v834 = vmul.f32 %v751, 0.044715
        %v835 = vmul.f32 %v704, 0.044715
        %v836 = vmul.f32 %v753, 0.044715
        %v837 = vmul.f32 %v707, 0.044715
        %v838 = vmul.f32 %v756, 0.044715
        %v839 = vmul.f32 %v709, 0.044715
        %v840 = vmul.f32 %v758, 0.044715
        %v841 = vmul.f32 %v712, 0.044715
        %v842 = vmul.f32 %v761, 0.044715
        %v843 = vmul.f32 %v714, 0.044715
        %v844 = vmul.f32 %v763, 0.044715
        %v845 = vmul.f32 %v813, %v677
        %v846 = vmul.f32 %v814, %v726
        %v847 = vmul.f32 %v815, %v679
        %v848 = vmul.f32 %v816, %v728
        %v849 = vmul.f32 %v817, %v682
        %v850 = vmul.f32 %v818, %v731
        %v851 = vmul.f32 %v819, %v684
        %v852 = vmul.f32 %v820, %v733
        %v853 = vmul.f32 %v821, %v687
        %v854 = vmul.f32 %v822, %v736
        %v855 = vmul.f32 %v823, %v689
        %v856 = vmul.f32 %v824, %v738
        %v857 = vmul.f32 %v825, %v692
        %v858 = vmul.f32 %v826, %v741
        %v859 = vmul.f32 %v827, %v694
        %v860 = vmul.f32 %v828, %v743
        %v861 = vmul.f32 %v829, %v697
        %v862 = vmul.f32 %v830, %v746
        %v863 = vmul.f32 %v831, %v699
        %v864 = vmul.f32 %v832, %v748
        %v865 = vmul.f32 %v833, %v702
        %v866 = vmul.f32 %v834, %v751
        %v867 = vmul.f32 %v835, %v704
        %v868 = vmul.f32 %v836, %v753
        %v869 = vmul.f32 %v837, %v707
        %v870 = vmul.f32 %v838, %v756
        %v871 = vmul.f32 %v839, %v709
        %v872 = vmul.f32 %v840, %v758
        %v873 = vmul.f32 %v841, %v712
        %v874 = vmul.f32 %v842, %v761
        %v875 = vmul.f32 %v843, %v714
        %v876 = vmul.f32 %v844, %v763
        %v877 = vmul.f32 %v845, %v677
        %v878 = vmul.f32 %v846, %v726
        %v879 = vmul.f32 %v847, %v679
        %v880 = vmul.f32 %v848, %v728
        %v881 = vmul.f32 %v849, %v682
        %v882 = vmul.f32 %v850, %v731
        %v883 = vmul.f32 %v851, %v684
        %v884 = vmul.f32 %v852, %v733
        %v885 = vmul.f32 %v853, %v687
        %v886 = vmul.f32 %v854, %v736
        %v887 = vmul.f32 %v855, %v689
        %v888 = vmul.f32 %v856, %v738
        %v889 = vmul.f32 %v857, %v692
        %v890 = vmul.f32 %v858, %v741
        %v891 = vmul.f32 %v859, %v694
        %v892 = vmul.f32 %v860, %v743
        %v893 = vmul.f32 %v861, %v697
        %v894 = vmul.f32 %v862, %v746
        %v895 = vmul.f32 %v863, %v699
        %v896 = vmul.f32 %v864, %v748
        %v897 = vmul.f32 %v865, %v702
        %v898 = vmul.f32 %v866, %v751
        %v899 = vmul.f32 %v867, %v704
        %v900 = vmul.f32 %v868, %v753
        %v901 = vmul.f32 %v869, %v707
        %v902 = vmul.f32 %v870, %v756
        %v903 = vmul.f32 %v871, %v709
        %v904 = vmul.f32 %v872, %v758
        %v905 = vmul.f32 %v873, %v712
        %v906 = vmul.f32 %v874, %v761
        %v907 = vmul.f32 %v875, %v714
        %v908 = vmul.f32 %v876, %v763
        %v909 = vadd.f32 %v677, %v877
        %v910 = vadd.f32 %v726, %v878
        %v911 = vadd.f32 %v679, %v879
        %v912 = vadd.f32 %v728, %v880
        %v913 = vadd.f32 %v682, %v881
        %v914 = vadd.f32 %v731, %v882
        %v915 = vadd.f32 %v684, %v883
        %v916 = vadd.f32 %v733, %v884
        %v917 = vadd.f32 %v687, %v885
        %v918 = vadd.f32 %v736, %v886
        %v919 = vadd.f32 %v689, %v887
        %v920 = vadd.f32 %v738, %v888
        %v921 = vadd.f32 %v692, %v889
        %v922 = vadd.f32 %v741, %v890
        %v923 = vadd.f32 %v694, %v891
        %v924 = vadd.f32 %v743, %v892
        %v925 = vadd.f32 %v697, %v893
        %v926 = vadd.f32 %v746, %v894
        %v927 = vadd.f32 %v699, %v895
        %v928 = vadd.f32 %v748, %v896
        %v929 = vadd.f32 %v702, %v897
        %v930 = vadd.f32 %v751, %v898
        %v931 = vadd.f32 %v704, %v899
        %v932 = vadd.f32 %v753, %v900
        %v933 = vadd.f32 %v707, %v901
        %v934 = vadd.f32 %v756, %v902
        %v935 = vadd.f32 %v709, %v903
        %v936 = vadd.f32 %v758, %v904
        %v937 = vadd.f32 %v712, %v905
        %v938 = vadd.f32 %v761, %v906
        %v939 = vadd.f32 %v714, %v907
        %v940 = vadd.f32 %v763, %v908
        %v941 = vmul.f32 %v909, 0.7978846
        %v942 = vmul.f32 %v910, 0.7978846
        %v943 = vmul.f32 %v911, 0.7978846
        %v944 = vmul.f32 %v912, 0.7978846
        %v945 = vmul.f32 %v913, 0.7978846
        %v946 = vmul.f32 %v914, 0.7978846
        %v947 = vmul.f32 %v915, 0.7978846
        %v948 = vmul.f32 %v916, 0.7978846
        %v949 = vmul.f32 %v917, 0.7978846
        %v950 = vmul.f32 %v918, 0.7978846
        %v951 = vmul.f32 %v919, 0.7978846
        %v952 = vmul.f32 %v920, 0.7978846
        %v953 = vmul.f32 %v921, 0.7978846
        %v954 = vmul.f32 %v922, 0.7978846
        %v955 = vmul.f32 %v923, 0.7978846
        %v956 = vmul.f32 %v924, 0.7978846
        %v957 = vmul.f32 %v925, 0.7978846
        %v958 = vmul.f32 %v926, 0.7978846
        %v959 = vmul.f32 %v927, 0.7978846
        %v960 = vmul.f32 %v928, 0.7978846
        %v961 = vmul.f32 %v929, 0.7978846
        %v962 = vmul.f32 %v930, 0.7978846
        %v963 = vmul.f32 %v931, 0.7978846
        %v964 = vmul.f32 %v932, 0.7978846
        %v965 = vmul.f32 %v933, 0.7978846
        %v966 = vmul.f32 %v934, 0.7978846
        %v967 = vmul.f32 %v935, 0.7978846
        %v968 = vmul.f32 %v936, 0.7978846
        %v969 = vmul.f32 %v937, 0.7978846
        %v970 = vmul.f32 %v938, 0.7978846
        %v971 = vmul.f32 %v939, 0.7978846
        %v972 = vmul.f32 %v940, 0.7978846
        %v973 = vtanh.pop %v941
        %v974 = vtanh.pop %v942
        %v975 = vtanh.pop %v943
        %v976 = vtanh.pop %v944
        %v977 = vtanh.pop %v945
        %v978 = vtanh.pop %v946
        %v979 = vtanh.pop %v947
        %v980 = vtanh.pop %v948
        %v981 = vtanh.pop %v949
        %v982 = vtanh.pop %v950
        %v983 = vtanh.pop %v951
        %v984 = vtanh.pop %v952
        %v985 = vtanh.pop %v953
        %v986 = vtanh.pop %v954
        %v987 = vtanh.pop %v955
        %v988 = vtanh.pop %v956
        %v989 = vtanh.pop %v957
        %v990 = vtanh.pop %v958
        %v991 = vtanh.pop %v959
        %v992 = vtanh.pop %v960
        %v993 = vtanh.pop %v961
        %v994 = vtanh.pop %v962
        %v995 = vtanh.pop %v963
        %v996 = vtanh.pop %v964
        %v997 = vtanh.pop %v965
        %v998 = vtanh.pop %v966
        %v999 = vtanh.pop %v967
        %v1000 = vtanh.pop %v968
        %v1001 = vtanh.pop %v969
        %v1002 = vtanh.pop %v970
        %v1003 = vtanh.pop %v971
        %v1004 = vtanh.pop %v972
        %v1005 = vadd.f32 %v973, 1.0
        %v1006 = vadd.f32 %v974, 1.0
        %v1007 = vadd.f32 %v975, 1.0
        %v1008 = vadd.f32 %v976, 1.0
        %v1009 = vadd.f32 %v977, 1.0
        %v1010 = vadd.f32 %v978, 1.0
        %v1011 = vadd.f32 %v979, 1.0
        %v1012 = vadd.f32 %v980, 1.0
        %v1013 = vadd.f32 %v981, 1.0
        %v1014 = vadd.f32 %v982, 1.0
        %v1015 = vadd.f32 %v983, 1.0
        %v1016 = vadd.f32 %v984, 1.0
        %v1017 = vadd.f32 %v985, 1.0
        %v1018 = vadd.f32 %v986, 1.0
        %v1019 = vadd.f32 %v987, 1.0
        %v1020 = vadd.f32 %v988, 1.0
        %v1021 = vadd.f32 %v989, 1.0
        %v1022 = vadd.f32 %v990, 1.0
        %v1023 = vadd.f32 %v991, 1.0
        %v1024 = vadd.f32 %v992, 1.0
        %v1025 = vadd.f32 %v993, 1.0
        %v1026 = vadd.f32 %v994, 1.0
        %v1027 = vadd.f32 %v995, 1.0
        %v1028 = vadd.f32 %v996, 1.0
        %v1029 = vadd.f32 %v997, 1.0
        %v1030 = vadd.f32 %v998, 1.0
        %v1031 = vadd.f32 %v999, 1.0
        %v1032 = vadd.f32 %v1000, 1.0
        %v1033 = vadd.f32 %v1001, 1.0
        %v1034 = vadd.f32 %v1002, 1.0
        %v1035 = vadd.f32 %v1003, 1.0
        %v1036 = vadd.f32 %v1004, 1.0
        %v1037 = vmul.f32 %v781, %v1005
        %v1038 = vmul.f32 %v782, %v1006
        %v1039 = vmul.f32 %v783, %v1007
        %v1040 = vmul.f32 %v784, %v1008
        %v1041 = vmul.f32 %v785, %v1009
        %v1042 = vmul.f32 %v786, %v1010
        %v1043 = vmul.f32 %v787, %v1011
        %v1044 = vmul.f32 %v788, %v1012
        %v1045 = vmul.f32 %v789, %v1013
        %v1046 = vmul.f32 %v790, %v1014
        %v1047 = vmul.f32 %v791, %v1015
        %v1048 = vmul.f32 %v792, %v1016
        %v1049 = vmul.f32 %v793, %v1017
        %v1050 = vmul.f32 %v794, %v1018
        %v1051 = vmul.f32 %v795, %v1019
        %v1052 = vmul.f32 %v796, %v1020
        %v1053 = vmul.f32 %v797, %v1021
        %v1054 = vmul.f32 %v798, %v1022
        %v1055 = vmul.f32 %v799, %v1023
        %v1056 = vmul.f32 %v800, %v1024
        %v1057 = vmul.f32 %v801, %v1025
        %v1058 = vmul.f32 %v802, %v1026
        %v1059 = vmul.f32 %v803, %v1027
        %v1060 = vmul.f32 %v804, %v1028
        %v1061 = vmul.f32 %v805, %v1029
        %v1062 = vmul.f32 %v806, %v1030
        %v1063 = vmul.f32 %v807, %v1031
        %v1064 = vmul.f32 %v808, %v1032
        %v1065 = vmul.f32 %v809, %v1033
        %v1066 = vmul.f32 %v810, %v1034
        %v1067 = vmul.f32 %v811, %v1035
        %v1068 = vmul.f32 %v812, %v1036
        %v1069 = vpack.c.bf16 %v1039, %v1037
        %v1070 = vpack.c.bf16 %v1040, %v1038
        %v1071 = vpack.c.bf16 %v1043, %v1041
        %v1072 = vpack.c.bf16 %v1044, %v1042
        %v1073 = vpack.c.bf16 %v1047, %v1045
        %v1074 = vpack.c.bf16 %v1048, %v1046
        %v1075 = vpack.c.bf16 %v1051, %v1049
        %v1076 = vpack.c.bf16 %v1052, %v1050
        %v1077 = vpack.c.bf16 %v1055, %v1053
        %v1078 = vpack.c.bf16 %v1056, %v1054
        %v1079 = vpack.c.bf16 %v1059, %v1057
        %v1080 = vpack.c.bf16 %v1060, %v1058
        %v1081 = vpack.c.bf16 %v1063, %v1061
        %v1082 = vpack.c.bf16 %v1064, %v1062
        %v1083 = vpack.c.bf16 %v1067, %v1065
        %v1084 = vpack.c.bf16 %v1068, %v1066
        %v1085 = vld [vmem:[%s442] sm:$0xf]
        %v1086 = vld [vmem:[%s442 + $0x4] sm:$0xf]
        %v1087 = vld [vmem:[%s442 + $0x8] sm:$0xf]
        %v1088 = vld [vmem:[%s442 + $0xc] sm:$0xf]
        %v1089 = vld [vmem:[%s442 + $0x10] sm:$0xf]
        %v1090 = vld [vmem:[%s442 + $0x14] sm:$0xf]
        %v1091 = vld [vmem:[%s442 + $0x18] sm:$0xf]
        %v1092 = vld [vmem:[%s442 + $0x1c] sm:$0xf]
        %v1093 = vld [vmem:[%s442 + $0x20] sm:$0xf]
        %v1094 = vld [vmem:[%s442 + $0x24] sm:$0xf]
        %v1095 = vld [vmem:[%s442 + $0x28] sm:$0xf]
        %v1096 = vld [vmem:[%s442 + $0x2c] sm:$0xf]
        %v1097 = vld [vmem:[%s442 + $0x30] sm:$0xf]
        %v1098 = vld [vmem:[%s442 + $0x34] sm:$0xf]
        %v1099 = vld [vmem:[%s442 + $0x38] sm:$0xf]
        %v1100 = vld [vmem:[%s442 + $0x3c] sm:$0xf]
        %v1101 = vld [vmem:[%s442 + $0x40] sm:$0xf]
        %v1102 = vld [vmem:[%s442 + $0x44] sm:$0xf]
        %v1103 = vld [vmem:[%s442 + $0x48] sm:$0xf]
        %v1104 = vld [vmem:[%s442 + $0x4c] sm:$0xf]
        %v1105 = vld [vmem:[%s442 + $0x50] sm:$0xf]
        %v1106 = vld [vmem:[%s442 + $0x54] sm:$0xf]
        %v1107 = vld [vmem:[%s442 + $0x58] sm:$0xf]
        %v1108 = vld [vmem:[%s442 + $0x5c] sm:$0xf]
        %v1109 = vld [vmem:[%s442 + $0x60] sm:$0xf]
        %v1110 = vld [vmem:[%s442 + $0x64] sm:$0xf]
        %v1111 = vld [vmem:[%s442 + $0x68] sm:$0xf]
        %v1112 = vld [vmem:[%s442 + $0x6c] sm:$0xf]
        %v1113 = vld [vmem:[%s442 + $0x70] sm:$0xf]
        %v1114 = vld [vmem:[%s442 + $0x74] sm:$0xf]
        %v1115 = vld [vmem:[%s442 + $0x78] sm:$0xf]
        %v1116 = vld [vmem:[%s442 + $0x7c] sm:$0xf]
        %v1149 = vunpack.c.l.b16 %v1085
        %v1150 = vunpack.c.l.b16 %v1086
        %v1151 = vunpack.c.l.b16 %v1087
        %v1152 = vunpack.c.l.b16 %v1088
        %v1153 = vunpack.c.l.b16 %v1089
        %v1154 = vunpack.c.l.b16 %v1090
        %v1155 = vunpack.c.l.b16 %v1091
        %v1156 = vunpack.c.l.b16 %v1092
        %v1157 = vunpack.c.l.b16 %v1093
        %v1158 = vunpack.c.l.b16 %v1094
        %v1159 = vunpack.c.l.b16 %v1095
        %v1160 = vunpack.c.l.b16 %v1096
        %v1161 = vunpack.c.l.b16 %v1097
        %v1162 = vunpack.c.l.b16 %v1098
        %v1163 = vunpack.c.l.b16 %v1099
        %v1164 = vunpack.c.l.b16 %v1100
        %v1165 = vunpack.c.l.b16 %v1101
        %v1166 = vunpack.c.l.b16 %v1102
        %v1167 = vunpack.c.l.b16 %v1103
        %v1168 = vunpack.c.l.b16 %v1104
        %v1169 = vunpack.c.l.b16 %v1105
        %v1170 = vunpack.c.l.b16 %v1106
        %v1171 = vunpack.c.l.b16 %v1107
        %v1172 = vunpack.c.l.b16 %v1108
        %v1173 = vunpack.c.l.b16 %v1109
        %v1174 = vunpack.c.l.b16 %v1110
        %v1175 = vunpack.c.l.b16 %v1111
        %v1176 = vunpack.c.l.b16 %v1112
        %v1177 = vunpack.c.l.b16 %v1113
        %v1178 = vunpack.c.l.b16 %v1114
        %v1179 = vunpack.c.l.b16 %v1115
        %v1180 = vunpack.c.l.b16 %v1116
        %v1181 = vpack.c.b16 %v1150, %v1149
        %v1182 = vpack.c.b16 %v1152, %v1151
        %v1183 = vpack.c.b16 %v1154, %v1153
        %v1184 = vpack.c.b16 %v1156, %v1155
        %v1185 = vpack.c.b16 %v1158, %v1157
        %v1186 = vpack.c.b16 %v1160, %v1159
        %v1187 = vpack.c.b16 %v1162, %v1161
        %v1188 = vpack.c.b16 %v1164, %v1163
        %v1189 = vpack.c.b16 %v1166, %v1165
        %v1190 = vpack.c.b16 %v1168, %v1167
        %v1191 = vpack.c.b16 %v1170, %v1169
        %v1192 = vpack.c.b16 %v1172, %v1171
        %v1193 = vpack.c.b16 %v1174, %v1173
        %v1194 = vpack.c.b16 %v1176, %v1175
        %v1195 = vpack.c.b16 %v1178, %v1177
        %v1196 = vpack.c.b16 %v1180, %v1179
        %1213 = vmatpush.bf16.msra.mxu0 %v1188
        %1214 = vmatpush.bf16.msra.mxu0 %v1187
        %1215 = vmatpush.bf16.msra.mxu0 %v1186
        %1216 = vmatpush.bf16.msra.mxu0 %v1185
        %1217 = vmatpush.bf16.msra.mxu0 %v1184
        %1218 = vmatpush.bf16.msra.mxu0 %v1183
        %1219 = vmatpush.bf16.msra.mxu0 %v1182
        %1220 = vmatpush.bf16.msra.mxu0 %v1181
        %1221 = vmatmul.bf16.gmra.mxu0 %v1069
        %v1222 = vpop.f32.mrf.mxu0
        %v1223 = vadd.f32 0.0, %v1222
        %v1224 = vpop.f32.mrf.mxu0
        %v1225 = vadd.f32 0.0, %v1224
        %1226 = vmatmul.bf16.gmra.mxu0 %v1071
        %v1227 = vpop.f32.mrf.mxu0
        %v1228 = vadd.f32 0.0, %v1227
        %v1229 = vpop.f32.mrf.mxu0
        %v1230 = vadd.f32 0.0, %v1229
        %1231 = vmatmul.bf16.gmra.mxu0 %v1073
        %v1232 = vpop.f32.mrf.mxu0
        %v1233 = vadd.f32 0.0, %v1232
        %v1234 = vpop.f32.mrf.mxu0
        %v1235 = vadd.f32 0.0, %v1234
        %1236 = vmatmul.bf16.gmra.mxu0 %v1075
        %v1237 = vpop.f32.mrf.mxu0
        %v1238 = vadd.f32 0.0, %v1237
        %v1239 = vpop.f32.mrf.mxu0
        %v1240 = vadd.f32 0.0, %v1239
        %1241 = vmatmul.bf16.gmra.mxu0 %v1077
        %v1242 = vpop.f32.mrf.mxu0
        %v1243 = vadd.f32 0.0, %v1242
        %v1244 = vpop.f32.mrf.mxu0
        %v1245 = vadd.f32 0.0, %v1244
        %1246 = vmatmul.bf16.gmra.mxu0 %v1079
        %v1247 = vpop.f32.mrf.mxu0
        %v1248 = vadd.f32 0.0, %v1247
        %v1249 = vpop.f32.mrf.mxu0
        %v1250 = vadd.f32 0.0, %v1249
        %1251 = vmatmul.bf16.gmra.mxu0 %v1081
        %v1252 = vpop.f32.mrf.mxu0
        %v1253 = vadd.f32 0.0, %v1252
        %v1254 = vpop.f32.mrf.mxu0
        %v1255 = vadd.f32 0.0, %v1254
        %1256 = vmatmul.bf16.gmra.mxu0 %v1083
        %v1257 = vpop.f32.mrf.mxu0
        %v1258 = vadd.f32 0.0, %v1257
        %v1259 = vpop.f32.mrf.mxu0
        %v1260 = vadd.f32 0.0, %v1259
        %1261 = vdwg.mxu0
        %1262 = vmatpush.bf16.msra.mxu0 %v1196
        %1263 = vmatpush.bf16.msra.mxu0 %v1195
        %1264 = vmatpush.bf16.msra.mxu0 %v1194
        %1265 = vmatpush.bf16.msra.mxu0 %v1193
        %1266 = vmatpush.bf16.msra.mxu0 %v1192
        %1267 = vmatpush.bf16.msra.mxu0 %v1191
        %1268 = vmatpush.bf16.msra.mxu0 %v1190
        %1269 = vmatpush.bf16.msra.mxu0 %v1189
        %1270 = vmatmul.bf16.gmra.mxu0 %v1070
        %v1271 = vpop.f32.mrf.mxu0
        %v1272 = vadd.f32 %v1223, %v1271
        %v1273 = vpop.f32.mrf.mxu0
        %v1274 = vadd.f32 %v1225, %v1273
        %1275 = vmatmul.bf16.gmra.mxu0 %v1072
        %v1276 = vpop.f32.mrf.mxu0
        %v1277 = vadd.f32 %v1228, %v1276
        %v1278 = vpop.f32.mrf.mxu0
        %v1279 = vadd.f32 %v1230, %v1278
        %1280 = vmatmul.bf16.gmra.mxu0 %v1074
        %v1281 = vpop.f32.mrf.mxu0
        %v1282 = vadd.f32 %v1233, %v1281
        %v1283 = vpop.f32.mrf.mxu0
        %v1284 = vadd.f32 %v1235, %v1283
        %1285 = vmatmul.bf16.gmra.mxu0 %v1076
        %v1286 = vpop.f32.mrf.mxu0
        %v1287 = vadd.f32 %v1238, %v1286
        %v1288 = vpop.f32.mrf.mxu0
        %v1289 = vadd.f32 %v1240, %v1288
        %1290 = vmatmul.bf16.gmra.mxu0 %v1078
        %v1291 = vpop.f32.mrf.mxu0
        %v1292 = vadd.f32 %v1243, %v1291
        %v1293 = vpop.f32.mrf.mxu0
        %v1294 = vadd.f32 %v1245, %v1293
        %1295 = vmatmul.bf16.gmra.mxu0 %v1080
        %v1296 = vpop.f32.mrf.mxu0
        %v1297 = vadd.f32 %v1248, %v1296
        %v1298 = vpop.f32.mrf.mxu0
        %v1299 = vadd.f32 %v1250, %v1298
        %1300 = vmatmul.bf16.gmra.mxu0 %v1082
        %v1301 = vpop.f32.mrf.mxu0
        %v1302 = vadd.f32 %v1253, %v1301
        %v1303 = vpop.f32.mrf.mxu0
        %v1304 = vadd.f32 %v1255, %v1303
        %1305 = vmatmul.bf16.gmra.mxu0 %v1084
        %v1306 = vpop.f32.mrf.mxu0
        %v1307 = vadd.f32 %v1258, %v1306
        %v1308 = vpop.f32.mrf.mxu0
        %v1309 = vadd.f32 %v1260, %v1308
        %1310 = vdwg.mxu0
        %v1311 = vadd.f32 %v765, %v1272
        %v1312 = vadd.f32 %v766, %v1274
        %v1313 = vadd.f32 %v767, %v1277
        %v1314 = vadd.f32 %v768, %v1279
        %v1315 = vadd.f32 %v769, %v1282
        %v1316 = vadd.f32 %v770, %v1284
        %v1317 = vadd.f32 %v771, %v1287
        %v1318 = vadd.f32 %v772, %v1289
        %v1319 = vadd.f32 %v773, %v1292
        %v1320 = vadd.f32 %v774, %v1294
        %v1321 = vadd.f32 %v775, %v1297
        %v1322 = vadd.f32 %v776, %v1299
        %v1323 = vadd.f32 %v777, %v1302
        %v1324 = vadd.f32 %v778, %v1304
        %v1325 = vadd.f32 %v779, %v1307
        %v1326 = vadd.f32 %v780, %v1309
        %1327 = vst [vmem:[#allocation2] sm:$0xff] %v1311
        %1328 = vst [vmem:[#allocation2 + $0x8] sm:$0xff] %v1312
        %1329 = vst [vmem:[#allocation2 + $0x10] sm:$0xff] %v1313
        %1330 = vst [vmem:[#allocation2 + $0x18] sm:$0xff] %v1314
        %1331 = vst [vmem:[#allocation2 + $0x20] sm:$0xff] %v1315
        %1332 = vst [vmem:[#allocation2 + $0x28] sm:$0xff] %v1316
        %1333 = vst [vmem:[#allocation2 + $0x30] sm:$0xff] %v1317
        %1334 = vst [vmem:[#allocation2 + $0x38] sm:$0xff] %v1318
        %1335 = vst [vmem:[#allocation2 + $0x40] sm:$0xff] %v1319
        %1336 = vst [vmem:[#allocation2 + $0x48] sm:$0xff] %v1320
        %1337 = vst [vmem:[#allocation2 + $0x50] sm:$0xff] %v1321
        %1338 = vst [vmem:[#allocation2 + $0x58] sm:$0xff] %v1322
        %1339 = vst [vmem:[#allocation2 + $0x60] sm:$0xff] %v1323
        %1340 = vst [vmem:[#allocation2 + $0x68] sm:$0xff] %v1324
        %1341 = vst [vmem:[#allocation2 + $0x70] sm:$0xff] %v1325
        %1342 = vst [vmem:[#allocation2 + $0x78] sm:$0xff] %v1326
        %p1343 = scmp.eq.s32.totalorder %s25, 1
        // Predicated region
        $region87: #{flash_attention_block.5} parent=77 // pred_check
          %p1344 = pneg %p1343
        $region88: #{flash_attention_block.5} parent=77 // pred_check_branch
          %1346 = sbr.rel (%p1344) target = $region90
        $region89: #{flash_attention_block.5} parent=77 // pred_region
          %v1347 = vld [vmem:[#allocation2] sm:$0xff]
          %v1348 = vld [vmem:[#allocation2 + $0x8] sm:$0xff]
          %v1349 = vld [vmem:[#allocation2 + $0x10] sm:$0xff]
          %v1350 = vld [vmem:[#allocation2 + $0x18] sm:$0xff]
          %v1351 = vld [vmem:[#allocation2 + $0x20] sm:$0xff]
          %v1352 = vld [vmem:[#allocation2 + $0x28] sm:$0xff]
          %v1353 = vld [vmem:[#allocation2 + $0x30] sm:$0xff]
          %v1354 = vld [vmem:[#allocation2 + $0x38] sm:$0xff]
          %v1355 = vld [vmem:[#allocation2 + $0x40] sm:$0xff]
          %v1356 = vld [vmem:[#allocation2 + $0x48] sm:$0xff]
          %v1357 = vld [vmem:[#allocation2 + $0x50] sm:$0xff]
          %v1358 = vld [vmem:[#allocation2 + $0x58] sm:$0xff]
          %v1359 = vld [vmem:[#allocation2 + $0x60] sm:$0xff]
          %v1360 = vld [vmem:[#allocation2 + $0x68] sm:$0xff]
          %v1361 = vld [vmem:[#allocation2 + $0x70] sm:$0xff]
          %v1362 = vld [vmem:[#allocation2 + $0x78] sm:$0xff]
          %1363 = vst [vmem:[%s419] sm:$0xff] %v1347
          %1364 = vst [vmem:[%s419 + $0x8] sm:$0xff] %v1348
          %1365 = vst [vmem:[%s419 + $0x10] sm:$0xff] %v1349
          %1366 = vst [vmem:[%s419 + $0x18] sm:$0xff] %v1350
          %1367 = vst [vmem:[%s419 + $0x20] sm:$0xff] %v1351
          %1368 = vst [vmem:[%s419 + $0x28] sm:$0xff] %v1352
          %1369 = vst [vmem:[%s419 + $0x30] sm:$0xff] %v1353
          %1370 = vst [vmem:[%s419 + $0x38] sm:$0xff] %v1354
          %1371 = vst [vmem:[%s419 + $0x40] sm:$0xff] %v1355
          %1372 = vst [vmem:[%s419 + $0x48] sm:$0xff] %v1356
          %1373 = vst [vmem:[%s419 + $0x50] sm:$0xff] %v1357
          %1374 = vst [vmem:[%s419 + $0x58] sm:$0xff] %v1358
          %1375 = vst [vmem:[%s419 + $0x60] sm:$0xff] %v1359
          %1376 = vst [vmem:[%s419 + $0x68] sm:$0xff] %v1360
          %1377 = vst [vmem:[%s419 + $0x70] sm:$0xff] %v1361
          %1378 = vst [vmem:[%s419 + $0x78] sm:$0xff] %v1362
        $region90: #{flash_attention_block.5} parent=77 // pred_fallthru
          _
        %s1379 = sand.u32 %s191, 1
        %s1380 = scalar_lea.sflag [#allocation5], %s1379
        %s1381 = sand.u32 %s191, 1
        %s1382 = smul.addr %s1381, 128
        %s1383 = scalar_lea.vmem [#allocation4], %s1382
        // Predicated region
        $region91: #{flash_attention_block.5} parent=77 // pred_check
          %p1384 = pneg %p201
        $region92: #{flash_attention_block.5} parent=77 // pred_check_branch
          %1386 = sbr.rel (%p1384) target = $region94
        $region93: #{flash_attention_block.5} parent=77 // pred_region
          %s1387 = smul.u32 16, %s24
          %1389 = vsyncadd %s1380, 0
          %s1390 = smul.addr %s1387, 8
          %s1391 = scalar_lea.hbm %s6, %s1390
          %s1392 = sshll.u32 %s1383, 4
          %s1393 = int_to_ptr.vmem [resolvable:$true] %s1392
          %s1394 = sshll.u32 %s1391, 4
          %s1395 = int_to_ptr.hbm [resolvable:$true] %s1394
          %1400 = dma.vmem_to_hbm [thread:$0]  %s1393, 2048, %s1395, %s1380, 128, 128, 8
        $region94: #{flash_attention_block.5} parent=77 // pred_fallthru
          _
      $region78: #{flash_attention_block.5} parent=5 // pred_fallthru
        _
      %p1401 = scmp.le.s32.totalorder 2, %s15
      // Predicated region
      $region95: #{flash_attention_block.5} parent=5 // pred_check
        %p1402 = pneg %p1401
      $region96: #{flash_attention_block.5} parent=5 // pred_check_branch
        %1404 = sbr.rel (%p1402) target = $region98
      $region97: #{flash_attention_block.5} parent=5 // pred_region
        %s1405 = ssub.s32 %s15, 2
        // Predicated region
        $region99: #{flash_attention_block.5} parent=97 // pred_check
          %p1406 = pneg %p207
        $region100: #{flash_attention_block.5} parent=97 // pred_check_branch
          %1408 = sbr.rel (%p1406) target = $region102
        $region101: #{flash_attention_block.5} parent=97 // pred_region
          %s1409 = sand.u32 %s192, 1
          %s1410 = scalar_lea.sflag [#allocation5], %s1409
          %s1411 = sand.u32 %s192, 1
          %s1412 = smul.addr %s1411, 128
          %s1413 = scalar_lea.vmem [#allocation4], %s1412
          %1415 = dma.done %s1410, 2048
        $region102: #{flash_attention_block.5} parent=97 // pred_fallthru
          _
      $region98: #{flash_attention_block.5} parent=5 // pred_fallthru
        _
    $region6: #{flash_attention_block.5} parent=1 // loop_footer
      %s19 = sadd.s32 1, %s15
    $region7: #{flash_attention_block.5} parent=1 // loop_footer_branch
      %14 = sbr.rel target = $region3
    $region8: #{flash_attention_block.5} parent=1 // loop_exit
      _
    %1416 = vsyncpa [#allocation5], 1
    %s1417 = scalar_lea.sflag [#allocation5], 1
    %1418 = vsyncpa %s1417, 1

// kernel: flash_attention_block.4
$region0: #{flash_attention_block.4}
  #allocation0 [shape = 'u32[]', space=smem, size = 0x4, offset = 0x4, fixed_abs, tag = 'smem constant byte address 0x4 - core index']
  #allocation1 [shape = 'u32[72,128]{1,0:T(1,128)}', space=vmem, size = 0x9000, scoped, tag = 'internal scratch']
  %s0 = inlined_call_operand.vmem [shape: bf16[8,128,32], index: 0, kind: input, shape index: {}]
  %s1 = inlined_call_operand.vmem [shape: bf16[8,128,32], index: 1, kind: input, shape index: {}]
  %s2 = inlined_call_operand.vmem [shape: bf16[8,128,32], index: 2, kind: input, shape index: {}]
  %s3 = inlined_call_operand.vmem [shape: f32[256,128], index: 3, kind: input, shape index: {}]
  %s4 = inlined_call_operand.vmem [shape: bf16[4,32,128], index: 4, kind: input, shape index: {}]
  %s5 = inlined_call_operand.vmem [shape: f32[1,128], index: 5, kind: input, shape index: {}]
  %s6 = inlined_call_operand.vmem [shape: f32[1,128], index: 6, kind: input, shape index: {}]
  %s7 = inlined_call_operand.vmem [shape: f32[1,128], index: 7, kind: input, shape index: {}]
  %s8 = inlined_call_operand.vmem [shape: f32[256,128], index: 8, kind: output, shape index: {0}]
  %s9 = inlined_call_operand.vmem [shape: bf16[256,128], index: 9, kind: output, shape index: {1}]
  %10 = xla_tuple %s8, %s9
  %s11 = sld [smem:[#allocation0]]
  $region114: #{flash_attention_block.4} parent=0
    _
  %s13 = ssub.s32 1, %s11
  %s14 = scalar_select 0, %s13, %s11
  $region1: #{flash_attention_block.4} parent=0
    #allocation2 [shape = 'u8[131072]{0}', space=vmem, size = 0x20000, scoped, tag = 'input window, operand 0']
    loop: start=0, step=1, limit=6
    $region2: #{flash_attention_block.4} parent=1 // loop_pre_header
      _
    $region3: #{flash_attention_block.4} parent=1 // loop_header
      %s16 = sphi 0, %s20
      %p17 = scmp.ge.s32.totalorder %s16, 6
      %s23 = sphi 0, %s35
      %s24 = sphi 0, %s31
      %s25 = sphi 0, %s23
      %s26 = sphi 0, %s24
      %s27 = sphi 0, %s25
      %s28 = sphi 0, %s26
      %s40 = sphi 0, %s42
      %s43 = sphi 0, %s40
      %s44 = sphi 0, %s43
      %s60 = sphi 0, %s44
      %s66 = sphi 0, %s68
      %s69 = sphi 0, %s66
      %s70 = sphi 0, %s69
      %s86 = sphi 0, %s70
      %s92 = sphi 0, %s94
      %s95 = sphi 0, %s92
      %s96 = sphi 0, %s95
      %s112 = sphi 0, %s96
      %s122 = sphi 0, %s124
      %s125 = sphi 0, %s122
      %s126 = sphi 0, %s125
      %s142 = sphi 0, %s126
      %s146 = sphi 0, %s146
      %s148 = sphi 0, %s146
      %s149 = sphi 0, %s148
      %s163 = sphi 0, %s149
      %s167 = sphi 0, %s167
      %s169 = sphi 0, %s167
      %s170 = sphi 0, %s169
      %s184 = sphi 0, %s170
      %s188 = sphi 0, %s188
      %s190 = sphi 0, %s188
      %s191 = sphi 0, %s190
      %s205 = sphi 0, %s191
      %s209 = sphi 0, %s209
      %s211 = sphi 0, %s209
      %s212 = sphi 0, %s211
      %s226 = sphi 0, %s212
      %s236 = sphi 0, %s238
      %s239 = sphi 0, %s236
      %s240 = sphi 0, %s239
      %s256 = sphi 0, %s240
      %s266 = sphi 0, %s268
      %s269 = sphi 0, %s266
      %s270 = sphi 0, %s269
      %s286 = sphi 0, %s270
    $region4: #{flash_attention_block.4} parent=1 // loop_header_branch
      %19 = sbr.rel (%p17) target = $region8
    $region5: #{flash_attention_block.4} parent=1 // loop_body
      %s21 = ssub.s32 %s16, 1
      %s22 = ssub.s32 %s16, 2
      %s29 = sadd.s32 1, %s24
      %p30 = scmp.ge.s32.totalorder %s29, 2
      %s31 = scalar_select %p30, 0, %s29
      %s32 = sadd.s32 1, %s23
      %s33 = scalar_select %p30, %s32, %s23
      %p34 = scmp.ge.s32.totalorder %s33, 2
      %s35 = scalar_select %p34, 0, %s33
      %s36 = ssub.s32 %s23, %s35
      %s37 = ssub.s32 %s24, %s31
      %s38 = sor.u32 %s36, %s37
      %p39 = scmp.eq.s32.totalorder %s38, 0
      %s41 = sadd.s32 %s40, 1
      %s42 = scalar_select %p39, %s40, %s41
      %p45 = pneg %p39
      %p46 = scmp.eq.s32.totalorder %s16, 3
      %p47 = por %p45, %p46
      %p48 = scmp.ne.s32.totalorder %s40, %s43
      %p49 = scmp.eq.s32.totalorder %s16, 0
      %p50 = por %p48, %p49
      %p51 = scmp.ne.s32.totalorder %s40, %s43
      %p52 = scmp.eq.s32.totalorder %s21, 3
      %p53 = por %p51, %p52
      %p54 = scmp.ne.s32.totalorder %s43, %s44
      %p55 = scmp.eq.s32.totalorder %s21, 0
      %p56 = por %p54, %p55
      %p57 = scmp.ne.s32.totalorder %s43, %s44
      %p58 = scmp.eq.s32.totalorder %s22, 3
      %p59 = por %p57, %p58
      %p61 = scmp.ne.s32.totalorder %s44, %s60
      %p62 = scmp.eq.s32.totalorder %s22, 0
      %p63 = por %p61, %p62
      %s64 = ssub.s32 %s23, %s35
      %p65 = scmp.eq.s32.totalorder %s64, 0
      %s67 = sadd.s32 %s66, 1
      %s68 = scalar_select %p65, %s66, %s67
      %p71 = pneg %p65
      %p72 = scmp.eq.s32.totalorder %s16, 3
      %p73 = por %p71, %p72
      %p74 = scmp.ne.s32.totalorder %s66, %s69
      %p75 = scmp.eq.s32.totalorder %s16, 0
      %p76 = por %p74, %p75
      %p77 = scmp.ne.s32.totalorder %s66, %s69
      %p78 = scmp.eq.s32.totalorder %s21, 3
      %p79 = por %p77, %p78
      %p80 = scmp.ne.s32.totalorder %s69, %s70
      %p81 = scmp.eq.s32.totalorder %s21, 0
      %p82 = por %p80, %p81
      %p83 = scmp.ne.s32.totalorder %s69, %s70
      %p84 = scmp.eq.s32.totalorder %s22, 3
      %p85 = por %p83, %p84
      %p87 = scmp.ne.s32.totalorder %s70, %s86
      %p88 = scmp.eq.s32.totalorder %s22, 0
      %p89 = por %p87, %p88
      %s90 = ssub.s32 %s23, %s35
      %p91 = scmp.eq.s32.totalorder %s90, 0
      %s93 = sadd.s32 %s92, 1
      %s94 = scalar_select %p91, %s92, %s93
      %p97 = pneg %p91
      %p98 = scmp.eq.s32.totalorder %s16, 3
      %p99 = por %p97, %p98
      %p100 = scmp.ne.s32.totalorder %s92, %s95
      %p101 = scmp.eq.s32.totalorder %s16, 0
      %p102 = por %p100, %p101
      %p103 = scmp.ne.s32.totalorder %s92, %s95
      %p104 = scmp.eq.s32.totalorder %s21, 3
      %p105 = por %p103, %p104
      %p106 = scmp.ne.s32.totalorder %s95, %s96
      %p107 = scmp.eq.s32.totalorder %s21, 0
      %p108 = por %p106, %p107
      %p109 = scmp.ne.s32.totalorder %s95, %s96
      %p110 = scmp.eq.s32.totalorder %s22, 3
      %p111 = por %p109, %p110
      %p113 = scmp.ne.s32.totalorder %s96, %s112
      %p114 = scmp.eq.s32.totalorder %s22, 0
      %p115 = por %p113, %p114
      %s116 = smul.u32 %s23, 2
      %s117 = sadd.s32 %s116, %s24
      %s118 = smul.u32 %s35, 2
      %s119 = sadd.s32 %s118, %s31
      %s120 = ssub.s32 %s117, %s119
      %p121 = scmp.eq.s32.totalorder %s120, 0
      %s123 = sadd.s32 %s122, 1
      %s124 = scalar_select %p121, %s122, %s123
      %p127 = pneg %p121
      %p128 = scmp.eq.s32.totalorder %s16, 3
      %p129 = por %p127, %p128
      %p130 = scmp.ne.s32.totalorder %s122, %s125
      %p131 = scmp.eq.s32.totalorder %s16, 0
      %p132 = por %p130, %p131
      %p133 = scmp.ne.s32.totalorder %s122, %s125
      %p134 = scmp.eq.s32.totalorder %s21, 3
      %p135 = por %p133, %p134
      %p136 = scmp.ne.s32.totalorder %s125, %s126
      %p137 = scmp.eq.s32.totalorder %s21, 0
      %p138 = por %p136, %p137
      %p139 = scmp.ne.s32.totalorder %s125, %s126
      %p140 = scmp.eq.s32.totalorder %s22, 3
      %p141 = por %p139, %p140
      %p143 = scmp.ne.s32.totalorder %s126, %s142
      %p144 = scmp.eq.s32.totalorder %s22, 0
      %p145 = por %p143, %p144
      %s147 = sadd.s32 %s146, 1
      %p150 = scmp.eq.s32.totalorder %s16, 3
      %p151 = scmp.ne.s32.totalorder %s146, %s148
      %p152 = scmp.eq.s32.totalorder %s16, 0
      %p153 = por %p151, %p152
      %p154 = scmp.ne.s32.totalorder %s146, %s148
      %p155 = scmp.eq.s32.totalorder %s21, 3
      %p156 = por %p154, %p155
      %p157 = scmp.ne.s32.totalorder %s148, %s149
      %p158 = scmp.eq.s32.totalorder %s21, 0
      %p159 = por %p157, %p158
      %p160 = scmp.ne.s32.totalorder %s148, %s149
      %p161 = scmp.eq.s32.totalorder %s22, 3
      %p162 = por %p160, %p161
      %p164 = scmp.ne.s32.totalorder %s149, %s163
      %p165 = scmp.eq.s32.totalorder %s22, 0
      %p166 = por %p164, %p165
      %s168 = sadd.s32 %s167, 1
      %p171 = scmp.eq.s32.totalorder %s16, 3
      %p172 = scmp.ne.s32.totalorder %s167, %s169
      %p173 = scmp.eq.s32.totalorder %s16, 0
      %p174 = por %p172, %p173
      %p175 = scmp.ne.s32.totalorder %s167, %s169
      %p176 = scmp.eq.s32.totalorder %s21, 3
      %p177 = por %p175, %p176
      %p178 = scmp.ne.s32.totalorder %s169, %s170
      %p179 = scmp.eq.s32.totalorder %s21, 0
      %p180 = por %p178, %p179
      %p181 = scmp.ne.s32.totalorder %s169, %s170
      %p182 = scmp.eq.s32.totalorder %s22, 3
      %p183 = por %p181, %p182
      %p185 = scmp.ne.s32.totalorder %s170, %s184
      %p186 = scmp.eq.s32.totalorder %s22, 0
      %p187 = por %p185, %p186
      %s189 = sadd.s32 %s188, 1
      %p192 = scmp.eq.s32.totalorder %s16, 3
      %p193 = scmp.ne.s32.totalorder %s188, %s190
      %p194 = scmp.eq.s32.totalorder %s16, 0
      %p195 = por %p193, %p194
      %p196 = scmp.ne.s32.totalorder %s188, %s190
      %p197 = scmp.eq.s32.totalorder %s21, 3
      %p198 = por %p196, %p197
      %p199 = scmp.ne.s32.totalorder %s190, %s191
      %p200 = scmp.eq.s32.totalorder %s21, 0
      %p201 = por %p199, %p200
      %p202 = scmp.ne.s32.totalorder %s190, %s191
      %p203 = scmp.eq.s32.totalorder %s22, 3
      %p204 = por %p202, %p203
      %p206 = scmp.ne.s32.totalorder %s191, %s205
      %p207 = scmp.eq.s32.totalorder %s22, 0
      %p208 = por %p206, %p207
      %s210 = sadd.s32 %s209, 1
      %p213 = scmp.eq.s32.totalorder %s16, 3
      %p214 = scmp.ne.s32.totalorder %s209, %s211
      %p215 = scmp.eq.s32.totalorder %s16, 0
      %p216 = por %p214, %p215
      %p217 = scmp.ne.s32.totalorder %s209, %s211
      %p218 = scmp.eq.s32.totalorder %s21, 3
      %p219 = por %p217, %p218
      %p220 = scmp.ne.s32.totalorder %s211, %s212
      %p221 = scmp.eq.s32.totalorder %s21, 0
      %p222 = por %p220, %p221
      %p223 = scmp.ne.s32.totalorder %s211, %s212
      %p224 = scmp.eq.s32.totalorder %s22, 3
      %p225 = por %p223, %p224
      %p227 = scmp.ne.s32.totalorder %s212, %s226
      %p228 = scmp.eq.s32.totalorder %s22, 0
      %p229 = por %p227, %p228
      %s230 = smul.u32 %s23, 2
      %s231 = sadd.s32 %s230, %s24
      %s232 = smul.u32 %s35, 2
      %s233 = sadd.s32 %s232, %s31
      %s234 = ssub.s32 %s231, %s233
      %p235 = scmp.eq.s32.totalorder %s234, 0
      %s237 = sadd.s32 %s236, 1
      %s238 = scalar_select %p235, %s236, %s237
      %p241 = pneg %p235
      %p242 = scmp.eq.s32.totalorder %s16, 3
      %p243 = por %p241, %p242
      %p244 = scmp.ne.s32.totalorder %s236, %s239
      %p245 = scmp.eq.s32.totalorder %s16, 0
      %p246 = por %p244, %p245
      %p247 = scmp.ne.s32.totalorder %s236, %s239
      %p248 = scmp.eq.s32.totalorder %s21, 3
      %p249 = por %p247, %p248
      %p250 = scmp.ne.s32.totalorder %s239, %s240
      %p251 = scmp.eq.s32.totalorder %s21, 0
      %p252 = por %p250, %p251
      %p253 = scmp.ne.s32.totalorder %s239, %s240
      %p254 = scmp.eq.s32.totalorder %s22, 3
      %p255 = por %p253, %p254
      %p257 = scmp.ne.s32.totalorder %s240, %s256
      %p258 = scmp.eq.s32.totalorder %s22, 0
      %p259 = por %p257, %p258
      %s260 = smul.u32 %s23, 2
      %s261 = sadd.s32 %s260, %s24
      %s262 = smul.u32 %s35, 2
      %s263 = sadd.s32 %s262, %s31
      %s264 = ssub.s32 %s261, %s263
      %p265 = scmp.eq.s32.totalorder %s264, 0
      %s267 = sadd.s32 %s266, 1
      %s268 = scalar_select %p265, %s266, %s267
      %p271 = pneg %p265
      %p272 = scmp.eq.s32.totalorder %s16, 3
      %p273 = por %p271, %p272
      %p274 = scmp.ne.s32.totalorder %s266, %s269
      %p275 = scmp.eq.s32.totalorder %s16, 0
      %p276 = por %p274, %p275
      %p277 = scmp.ne.s32.totalorder %s266, %s269
      %p278 = scmp.eq.s32.totalorder %s21, 3
      %p279 = por %p277, %p278
      %p280 = scmp.ne.s32.totalorder %s269, %s270
      %p281 = scmp.eq.s32.totalorder %s21, 0
      %p282 = por %p280, %p281
      %p283 = scmp.ne.s32.totalorder %s269, %s270
      %p284 = scmp.eq.s32.totalorder %s22, 3
      %p285 = por %p283, %p284
      %p287 = scmp.ne.s32.totalorder %s270, %s286
      %p288 = scmp.eq.s32.totalorder %s22, 0
      %p289 = por %p287, %p288
      %p290 = scmp.le.s32.totalorder 1, %s16
      %p291 = scmp.lt.s32.totalorder %s16, 5
      %p292 = pnand %p290, %p291
      %p293 = pneg %p292
      // Predicated region
      $region9: #{flash_attention_block.4} parent=5 // pred_check
        _
      $region10: #{flash_attention_block.4} parent=5 // pred_check_branch
        %295 = sbr.rel (%p292) target = $region12
      $region11: #{flash_attention_block.4} parent=5 // pred_region
        %s296 = ssub.s32 %s16, 1
        // Predicated region
        $region13: #{flash_attention_block.4} parent=11 // pred_check
          %p297 = pneg %p159
        $region14: #{flash_attention_block.4} parent=11 // pred_check_branch
          %299 = sbr.rel (%p297) target = $region16
        $region15: #{flash_attention_block.4} parent=11 // pred_region
          _
        $region16: #{flash_attention_block.4} parent=11 // pred_fallthru
          _
        // Predicated region
        $region17: #{flash_attention_block.4} parent=11 // pred_check
          %p300 = pneg %p180
        $region18: #{flash_attention_block.4} parent=11 // pred_check_branch
          %302 = sbr.rel (%p300) target = $region20
        $region19: #{flash_attention_block.4} parent=11 // pred_region
          _
        $region20: #{flash_attention_block.4} parent=11 // pred_fallthru
          _
        // Predicated region
        $region21: #{flash_attention_block.4} parent=11 // pred_check
          %p303 = pneg %p201
        $region22: #{flash_attention_block.4} parent=11 // pred_check_branch
          %305 = sbr.rel (%p303) target = $region24
        $region23: #{flash_attention_block.4} parent=11 // pred_region
          _
        $region24: #{flash_attention_block.4} parent=11 // pred_fallthru
          _
        // Predicated region
        $region25: #{flash_attention_block.4} parent=11 // pred_check
          %p306 = pneg %p222
        $region26: #{flash_attention_block.4} parent=11 // pred_check_branch
          %308 = sbr.rel (%p306) target = $region28
        $region27: #{flash_attention_block.4} parent=11 // pred_region
          _
        $region28: #{flash_attention_block.4} parent=11 // pred_fallthru
          _
      $region12: #{flash_attention_block.4} parent=5 // pred_fallthru
        _
      %p309 = scmp.lt.s32.totalorder %s16, 4
      // Predicated region
      $region29: #{flash_attention_block.4} parent=5 // pred_check
        %p310 = pneg %p309
      $region30: #{flash_attention_block.4} parent=5 // pred_check_branch
        %312 = sbr.rel (%p310) target = $region32
      $region31: #{flash_attention_block.4} parent=5 // pred_region
        // Predicated region
        $region33: #{flash_attention_block.4} parent=31 // pred_check
          %p313 = pneg %p50
        $region34: #{flash_attention_block.4} parent=31 // pred_check_branch
          %315 = sbr.rel (%p313) target = $region36
        $region35: #{flash_attention_block.4} parent=31 // pred_region
          %s316 = sand.u32 %s40, 1
          %s317 = sand.u32 %s40, 1
          %s318 = smul.addr %s317, 128
          %s319 = scalar_lea.vmem [#allocation2], %s318
          %s320 = smul.u32 4, %s23
          %s321 = smul.u32 8, %s24
          %s322 = smul.addr %s320, 16
          %s323 = sadd.s32 %s321, %s322
          %s324 = smul.addr %s323, 4
          %s325 = scalar_lea.vmem %s0, %s324
          // Predicated region
          $region37: #{flash_attention_block.4} parent=35 // pred_check
            _
          $region38: #{flash_attention_block.4} parent=35 // pred_check_branch
            %327 = sbr.rel (0) target = $region40
          $region39: #{flash_attention_block.4} parent=35 // pred_region
            // Predicated region
            $region41: #{flash_attention_block.4} parent=39 // pred_check
              _
            $region42: #{flash_attention_block.4} parent=39 // pred_check_branch
              %329 = sbr.rel target = $region44
            $region43: #{flash_attention_block.4} parent=39 // pred_region
              // Predicated region
              $region56: #{flash_attention_block.4} parent=43 // pred_check
                _
              $region57: #{flash_attention_block.4} parent=43 // pred_check_branch
                %407 = sbr.rel (0) target = $region59
              $region58: #{flash_attention_block.4} parent=43 // pred_region
                loop: start=0, step=1, limit=1
                $region60: #{flash_attention_block.4} parent=58 // loop_pre_header
                  _
                $region61: #{flash_attention_block.4} parent=58 // loop_header
                  %s409 = sphi 0, %s413
                  %p410 = scmp.ge.s32.totalorder %s409, 1
                  %s414 = sphi %s325, %s325
                  %s415 = sphi %s319, %s319
                $region62: #{flash_attention_block.4} parent=58 // loop_header_branch
                  %412 = sbr.rel (%p410) target = $region66
                $region63: #{flash_attention_block.4} parent=58 // loop_body
                  _
                $region64: #{flash_attention_block.4} parent=58 // loop_footer
                  %s413 = sadd.s32 1, %s409
                $region65: #{flash_attention_block.4} parent=58 // loop_footer_branch
                  %408 = sbr.rel target = $region61
                $region66: #{flash_attention_block.4} parent=58 // loop_exit
                  _
                %s417 = ssub.s32 16, 1
                loop: start=0, step=1, limit=1
                $region67: #{flash_attention_block.4} parent=58 // loop_pre_header
                  _
                $region68: #{flash_attention_block.4} parent=58 // loop_header
                  %s419 = sphi 0, %s423
                  %p420 = scmp.ge.s32.totalorder %s419, 1
                  %s424 = sphi %s325, %s325
                  %s425 = sphi %s319, %s319
                $region69: #{flash_attention_block.4} parent=58 // loop_header_branch
                  %422 = sbr.rel (%p420) target = $region73
                $region70: #{flash_attention_block.4} parent=58 // loop_body
                  %v426 = vld [vmem:[%s424] sm:%s417]
                  %427 = vst [vmem:[%s425] sm:%s417] %v426
                  %v428 = vld [vmem:[%s424 + $0x4] sm:%s417]
                  %429 = vst [vmem:[%s425 + $0x4] sm:%s417] %v428
                  %v430 = vld [vmem:[%s424 + $0x8] sm:%s417]
                  %431 = vst [vmem:[%s425 + $0x8] sm:%s417] %v430
                  %v432 = vld [vmem:[%s424 + $0xc] sm:%s417]
                  %433 = vst [vmem:[%s425 + $0xc] sm:%s417] %v432
                  %v434 = vld [vmem:[%s424 + $0x10] sm:%s417]
                  %435 = vst [vmem:[%s425 + $0x10] sm:%s417] %v434
                  %v436 = vld [vmem:[%s424 + $0x14] sm:%s417]
                  %437 = vst [vmem:[%s425 + $0x14] sm:%s417] %v436
                  %v438 = vld [vmem:[%s424 + $0x18] sm:%s417]
                  %439 = vst [vmem:[%s425 + $0x18] sm:%s417] %v438
                  %v440 = vld [vmem:[%s424 + $0x1c] sm:%s417]
                  %441 = vst [vmem:[%s425 + $0x1c] sm:%s417] %v440
                  %v442 = vld [vmem:[%s424 + $0x40] sm:%s417]
                  %443 = vst [vmem:[%s425 + $0x20] sm:%s417] %v442
                  %v444 = vld [vmem:[%s424 + $0x44] sm:%s417]
                  %445 = vst [vmem:[%s425 + $0x24] sm:%s417] %v444
                  %v446 = vld [vmem:[%s424 + $0x48] sm:%s417]
                  %447 = vst [vmem:[%s425 + $0x28] sm:%s417] %v446
                  %v448 = vld [vmem:[%s424 + $0x4c] sm:%s417]
                  %449 = vst [vmem:[%s425 + $0x2c] sm:%s417] %v448
                  %v450 = vld [vmem:[%s424 + $0x50] sm:%s417]
                  %451 = vst [vmem:[%s425 + $0x30] sm:%s417] %v450
                  %v452 = vld [vmem:[%s424 + $0x54] sm:%s417]
                  %453 = vst [vmem:[%s425 + $0x34] sm:%s417] %v452
                  %v454 = vld [vmem:[%s424 + $0x58] sm:%s417]
                  %455 = vst [vmem:[%s425 + $0x38] sm:%s417] %v454
                  %v456 = vld [vmem:[%s424 + $0x5c] sm:%s417]
                  %457 = vst [vmem:[%s425 + $0x3c] sm:%s417] %v456
                  %v458 = vld [vmem:[%s424 + $0x80] sm:%s417]
                  %459 = vst [vmem:[%s425 + $0x40] sm:%s417] %v458
                  %v460 = vld [vmem:[%s424 + $0x84] sm:%s417]
                  %461 = vst [vmem:[%s425 + $0x44] sm:%s417] %v460
                  %v462 = vld [vmem:[%s424 + $0x88] sm:%s417]
                  %463 = vst [vmem:[%s425 + $0x48] sm:%s417] %v462
                  %v464 = vld [vmem:[%s424 + $0x8c] sm:%s417]
                  %465 = vst [vmem:[%s425 + $0x4c] sm:%s417] %v464
                  %v466 = vld [vmem:[%s424 + $0x90] sm:%s417]
                  %467 = vst [vmem:[%s425 + $0x50] sm:%s417] %v466
                  %v468 = vld [vmem:[%s424 + $0x94] sm:%s417]
                  %469 = vst [vmem:[%s425 + $0x54] sm:%s417] %v468
                  %v470 = vld [vmem:[%s424 + $0x98] sm:%s417]
                  %471 = vst [vmem:[%s425 + $0x58] sm:%s417] %v470
                  %v472 = vld [vmem:[%s424 + $0x9c] sm:%s417]
                  %473 = vst [vmem:[%s425 + $0x5c] sm:%s417] %v472
                  %v474 = vld [vmem:[%s424 + $0xc0] sm:%s417]
                  %475 = vst [vmem:[%s425 + $0x60] sm:%s417] %v474
                  %v476 = vld [vmem:[%s424 + $0xc4] sm:%s417]
                  %477 = vst [vmem:[%s425 + $0x64] sm:%s417] %v476
                  %v478 = vld [vmem:[%s424 + $0xc8] sm:%s417]
                  %479 = vst [vmem:[%s425 + $0x68] sm:%s417] %v478
                  %v480 = vld [vmem:[%s424 + $0xcc] sm:%s417]
                  %481 = vst [vmem:[%s425 + $0x6c] sm:%s417] %v480
                  %v482 = vld [vmem:[%s424 + $0xd0] sm:%s417]
                  %483 = vst [vmem:[%s425 + $0x70] sm:%s417] %v482
                  %v484 = vld [vmem:[%s424 + $0xd4] sm:%s417]
                  %485 = vst [vmem:[%s425 + $0x74] sm:%s417] %v484
                  %v486 = vld [vmem:[%s424 + $0xd8] sm:%s417]
                  %487 = vst [vmem:[%s425 + $0x78] sm:%s417] %v486
                  %v488 = vld [vmem:[%s424 + $0xdc] sm:%s417]
                  %489 = vst [vmem:[%s425 + $0x7c] sm:%s417] %v488
                $region71: #{flash_attention_block.4} parent=58 // loop_footer
                  %s423 = sadd.s32 1, %s419
                $region72: #{flash_attention_block.4} parent=58 // loop_footer_branch
                  %418 = sbr.rel target = $region68
                $region73: #{flash_attention_block.4} parent=58 // loop_exit
                  _
              $region59: #{flash_attention_block.4} parent=43 // pred_fallthru
                _
            $region44: #{flash_attention_block.4} parent=39 // pred_fallthru
              _
            // Predicated region
            $region45: #{flash_attention_block.4} parent=39 // pred_check
              _
            $region46: #{flash_attention_block.4} parent=39 // pred_check_branch
              %331 = sbr.rel (0) target = $region48
            $region47: #{flash_attention_block.4} parent=39 // pred_region
              %s333 = ssub.s32 16, 1
              loop: start=0, step=1, limit=1
              $region49: #{flash_attention_block.4} parent=47 // loop_pre_header
                _
              $region50: #{flash_attention_block.4} parent=47 // loop_header
                %s335 = sphi 0, %s339
                %p336 = scmp.ge.s32.totalorder %s335, 1
                %s340 = sphi %s325, %s325
                %s341 = sphi %s319, %s319
              $region51: #{flash_attention_block.4} parent=47 // loop_header_branch
                %338 = sbr.rel (%p336) target = $region55
              $region52: #{flash_attention_block.4} parent=47 // loop_body
                %v342 = vld [vmem:[%s340] sm:%s333]
                %343 = vst [vmem:[%s341] sm:%s333] %v342
                %v344 = vld [vmem:[%s340 + $0x4] sm:%s333]
                %345 = vst [vmem:[%s341 + $0x4] sm:%s333] %v344
                %v346 = vld [vmem:[%s340 + $0x8] sm:%s333]
                %347 = vst [vmem:[%s341 + $0x8] sm:%s333] %v346
                %v348 = vld [vmem:[%s340 + $0xc] sm:%s333]
                %349 = vst [vmem:[%s341 + $0xc] sm:%s333] %v348
                %v350 = vld [vmem:[%s340 + $0x10] sm:%s333]
                %351 = vst [vmem:[%s341 + $0x10] sm:%s333] %v350
                %v352 = vld [vmem:[%s340 + $0x14] sm:%s333]
                %353 = vst [vmem:[%s341 + $0x14] sm:%s333] %v352
                %v354 = vld [vmem:[%s340 + $0x18] sm:%s333]
                %355 = vst [vmem:[%s341 + $0x18] sm:%s333] %v354
                %v356 = vld [vmem:[%s340 + $0x1c] sm:%s333]
                %357 = vst [vmem:[%s341 + $0x1c] sm:%s333] %v356
                %v358 = vld [vmem:[%s340 + $0x40] sm:%s333]
                %359 = vst [vmem:[%s341 + $0x20] sm:%s333] %v358
                %v360 = vld [vmem:[%s340 + $0x44] sm:%s333]
                %361 = vst [vmem:[%s341 + $0x24] sm:%s333] %v360
                %v362 = vld [vmem:[%s340 + $0x48] sm:%s333]
                %363 = vst [vmem:[%s341 + $0x28] sm:%s333] %v362
                %v364 = vld [vmem:[%s340 + $0x4c] sm:%s333]
                %365 = vst [vmem:[%s341 + $0x2c] sm:%s333] %v364
                %v366 = vld [vmem:[%s340 + $0x50] sm:%s333]
                %367 = vst [vmem:[%s341 + $0x30] sm:%s333] %v366
                %v368 = vld [vmem:[%s340 + $0x54] sm:%s333]
                %369 = vst [vmem:[%s341 + $0x34] sm:%s333] %v368
                %v370 = vld [vmem:[%s340 + $0x58] sm:%s333]
                %371 = vst [vmem:[%s341 + $0x38] sm:%s333] %v370
                %v372 = vld [vmem:[%s340 + $0x5c] sm:%s333]
                %373 = vst [vmem:[%s341 + $0x3c] sm:%s333] %v372
                %v374 = vld [vmem:[%s340 + $0x80] sm:%s333]
                %375 = vst [vmem:[%s341 + $0x40] sm:%s333] %v374
                %v376 = vld [vmem:[%s340 + $0x84] sm:%s333]
                %377 = vst [vmem:[%s341 + $0x44] sm:%s333] %v376
                %v378 = vld [vmem:[%s340 + $0x88] sm:%s333]
                %379 = vst [vmem:[%s341 + $0x48] sm:%s333] %v378
                %v380 = vld [vmem:[%s340 + $0x8c] sm:%s333]
                %381 = vst [vmem:[%s341 + $0x4c] sm:%s333] %v380
                %v382 = vld [vmem:[%s340 + $0x90] sm:%s333]
                %383 = vst [vmem:[%s341 + $0x50] sm:%s333] %v382
                %v384 = vld [vmem:[%s340 + $0x94] sm:%s333]
                %385 = vst [vmem:[%s341 + $0x54] sm:%s333] %v384
                %v386 = vld [vmem:[%s340 + $0x98] sm:%s333]
                %387 = vst [vmem:[%s341 + $0x58] sm:%s333] %v386
                %v388 = vld [vmem:[%s340 + $0x9c] sm:%s333]
                %389 = vst [vmem:[%s341 + $0x5c] sm:%s333] %v388
                %v390 = vld [vmem:[%s340 + $0xc0] sm:%s333]
                %391 = vst [vmem:[%s341 + $0x60] sm:%s333] %v390
                %v392 = vld [vmem:[%s340 + $0xc4] sm:%s333]
                %393 = vst [vmem:[%s341 + $0x64] sm:%s333] %v392
                %v394 = vld [vmem:[%s340 + $0xc8] sm:%s333]
                %395 = vst [vmem:[%s341 + $0x68] sm:%s333] %v394
                %v396 = vld [vmem:[%s340 + $0xcc] sm:%s333]
                %397 = vst [vmem:[%s341 + $0x6c] sm:%s333] %v396
                %v398 = vld [vmem:[%s340 + $0xd0] sm:%s333]
                %399 = vst [vmem:[%s341 + $0x70] sm:%s333] %v398
                %v400 = vld [vmem:[%s340 + $0xd4] sm:%s333]
                %401 = vst [vmem:[%s341 + $0x74] sm:%s333] %v400
                %v402 = vld [vmem:[%s340 + $0xd8] sm:%s333]
                %403 = vst [vmem:[%s341 + $0x78] sm:%s333] %v402
                %v404 = vld [vmem:[%s340 + $0xdc] sm:%s333]
                %405 = vst [vmem:[%s341 + $0x7c] sm:%s333] %v404
              $region53: #{flash_attention_block.4} parent=47 // loop_footer
                %s339 = sadd.s32 1, %s335
              $region54: #{flash_attention_block.4} parent=47 // loop_footer_branch
                %334 = sbr.rel target = $region50
              $region55: #{flash_attention_block.4} parent=47 // loop_exit
                _
            $region48: #{flash_attention_block.4} parent=39 // pred_fallthru
              _
          $region40: #{flash_attention_block.4} parent=35 // pred_fallthru
            _
          %490 = vnop
        $region36: #{flash_attention_block.4} parent=31 // pred_fallthru
          _
        // Predicated region
        $region74: #{flash_attention_block.4} parent=31 // pred_check
          %p491 = pneg %p76
        $region75: #{flash_attention_block.4} parent=31 // pred_check_branch
          %493 = sbr.rel (%p491) target = $region77
        $region76: #{flash_attention_block.4} parent=31 // pred_region
          %s494 = smul.u32 4, %s23
          %p495 = scmp.lt.s32.totalorder %s494, 7
          %s496 = scalar_select %p495, %s494, 7
          %s497 = smul.addr %s496, 16
          %s498 = smul.addr %s497, 4
          %s499 = scalar_lea.vmem %s1, %s498
          %s500 = smul.u32 4, %s23
        $region77: #{flash_attention_block.4} parent=31 // pred_fallthru
          _
        // Predicated region
        $region78: #{flash_attention_block.4} parent=31 // pred_check
          %p501 = pneg %p102
        $region79: #{flash_attention_block.4} parent=31 // pred_check_branch
          %503 = sbr.rel (%p501) target = $region81
        $region80: #{flash_attention_block.4} parent=31 // pred_region
          %s504 = smul.u32 4, %s23
          %p505 = scmp.lt.s32.totalorder %s504, 7
          %s506 = scalar_select %p505, %s504, 7
          %s507 = smul.addr %s506, 16
          %s508 = smul.addr %s507, 4
          %s509 = scalar_lea.vmem %s2, %s508
          %s510 = smul.u32 4, %s23
        $region81: #{flash_attention_block.4} parent=31 // pred_fallthru
          _
        // Predicated region
        $region82: #{flash_attention_block.4} parent=31 // pred_check
          %p511 = pneg %p132
        $region83: #{flash_attention_block.4} parent=31 // pred_check_branch
          %513 = sbr.rel (%p511) target = $region85
        $region84: #{flash_attention_block.4} parent=31 // pred_region
          %s514 = smul.u32 %s23, 2
          %s515 = sadd.s32 %s514, %s24
          %s516 = smul.u32 8, %s515
          %p517 = scmp.lt.s32.totalorder %s516, 31
          %s518 = scalar_select %p517, %s516, 31
          %s519 = smul.addr %s518, 8
          %s520 = scalar_lea.vmem %s3, %s519
          %s521 = smul.u32 %s23, 2
          %s522 = sadd.s32 %s521, %s24
          %s523 = smul.u32 8, %s522
        $region85: #{flash_attention_block.4} parent=31 // pred_fallthru
          _
      $region32: #{flash_attention_block.4} parent=5 // pred_fallthru
        _
      %p524 = scmp.le.s32.totalorder 1, %s16
      %p525 = scmp.lt.s32.totalorder %s16, 5
      %p526 = pnand %p524, %p525
      %p527 = pneg %p526
      // Predicated region
      $region86: #{flash_attention_block.4} parent=5 // pred_check
        _
      $region87: #{flash_attention_block.4} parent=5 // pred_check_branch
        %529 = sbr.rel (%p526) target = $region89
      $region88: #{flash_attention_block.4} parent=5 // pred_region
        %s530 = ssub.s32 %s16, 1
        %s531 = sand.u32 %s43, 1
        %s532 = sand.u32 %s43, 1
        %s533 = smul.addr %s532, 128
        %s534 = scalar_lea.vmem [#allocation2], %s533
        // Predicated region
        $region90: #{flash_attention_block.4} parent=88 // pred_check
          %p535 = pneg %p56
        $region91: #{flash_attention_block.4} parent=88 // pred_check_branch
          %537 = sbr.rel (%p535) target = $region93
        $region92: #{flash_attention_block.4} parent=88 // pred_region
          _
        $region93: #{flash_attention_block.4} parent=88 // pred_fallthru
          _
        %s538 = sand.u32 %s43, 1
        %s539 = sand.u32 %s43, 1
        %s540 = smul.addr %s539, 128
        %s541 = scalar_lea.vmem [#allocation2], %s540
        %p542 = pneg %p56
        %p543 = pneg %p53
        %s544 = smul.u32 4, %s25
        %p545 = scmp.lt.s32.totalorder %s544, 7
        %s546 = scalar_select %p545, %s544, 7
        %s547 = smul.addr %s546, 16
        %s548 = smul.addr %s547, 4
        %s549 = scalar_lea.vmem %s1, %s548
        %p550 = pneg %p82
        %p551 = pneg %p79
        %s552 = smul.u32 4, %s25
        %p553 = scmp.lt.s32.totalorder %s552, 7
        %s554 = scalar_select %p553, %s552, 7
        %s555 = smul.addr %s554, 16
        %s556 = smul.addr %s555, 4
        %s557 = scalar_lea.vmem %s2, %s556
        %p558 = pneg %p108
        %p559 = pneg %p105
        %s560 = smul.u32 %s25, 2
        %s561 = sadd.s32 %s560, %s26
        %s562 = smul.u32 8, %s561
        %p563 = scmp.lt.s32.totalorder %s562, 31
        %s564 = scalar_select %p563, %s562, 31
        %s565 = smul.addr %s564, 8
        %s566 = scalar_lea.vmem %s3, %s565
        %p567 = pneg %p138
        %p568 = pneg %p135
        %p569 = pneg %p159
        %p570 = pneg %p156
        %p571 = pneg %p180
        %p572 = pneg %p177
        %p573 = pneg %p201
        %p574 = pneg %p198
        %p575 = pneg %p222
        %p576 = pneg %p219
        %p577 = pneg %p252
        %p578 = pneg %p249
        %s579 = smul.u32 %s25, 2
        %s580 = sadd.s32 %s579, %s26
        %s581 = smul.u32 8, %s580
        %p582 = scmp.lt.s32.totalorder %s581, 31
        %s583 = scalar_select %p582, %s581, 31
        %s584 = smul.addr %s583, 8
        %s585 = scalar_lea.vmem %s8, %s584
        %p586 = pneg %p282
        %p587 = pneg %p279
        %s588 = smul.u32 %s25, 2
        %s589 = sadd.s32 %s588, %s26
        %s590 = smul.u32 8, %s589
        %p591 = scmp.lt.s32.totalorder %s590, 31
        %s592 = scalar_select %p591, %s590, 31
        %s593 = smul.addr %s592, 4
        %s594 = scalar_lea.vmem %s9, %s593
        %s595 = smul.u32 4, %s25
        %s596 = smul.u32 8, %s26
        %s597 = smul.u32 4, %s25
        %p598 = scmp.lt.s32.totalorder %s597, 7
        %s599 = scalar_select %p598, %s597, 7
        %s600 = smul.addr %s599, 16
        %s601 = smul.addr %s600, 4
        %s602 = scalar_lea.vmem %s1, %s601
        %s603 = smul.u32 4, %s25
        %s604 = smul.u32 4, %s25
        %p605 = scmp.lt.s32.totalorder %s604, 7
        %s606 = scalar_select %p605, %s604, 7
        %s607 = smul.addr %s606, 16
        %s608 = smul.addr %s607, 4
        %s609 = scalar_lea.vmem %s2, %s608
        %s610 = smul.u32 4, %s25
        %s611 = smul.u32 %s25, 2
        %s612 = sadd.s32 %s611, %s26
        %s613 = smul.u32 8, %s612
        %p614 = scmp.lt.s32.totalorder %s613, 31
        %s615 = scalar_select %p614, %s613, 31
        %s616 = smul.addr %s615, 8
        %s617 = scalar_lea.vmem %s3, %s616
        %s618 = smul.u32 %s25, 2
        %s619 = sadd.s32 %s618, %s26
        %s620 = smul.u32 8, %s619
        %s621 = smul.u32 %s25, 2
        %s622 = sadd.s32 %s621, %s26
        %s623 = smul.u32 8, %s622
        %p624 = scmp.lt.s32.totalorder %s623, 31
        %s625 = scalar_select %p624, %s623, 31
        %s626 = smul.addr %s625, 8
        %s627 = scalar_lea.vmem %s8, %s626
        %s628 = smul.u32 %s25, 2
        %s629 = sadd.s32 %s628, %s26
        %s630 = smul.u32 8, %s629
        %s631 = smul.u32 %s25, 2
        %s632 = sadd.s32 %s631, %s26
        %s633 = smul.u32 8, %s632
        %p634 = scmp.lt.s32.totalorder %s633, 31
        %s635 = scalar_select %p634, %s633, 31
        %s636 = smul.addr %s635, 4
        %s637 = scalar_lea.vmem %s9, %s636
        %s638 = smul.u32 %s25, 2
        %s639 = sadd.s32 %s638, %s26
        %s640 = smul.u32 8, %s639
        %v642 = vld [vmem:[%s534] sm:$0xf]
        %v643 = vld [vmem:[%s534 + $0x4] sm:$0xf]
        %v644 = vld [vmem:[%s534 + $0x8] sm:$0xf]
        %v645 = vld [vmem:[%s534 + $0xc] sm:$0xf]
        %v646 = vld [vmem:[%s534 + $0x10] sm:$0xf]
        %v647 = vld [vmem:[%s534 + $0x14] sm:$0xf]
        %v648 = vld [vmem:[%s534 + $0x18] sm:$0xf]
        %v649 = vld [vmem:[%s534 + $0x1c] sm:$0xf]
        %v650 = vld [vmem:[%s534 + $0x20] sm:$0xf]
        %v651 = vld [vmem:[%s534 + $0x24] sm:$0xf]
        %v652 = vld [vmem:[%s534 + $0x28] sm:$0xf]
        %v653 = vld [vmem:[%s534 + $0x2c] sm:$0xf]
        %v654 = vld [vmem:[%s534 + $0x30] sm:$0xf]
        %v655 = vld [vmem:[%s534 + $0x34] sm:$0xf]
        %v656 = vld [vmem:[%s534 + $0x38] sm:$0xf]
        %v657 = vld [vmem:[%s534 + $0x3c] sm:$0xf]
        %v658 = vld [vmem:[%s534 + $0x40] sm:$0xf]
        %v659 = vld [vmem:[%s534 + $0x44] sm:$0xf]
        %v660 = vld [vmem:[%s534 + $0x48] sm:$0xf]
        %v661 = vld [vmem:[%s534 + $0x4c] sm:$0xf]
        %v662 = vld [vmem:[%s534 + $0x50] sm:$0xf]
        %v663 = vld [vmem:[%s534 + $0x54] sm:$0xf]
        %v664 = vld [vmem:[%s534 + $0x58] sm:$0xf]
        %v665 = vld [vmem:[%s534 + $0x5c] sm:$0xf]
        %v666 = vld [vmem:[%s534 + $0x60] sm:$0xf]
        %v667 = vld [vmem:[%s534 + $0x64] sm:$0xf]
        %v668 = vld [vmem:[%s534 + $0x68] sm:$0xf]
        %v669 = vld [vmem:[%s534 + $0x6c] sm:$0xf]
        %v670 = vld [vmem:[%s534 + $0x70] sm:$0xf]
        %v671 = vld [vmem:[%s534 + $0x74] sm:$0xf]
        %v672 = vld [vmem:[%s534 + $0x78] sm:$0xf]
        %v673 = vld [vmem:[%s534 + $0x7c] sm:$0xf]
        %v674 = vld [vmem:[%s602] sm:$0xf]
        %v675 = vld [vmem:[%s602 + $0x4] sm:$0xf]
        %v676 = vld [vmem:[%s602 + $0x8] sm:$0xf]
        %v677 = vld [vmem:[%s602 + $0xc] sm:$0xf]
        %v678 = vld [vmem:[%s602 + $0x10] sm:$0xf]
        %v679 = vld [vmem:[%s602 + $0x14] sm:$0xf]
        %v680 = vld [vmem:[%s602 + $0x18] sm:$0xf]
        %v681 = vld [vmem:[%s602 + $0x1c] sm:$0xf]
        %v682 = vld [vmem:[%s602 + $0x20] sm:$0xf]
        %v683 = vld [vmem:[%s602 + $0x24] sm:$0xf]
        %v684 = vld [vmem:[%s602 + $0x28] sm:$0xf]
        %v685 = vld [vmem:[%s602 + $0x2c] sm:$0xf]
        %v686 = vld [vmem:[%s602 + $0x30] sm:$0xf]
        %v687 = vld [vmem:[%s602 + $0x34] sm:$0xf]
        %v688 = vld [vmem:[%s602 + $0x38] sm:$0xf]
        %v689 = vld [vmem:[%s602 + $0x3c] sm:$0xf]
        %v690 = vld [vmem:[%s602 + $0x40] sm:$0xf]
        %v691 = vld [vmem:[%s602 + $0x44] sm:$0xf]
        %v692 = vld [vmem:[%s602 + $0x48] sm:$0xf]
        %v693 = vld [vmem:[%s602 + $0x4c] sm:$0xf]
        %v694 = vld [vmem:[%s602 + $0x50] sm:$0xf]
        %v695 = vld [vmem:[%s602 + $0x54] sm:$0xf]
        %v696 = vld [vmem:[%s602 + $0x58] sm:$0xf]
        %v697 = vld [vmem:[%s602 + $0x5c] sm:$0xf]
        %v698 = vld [vmem:[%s602 + $0x60] sm:$0xf]
        %v699 = vld [vmem:[%s602 + $0x64] sm:$0xf]
        %v700 = vld [vmem:[%s602 + $0x68] sm:$0xf]
        %v701 = vld [vmem:[%s602 + $0x6c] sm:$0xf]
        %v702 = vld [vmem:[%s602 + $0x70] sm:$0xf]
        %v703 = vld [vmem:[%s602 + $0x74] sm:$0xf]
        %v704 = vld [vmem:[%s602 + $0x78] sm:$0xf]
        %v705 = vld [vmem:[%s602 + $0x7c] sm:$0xf]
        %v706 = vld [vmem:[%s602 + $0x80] sm:$0xf]
        %v707 = vld [vmem:[%s602 + $0x84] sm:$0xf]
        %v708 = vld [vmem:[%s602 + $0x88] sm:$0xf]
        %v709 = vld [vmem:[%s602 + $0x8c] sm:$0xf]
        %v710 = vld [vmem:[%s602 + $0x90] sm:$0xf]
        %v711 = vld [vmem:[%s602 + $0x94] sm:$0xf]
        %v712 = vld [vmem:[%s602 + $0x98] sm:$0xf]
        %v713 = vld [vmem:[%s602 + $0x9c] sm:$0xf]
        %v714 = vld [vmem:[%s602 + $0xa0] sm:$0xf]
        %v715 = vld [vmem:[%s602 + $0xa4] sm:$0xf]
        %v716 = vld [vmem:[%s602 + $0xa8] sm:$0xf]
        %v717 = vld [vmem:[%s602 + $0xac] sm:$0xf]
        %v718 = vld [vmem:[%s602 + $0xb0] sm:$0xf]
        %v719 = vld [vmem:[%s602 + $0xb4] sm:$0xf]
        %v720 = vld [vmem:[%s602 + $0xb8] sm:$0xf]
        %v721 = vld [vmem:[%s602 + $0xbc] sm:$0xf]
        %v722 = vld [vmem:[%s602 + $0xc0] sm:$0xf]
        %v723 = vld [vmem:[%s602 + $0xc4] sm:$0xf]
        %v724 = vld [vmem:[%s602 + $0xc8] sm:$0xf]
        %v725 = vld [vmem:[%s602 + $0xcc] sm:$0xf]
        %v726 = vld [vmem:[%s602 + $0xd0] sm:$0xf]
        %v727 = vld [vmem:[%s602 + $0xd4] sm:$0xf]
        %v728 = vld [vmem:[%s602 + $0xd8] sm:$0xf]
        %v729 = vld [vmem:[%s602 + $0xdc] sm:$0xf]
        %v730 = vld [vmem:[%s602 + $0xe0] sm:$0xf]
        %v731 = vld [vmem:[%s602 + $0xe4] sm:$0xf]
        %v732 = vld [vmem:[%s602 + $0xe8] sm:$0xf]
        %v733 = vld [vmem:[%s602 + $0xec] sm:$0xf]
        %v734 = vld [vmem:[%s602 + $0xf0] sm:$0xf]
        %v735 = vld [vmem:[%s602 + $0xf4] sm:$0xf]
        %v736 = vld [vmem:[%s602 + $0xf8] sm:$0xf]
        %v737 = vld [vmem:[%s602 + $0xfc] sm:$0xf]
        %v746 = vunpack.c.l.b16 %v642
        %v747 = vunpack.c.l.b16 %v643
        %v748 = vunpack.c.l.b16 %v644
        %v749 = vunpack.c.l.b16 %v645
        %v750 = vunpack.c.l.b16 %v646
        %v751 = vunpack.c.l.b16 %v647
        %v752 = vunpack.c.l.b16 %v648
        %v753 = vunpack.c.l.b16 %v649
        %v754 = vpack.c.b16 %v747, %v746
        %v755 = vpack.c.b16 %v749, %v748
        %v756 = vpack.c.b16 %v751, %v750
        %v757 = vpack.c.b16 %v753, %v752
        %v774 = vunpack.c.l.b16 %v674
        %v775 = vunpack.c.l.b16 %v675
        %v776 = vunpack.c.l.b16 %v676
        %v777 = vunpack.c.l.b16 %v677
        %v778 = vunpack.c.l.b16 %v678
        %v779 = vunpack.c.l.b16 %v679
        %v780 = vunpack.c.l.b16 %v680
        %v781 = vunpack.c.l.b16 %v681
        %v782 = vunpack.c.l.b16 %v682
        %v783 = vunpack.c.l.b16 %v683
        %v784 = vunpack.c.l.b16 %v684
        %v785 = vunpack.c.l.b16 %v685
        %v786 = vunpack.c.l.b16 %v686
        %v787 = vunpack.c.l.b16 %v687
        %v788 = vunpack.c.l.b16 %v688
        %v789 = vunpack.c.l.b16 %v689
        %v790 = vpack.c.b16 %v775, %v774
        %v791 = vpack.c.b16 %v777, %v776
        %v792 = vpack.c.b16 %v779, %v778
        %v793 = vpack.c.b16 %v781, %v780
        %v794 = vpack.c.b16 %v783, %v782
        %v795 = vpack.c.b16 %v785, %v784
        %v796 = vpack.c.b16 %v787, %v786
        %v797 = vpack.c.b16 %v789, %v788
        %vm798 = vcmask 261120
        %v800 = vsel %vm798, %v754, 0
        %v803 = vsel %vm798, %v755, 0
        %v806 = vsel %vm798, %v756, 0
        %v809 = vsel %vm798, %v757, 0
        %v812 = vsel %vm798, %v790, 0
        %v815 = vsel %vm798, %v791, 0
        %v818 = vsel %vm798, %v792, 0
        %v821 = vsel %vm798, %v793, 0
        %v824 = vsel %vm798, %v794, 0
        %v827 = vsel %vm798, %v795, 0
        %v830 = vsel %vm798, %v796, 0
        %v833 = vsel %vm798, %v797, 0
        %835 = vmatpush.bf16.xpose.msra.mxu0 %v833
        %836 = vmatpush.bf16.xpose.msra.mxu0 %v830
        %837 = vmatpush.bf16.xpose.msra.mxu0 %v827
        %838 = vmatpush.bf16.xpose.msra.mxu0 %v824
        %839 = vmatpush.bf16.xpose.msra.mxu0 %v821
        %840 = vmatpush.bf16.xpose.msra.mxu0 %v818
        %841 = vmatpush.bf16.xpose.msra.mxu0 %v815
        %842 = vmatpush.bf16.xpose.msra.mxu0 %v812
        %843 = vmatmul.bf16.gmra.mxu0 %v800
        %v844 = vpop.f32.mrf.mxu0
        %v845 = vadd.f32 0.0, %v844
        %v846 = vpop.f32.mrf.mxu0
        %v847 = vadd.f32 0.0, %v846
        %848 = vmatmul.bf16.gmra.mxu0 %v803
        %v849 = vpop.f32.mrf.mxu0
        %v850 = vadd.f32 0.0, %v849
        %v851 = vpop.f32.mrf.mxu0
        %v852 = vadd.f32 0.0, %v851
        %853 = vmatmul.bf16.gmra.mxu0 %v806
        %v854 = vpop.f32.mrf.mxu0
        %v855 = vadd.f32 0.0, %v854
        %v856 = vpop.f32.mrf.mxu0
        %v857 = vadd.f32 0.0, %v856
        %858 = vmatmul.bf16.gmra.mxu0 %v809
        %v859 = vpop.f32.mrf.mxu0
        %v860 = vadd.f32 0.0, %v859
        %v861 = vpop.f32.mrf.mxu0
        %v862 = vadd.f32 0.0, %v861
        %863 = vdwg.mxu0
        %v872 = vunpack.c.l.b16 %v650
        %v873 = vunpack.c.l.b16 %v651
        %v874 = vunpack.c.l.b16 %v652
        %v875 = vunpack.c.l.b16 %v653
        %v876 = vunpack.c.l.b16 %v654
        %v877 = vunpack.c.l.b16 %v655
        %v878 = vunpack.c.l.b16 %v656
        %v879 = vunpack.c.l.b16 %v657
        %v880 = vpack.c.b16 %v873, %v872
        %v881 = vpack.c.b16 %v875, %v874
        %v882 = vpack.c.b16 %v877, %v876
        %v883 = vpack.c.b16 %v879, %v878
        %v900 = vunpack.c.l.b16 %v690
        %v901 = vunpack.c.l.b16 %v691
        %v902 = vunpack.c.l.b16 %v692
        %v903 = vunpack.c.l.b16 %v693
        %v904 = vunpack.c.l.b16 %v694
        %v905 = vunpack.c.l.b16 %v695
        %v906 = vunpack.c.l.b16 %v696
        %v907 = vunpack.c.l.b16 %v697
        %v908 = vunpack.c.l.b16 %v698
        %v909 = vunpack.c.l.b16 %v699
        %v910 = vunpack.c.l.b16 %v700
        %v911 = vunpack.c.l.b16 %v701
        %v912 = vunpack.c.l.b16 %v702
        %v913 = vunpack.c.l.b16 %v703
        %v914 = vunpack.c.l.b16 %v704
        %v915 = vunpack.c.l.b16 %v705
        %v916 = vpack.c.b16 %v901, %v900
        %v917 = vpack.c.b16 %v903, %v902
        %v918 = vpack.c.b16 %v905, %v904
        %v919 = vpack.c.b16 %v907, %v906
        %v920 = vpack.c.b16 %v909, %v908
        %v921 = vpack.c.b16 %v911, %v910
        %v922 = vpack.c.b16 %v913, %v912
        %v923 = vpack.c.b16 %v915, %v914
        %v925 = vsel %vm798, %v880, 0
        %v928 = vsel %vm798, %v881, 0
        %v931 = vsel %vm798, %v882, 0
        %v934 = vsel %vm798, %v883, 0
        %v937 = vsel %vm798, %v916, 0
        %v940 = vsel %vm798, %v917, 0
        %v943 = vsel %vm798, %v918, 0
        %v946 = vsel %vm798, %v919, 0
        %v949 = vsel %vm798, %v920, 0
        %v952 = vsel %vm798, %v921, 0
        %v955 = vsel %vm798, %v922, 0
        %v958 = vsel %vm798, %v923, 0
        %960 = vmatpush.bf16.xpose.msra.mxu0 %v958
        %961 = vmatpush.bf16.xpose.msra.mxu0 %v955
        %962 = vmatpush.bf16.xpose.msra.mxu0 %v952
        %963 = vmatpush.bf16.xpose.msra.mxu0 %v949
        %964 = vmatpush.bf16.xpose.msra.mxu0 %v946
        %965 = vmatpush.bf16.xpose.msra.mxu0 %v943
        %966 = vmatpush.bf16.xpose.msra.mxu0 %v940
        %967 = vmatpush.bf16.xpose.msra.mxu0 %v937
        %968 = vmatmul.bf16.gmra.mxu0 %v925
        %v969 = vpop.f32.mrf.mxu0
        %v970 = vadd.f32 0.0, %v969
        %v971 = vpop.f32.mrf.mxu0
        %v972 = vadd.f32 0.0, %v971
        %973 = vmatmul.bf16.gmra.mxu0 %v928
        %v974 = vpop.f32.mrf.mxu0
        %v975 = vadd.f32 0.0, %v974
        %v976 = vpop.f32.mrf.mxu0
        %v977 = vadd.f32 0.0, %v976
        %978 = vmatmul.bf16.gmra.mxu0 %v931
        %v979 = vpop.f32.mrf.mxu0
        %v980 = vadd.f32 0.0, %v979
        %v981 = vpop.f32.mrf.mxu0
        %v982 = vadd.f32 0.0, %v981
        %983 = vmatmul.bf16.gmra.mxu0 %v934
        %v984 = vpop.f32.mrf.mxu0
        %v985 = vadd.f32 0.0, %v984
        %v986 = vpop.f32.mrf.mxu0
        %v987 = vadd.f32 0.0, %v986
        %988 = vdwg.mxu0
        %v997 = vunpack.c.l.b16 %v658
        %v998 = vunpack.c.l.b16 %v659
        %v999 = vunpack.c.l.b16 %v660
        %v1000 = vunpack.c.l.b16 %v661
        %v1001 = vunpack.c.l.b16 %v662
        %v1002 = vunpack.c.l.b16 %v663
        %v1003 = vunpack.c.l.b16 %v664
        %v1004 = vunpack.c.l.b16 %v665
        %v1005 = vpack.c.b16 %v998, %v997
        %v1006 = vpack.c.b16 %v1000, %v999
        %v1007 = vpack.c.b16 %v1002, %v1001
        %v1008 = vpack.c.b16 %v1004, %v1003
        %v1025 = vunpack.c.l.b16 %v706
        %v1026 = vunpack.c.l.b16 %v707
        %v1027 = vunpack.c.l.b16 %v708
        %v1028 = vunpack.c.l.b16 %v709
        %v1029 = vunpack.c.l.b16 %v710
        %v1030 = vunpack.c.l.b16 %v711
        %v1031 = vunpack.c.l.b16 %v712
        %v1032 = vunpack.c.l.b16 %v713
        %v1033 = vunpack.c.l.b16 %v714
        %v1034 = vunpack.c.l.b16 %v715
        %v1035 = vunpack.c.l.b16 %v716
        %v1036 = vunpack.c.l.b16 %v717
        %v1037 = vunpack.c.l.b16 %v718
        %v1038 = vunpack.c.l.b16 %v719
        %v1039 = vunpack.c.l.b16 %v720
        %v1040 = vunpack.c.l.b16 %v721
        %v1041 = vpack.c.b16 %v1026, %v1025
        %v1042 = vpack.c.b16 %v1028, %v1027
        %v1043 = vpack.c.b16 %v1030, %v1029
        %v1044 = vpack.c.b16 %v1032, %v1031
        %v1045 = vpack.c.b16 %v1034, %v1033
        %v1046 = vpack.c.b16 %v1036, %v1035
        %v1047 = vpack.c.b16 %v1038, %v1037
        %v1048 = vpack.c.b16 %v1040, %v1039
        %v1050 = vsel %vm798, %v1005, 0
        %v1053 = vsel %vm798, %v1006, 0
        %v1056 = vsel %vm798, %v1007, 0
        %v1059 = vsel %vm798, %v1008, 0
        %v1062 = vsel %vm798, %v1041, 0
        %v1065 = vsel %vm798, %v1042, 0
        %v1068 = vsel %vm798, %v1043, 0
        %v1071 = vsel %vm798, %v1044, 0
        %v1074 = vsel %vm798, %v1045, 0
        %v1077 = vsel %vm798, %v1046, 0
        %v1080 = vsel %vm798, %v1047, 0
        %v1083 = vsel %vm798, %v1048, 0
        %1085 = vmatpush.bf16.xpose.msra.mxu0 %v1083
        %1086 = vmatpush.bf16.xpose.msra.mxu0 %v1080
        %1087 = vmatpush.bf16.xpose.msra.mxu0 %v1077
        %1088 = vmatpush.bf16.xpose.msra.mxu0 %v1074
        %1089 = vmatpush.bf16.xpose.msra.mxu0 %v1071
        %1090 = vmatpush.bf16.xpose.msra.mxu0 %v1068
        %1091 = vmatpush.bf16.xpose.msra.mxu0 %v1065
        %1092 = vmatpush.bf16.xpose.msra.mxu0 %v1062
        %1093 = vmatmul.bf16.gmra.mxu0 %v1050
        %v1094 = vpop.f32.mrf.mxu0
        %v1095 = vadd.f32 0.0, %v1094
        %v1096 = vpop.f32.mrf.mxu0
        %v1097 = vadd.f32 0.0, %v1096
        %1098 = vmatmul.bf16.gmra.mxu0 %v1053
        %v1099 = vpop.f32.mrf.mxu0
        %v1100 = vadd.f32 0.0, %v1099
        %v1101 = vpop.f32.mrf.mxu0
        %v1102 = vadd.f32 0.0, %v1101
        %1103 = vmatmul.bf16.gmra.mxu0 %v1056
        %v1104 = vpop.f32.mrf.mxu0
        %v1105 = vadd.f32 0.0, %v1104
        %v1106 = vpop.f32.mrf.mxu0
        %v1107 = vadd.f32 0.0, %v1106
        %1108 = vmatmul.bf16.gmra.mxu0 %v1059
        %v1109 = vpop.f32.mrf.mxu0
        %v1110 = vadd.f32 0.0, %v1109
        %v1111 = vpop.f32.mrf.mxu0
        %v1112 = vadd.f32 0.0, %v1111
        %1113 = vdwg.mxu0
        %v1122 = vunpack.c.l.b16 %v666
        %v1123 = vunpack.c.l.b16 %v667
        %v1124 = vunpack.c.l.b16 %v668
        %v1125 = vunpack.c.l.b16 %v669
        %v1126 = vunpack.c.l.b16 %v670
        %v1127 = vunpack.c.l.b16 %v671
        %v1128 = vunpack.c.l.b16 %v672
        %v1129 = vunpack.c.l.b16 %v673
        %v1130 = vpack.c.b16 %v1123, %v1122
        %v1131 = vpack.c.b16 %v1125, %v1124
        %v1132 = vpack.c.b16 %v1127, %v1126
        %v1133 = vpack.c.b16 %v1129, %v1128
        %v1150 = vunpack.c.l.b16 %v722
        %v1151 = vunpack.c.l.b16 %v723
        %v1152 = vunpack.c.l.b16 %v724
        %v1153 = vunpack.c.l.b16 %v725
        %v1154 = vunpack.c.l.b16 %v726
        %v1155 = vunpack.c.l.b16 %v727
        %v1156 = vunpack.c.l.b16 %v728
        %v1157 = vunpack.c.l.b16 %v729
        %v1158 = vunpack.c.l.b16 %v730
        %v1159 = vunpack.c.l.b16 %v731
        %v1160 = vunpack.c.l.b16 %v732
        %v1161 = vunpack.c.l.b16 %v733
        %v1162 = vunpack.c.l.b16 %v734
        %v1163 = vunpack.c.l.b16 %v735
        %v1164 = vunpack.c.l.b16 %v736
        %v1165 = vunpack.c.l.b16 %v737
        %v1166 = vpack.c.b16 %v1151, %v1150
        %v1167 = vpack.c.b16 %v1153, %v1152
        %v1168 = vpack.c.b16 %v1155, %v1154
        %v1169 = vpack.c.b16 %v1157, %v1156
        %v1170 = vpack.c.b16 %v1159, %v1158
        %v1171 = vpack.c.b16 %v1161, %v1160
        %v1172 = vpack.c.b16 %v1163, %v1162
        %v1173 = vpack.c.b16 %v1165, %v1164
        %v1175 = vsel %vm798, %v1130, 0
        %v1178 = vsel %vm798, %v1131, 0
        %v1181 = vsel %vm798, %v1132, 0
        %v1184 = vsel %vm798, %v1133, 0
        %v1187 = vsel %vm798, %v1166, 0
        %v1190 = vsel %vm798, %v1167, 0
        %v1193 = vsel %vm798, %v1168, 0
        %v1196 = vsel %vm798, %v1169, 0
        %v1199 = vsel %vm798, %v1170, 0
        %v1202 = vsel %vm798, %v1171, 0
        %v1205 = vsel %vm798, %v1172, 0
        %v1208 = vsel %vm798, %v1173, 0
        %1210 = vmatpush.bf16.xpose.msra.mxu0 %v1208
        %1211 = vmatpush.bf16.xpose.msra.mxu0 %v1205
        %1212 = vmatpush.bf16.xpose.msra.mxu0 %v1202
        %1213 = vmatpush.bf16.xpose.msra.mxu0 %v1199
        %1214 = vmatpush.bf16.xpose.msra.mxu0 %v1196
        %1215 = vmatpush.bf16.xpose.msra.mxu0 %v1193
        %1216 = vmatpush.bf16.xpose.msra.mxu0 %v1190
        %1217 = vmatpush.bf16.xpose.msra.mxu0 %v1187
        %1218 = vmatmul.bf16.gmra.mxu0 %v1175
        %v1219 = vpop.f32.mrf.mxu0
        %v1220 = vadd.f32 0.0, %v1219
        %v1221 = vpop.f32.mrf.mxu0
        %v1222 = vadd.f32 0.0, %v1221
        %1223 = vmatmul.bf16.gmra.mxu0 %v1178
        %v1224 = vpop.f32.mrf.mxu0
        %v1225 = vadd.f32 0.0, %v1224
        %v1226 = vpop.f32.mrf.mxu0
        %v1227 = vadd.f32 0.0, %v1226
        %1228 = vmatmul.bf16.gmra.mxu0 %v1181
        %v1229 = vpop.f32.mrf.mxu0
        %v1230 = vadd.f32 0.0, %v1229
        %v1231 = vpop.f32.mrf.mxu0
        %v1232 = vadd.f32 0.0, %v1231
        %1233 = vmatmul.bf16.gmra.mxu0 %v1184
        %v1234 = vpop.f32.mrf.mxu0
        %v1235 = vadd.f32 0.0, %v1234
        %v1236 = vpop.f32.mrf.mxu0
        %v1237 = vadd.f32 0.0, %v1236
        %1238 = vdwg.mxu0
        %1239 = vmax.xlane.f32.xlu0 %v845
        %v1240 = vpop.xlane.xlu0 %1239
        %1241 = vmax.xlane.f32.xlu0 %v847
        %v1242 = vpop.xlane.xlu0 %1241
        %1243 = vmax.xlane.f32.xlu0 %v850
        %v1244 = vpop.xlane.xlu0 %1243
        %1245 = vmax.xlane.f32.xlu0 %v852
        %v1246 = vpop.xlane.xlu0 %1245
        %1247 = vmax.xlane.f32.xlu0 %v855
        %v1248 = vpop.xlane.xlu0 %1247
        %1249 = vmax.xlane.f32.xlu0 %v857
        %v1250 = vpop.xlane.xlu0 %1249
        %1251 = vmax.xlane.f32.xlu0 %v860
        %v1252 = vpop.xlane.xlu0 %1251
        %1253 = vmax.xlane.f32.xlu0 %v862
        %v1254 = vpop.xlane.xlu0 %1253
        %1255 = vmax.xlane.f32.xlu0 %v970
        %v1256 = vpop.xlane.xlu0 %1255
        %1257 = vmax.xlane.f32.xlu0 %v972
        %v1258 = vpop.xlane.xlu0 %1257
        %1259 = vmax.xlane.f32.xlu0 %v975
        %v1260 = vpop.xlane.xlu0 %1259
        %1261 = vmax.xlane.f32.xlu0 %v977
        %v1262 = vpop.xlane.xlu0 %1261
        %1263 = vmax.xlane.f32.xlu0 %v980
        %v1264 = vpop.xlane.xlu0 %1263
        %1265 = vmax.xlane.f32.xlu0 %v982
        %v1266 = vpop.xlane.xlu0 %1265
        %1267 = vmax.xlane.f32.xlu0 %v985
        %v1268 = vpop.xlane.xlu0 %1267
        %1269 = vmax.xlane.f32.xlu0 %v987
        %v1270 = vpop.xlane.xlu0 %1269
        %1271 = vmax.xlane.f32.xlu0 %v1095
        %v1272 = vpop.xlane.xlu0 %1271
        %1273 = vmax.xlane.f32.xlu0 %v1097
        %v1274 = vpop.xlane.xlu0 %1273
        %1275 = vmax.xlane.f32.xlu0 %v1100
        %v1276 = vpop.xlane.xlu0 %1275
        %1277 = vmax.xlane.f32.xlu0 %v1102
        %v1278 = vpop.xlane.xlu0 %1277
        %1279 = vmax.xlane.f32.xlu0 %v1105
        %v1280 = vpop.xlane.xlu0 %1279
        %1281 = vmax.xlane.f32.xlu0 %v1107
        %v1282 = vpop.xlane.xlu0 %1281
        %1283 = vmax.xlane.f32.xlu0 %v1110
        %v1284 = vpop.xlane.xlu0 %1283
        %1285 = vmax.xlane.f32.xlu0 %v1112
        %v1286 = vpop.xlane.xlu0 %1285
        %1287 = vmax.xlane.f32.xlu0 %v1220
        %v1288 = vpop.xlane.xlu0 %1287
        %1289 = vmax.xlane.f32.xlu0 %v1222
        %v1290 = vpop.xlane.xlu0 %1289
        %1291 = vmax.xlane.f32.xlu0 %v1225
        %v1292 = vpop.xlane.xlu0 %1291
        %1293 = vmax.xlane.f32.xlu0 %v1227
        %v1294 = vpop.xlane.xlu0 %1293
        %1295 = vmax.xlane.f32.xlu0 %v1230
        %v1296 = vpop.xlane.xlu0 %1295
        %1297 = vmax.xlane.f32.xlu0 %v1232
        %v1298 = vpop.xlane.xlu0 %1297
        %1299 = vmax.xlane.f32.xlu0 %v1235
        %v1300 = vpop.xlane.xlu0 %1299
        %1301 = vmax.xlane.f32.xlu0 %v1237
        %v1302 = vpop.xlane.xlu0 %1301
        %v1303 = vsub.f32 %v845, %v1240
        %v1304 = vsub.f32 %v847, %v1242
        %v1305 = vsub.f32 %v850, %v1244
        %v1306 = vsub.f32 %v852, %v1246
        %v1307 = vsub.f32 %v855, %v1248
        %v1308 = vsub.f32 %v857, %v1250
        %v1309 = vsub.f32 %v860, %v1252
        %v1310 = vsub.f32 %v862, %v1254
        %v1311 = vsub.f32 %v970, %v1256
        %v1312 = vsub.f32 %v972, %v1258
        %v1313 = vsub.f32 %v975, %v1260
        %v1314 = vsub.f32 %v977, %v1262
        %v1315 = vsub.f32 %v980, %v1264
        %v1316 = vsub.f32 %v982, %v1266
        %v1317 = vsub.f32 %v985, %v1268
        %v1318 = vsub.f32 %v987, %v1270
        %v1319 = vsub.f32 %v1095, %v1272
        %v1320 = vsub.f32 %v1097, %v1274
        %v1321 = vsub.f32 %v1100, %v1276
        %v1322 = vsub.f32 %v1102, %v1278
        %v1323 = vsub.f32 %v1105, %v1280
        %v1324 = vsub.f32 %v1107, %v1282
        %v1325 = vsub.f32 %v1110, %v1284
        %v1326 = vsub.f32 %v1112, %v1286
        %v1327 = vsub.f32 %v1220, %v1288
        %v1328 = vsub.f32 %v1222, %v1290
        %v1329 = vsub.f32 %v1225, %v1292
        %v1330 = vsub.f32 %v1227, %v1294
        %v1331 = vsub.f32 %v1230, %v1296
        %v1332 = vsub.f32 %v1232, %v1298
        %v1333 = vsub.f32 %v1235, %v1300
        %v1334 = vsub.f32 %v1237, %v1302
        %v1335 = vmul.f32 %v1303, 1.442695
        %v1336 = vpow.pop %v1335
        %v1337 = vmul.f32 %v1304, 1.442695
        %v1338 = vpow.pop %v1337
        %v1339 = vmul.f32 %v1305, 1.442695
        %v1340 = vpow.pop %v1339
        %v1341 = vmul.f32 %v1306, 1.442695
        %v1342 = vpow.pop %v1341
        %v1343 = vmul.f32 %v1307, 1.442695
        %v1344 = vpow.pop %v1343
        %v1345 = vmul.f32 %v1308, 1.442695
        %v1346 = vpow.pop %v1345
        %v1347 = vmul.f32 %v1309, 1.442695
        %v1348 = vpow.pop %v1347
        %v1349 = vmul.f32 %v1310, 1.442695
        %v1350 = vpow.pop %v1349
        %v1351 = vmul.f32 %v1311, 1.442695
        %v1352 = vpow.pop %v1351
        %v1353 = vmul.f32 %v1312, 1.442695
        %v1354 = vpow.pop %v1353
        %v1355 = vmul.f32 %v1313, 1.442695
        %v1356 = vpow.pop %v1355
        %v1357 = vmul.f32 %v1314, 1.442695
        %v1358 = vpow.pop %v1357
        %v1359 = vmul.f32 %v1315, 1.442695
        %v1360 = vpow.pop %v1359
        %v1361 = vmul.f32 %v1316, 1.442695
        %v1362 = vpow.pop %v1361
        %v1363 = vmul.f32 %v1317, 1.442695
        %v1364 = vpow.pop %v1363
        %v1365 = vmul.f32 %v1318, 1.442695
        %v1366 = vpow.pop %v1365
        %v1367 = vmul.f32 %v1319, 1.442695
        %v1368 = vpow.pop %v1367
        %v1369 = vmul.f32 %v1320, 1.442695
        %v1370 = vpow.pop %v1369
        %v1371 = vmul.f32 %v1321, 1.442695
        %v1372 = vpow.pop %v1371
        %v1373 = vmul.f32 %v1322, 1.442695
        %v1374 = vpow.pop %v1373
        %v1375 = vmul.f32 %v1323, 1.442695
        %v1376 = vpow.pop %v1375
        %v1377 = vmul.f32 %v1324, 1.442695
        %v1378 = vpow.pop %v1377
        %v1379 = vmul.f32 %v1325, 1.442695
        %v1380 = vpow.pop %v1379
        %v1381 = vmul.f32 %v1326, 1.442695
        %v1382 = vpow.pop %v1381
        %v1383 = vmul.f32 %v1327, 1.442695
        %v1384 = vpow.pop %v1383
        %v1385 = vmul.f32 %v1328, 1.442695
        %v1386 = vpow.pop %v1385
        %v1387 = vmul.f32 %v1329, 1.442695
        %v1388 = vpow.pop %v1387
        %v1389 = vmul.f32 %v1330, 1.442695
        %v1390 = vpow.pop %v1389
        %v1391 = vmul.f32 %v1331, 1.442695
        %v1392 = vpow.pop %v1391
        %v1393 = vmul.f32 %v1332, 1.442695
        %v1394 = vpow.pop %v1393
        %v1395 = vmul.f32 %v1333, 1.442695
        %v1396 = vpow.pop %v1395
        %v1397 = vmul.f32 %v1334, 1.442695
        %v1398 = vpow.pop %v1397
        %1399 = vadd.xlane.f32.xlu0 %v1336
        %v1400 = vpop.xlane.xlu0 %1399
        %1401 = vadd.xlane.f32.xlu0 %v1338
        %v1402 = vpop.xlane.xlu0 %1401
        %1403 = vadd.xlane.f32.xlu0 %v1340
        %v1404 = vpop.xlane.xlu0 %1403
        %1405 = vadd.xlane.f32.xlu0 %v1342
        %v1406 = vpop.xlane.xlu0 %1405
        %1407 = vadd.xlane.f32.xlu0 %v1344
        %v1408 = vpop.xlane.xlu0 %1407
        %1409 = vadd.xlane.f32.xlu0 %v1346
        %v1410 = vpop.xlane.xlu0 %1409
        %1411 = vadd.xlane.f32.xlu0 %v1348
        %v1412 = vpop.xlane.xlu0 %1411
        %1413 = vadd.xlane.f32.xlu0 %v1350
        %v1414 = vpop.xlane.xlu0 %1413
        %1415 = vadd.xlane.f32.xlu0 %v1352
        %v1416 = vpop.xlane.xlu0 %1415
        %1417 = vadd.xlane.f32.xlu0 %v1354
        %v1418 = vpop.xlane.xlu0 %1417
        %1419 = vadd.xlane.f32.xlu0 %v1356
        %v1420 = vpop.xlane.xlu0 %1419
        %1421 = vadd.xlane.f32.xlu0 %v1358
        %v1422 = vpop.xlane.xlu0 %1421
        %1423 = vadd.xlane.f32.xlu0 %v1360
        %v1424 = vpop.xlane.xlu0 %1423
        %1425 = vadd.xlane.f32.xlu0 %v1362
        %v1426 = vpop.xlane.xlu0 %1425
        %1427 = vadd.xlane.f32.xlu0 %v1364
        %v1428 = vpop.xlane.xlu0 %1427
        %1429 = vadd.xlane.f32.xlu0 %v1366
        %v1430 = vpop.xlane.xlu0 %1429
        %1431 = vadd.xlane.f32.xlu0 %v1368
        %v1432 = vpop.xlane.xlu0 %1431
        %1433 = vadd.xlane.f32.xlu0 %v1370
        %v1434 = vpop.xlane.xlu0 %1433
        %1435 = vadd.xlane.f32.xlu0 %v1372
        %v1436 = vpop.xlane.xlu0 %1435
        %1437 = vadd.xlane.f32.xlu0 %v1374
        %v1438 = vpop.xlane.xlu0 %1437
        %1439 = vadd.xlane.f32.xlu0 %v1376
        %v1440 = vpop.xlane.xlu0 %1439
        %1441 = vadd.xlane.f32.xlu0 %v1378
        %v1442 = vpop.xlane.xlu0 %1441
        %1443 = vadd.xlane.f32.xlu0 %v1380
        %v1444 = vpop.xlane.xlu0 %1443
        %1445 = vadd.xlane.f32.xlu0 %v1382
        %v1446 = vpop.xlane.xlu0 %1445
        %1447 = vadd.xlane.f32.xlu0 %v1384
        %v1448 = vpop.xlane.xlu0 %1447
        %1449 = vadd.xlane.f32.xlu0 %v1386
        %v1450 = vpop.xlane.xlu0 %1449
        %1451 = vadd.xlane.f32.xlu0 %v1388
        %v1452 = vpop.xlane.xlu0 %1451
        %1453 = vadd.xlane.f32.xlu0 %v1390
        %v1454 = vpop.xlane.xlu0 %1453
        %1455 = vadd.xlane.f32.xlu0 %v1392
        %v1456 = vpop.xlane.xlu0 %1455
        %1457 = vadd.xlane.f32.xlu0 %v1394
        %v1458 = vpop.xlane.xlu0 %1457
        %1459 = vadd.xlane.f32.xlu0 %v1396
        %v1460 = vpop.xlane.xlu0 %1459
        %1461 = vadd.xlane.f32.xlu0 %v1398
        %v1462 = vpop.xlane.xlu0 %1461
        %v1463 = vpack.c.bf16 %v1336, %v1336
        %v1464 = vpack.c.bf16 %v1338, %v1338
        %v1465 = vpack.c.bf16 %v1340, %v1340
        %v1466 = vpack.c.bf16 %v1342, %v1342
        %v1467 = vpack.c.bf16 %v1344, %v1344
        %v1468 = vpack.c.bf16 %v1346, %v1346
        %v1469 = vpack.c.bf16 %v1348, %v1348
        %v1470 = vpack.c.bf16 %v1350, %v1350
        %v1471 = vpack.c.bf16 %v1352, %v1352
        %v1472 = vpack.c.bf16 %v1354, %v1354
        %v1473 = vpack.c.bf16 %v1356, %v1356
        %v1474 = vpack.c.bf16 %v1358, %v1358
        %v1475 = vpack.c.bf16 %v1360, %v1360
        %v1476 = vpack.c.bf16 %v1362, %v1362
        %v1477 = vpack.c.bf16 %v1364, %v1364
        %v1478 = vpack.c.bf16 %v1366, %v1366
        %v1479 = vpack.c.bf16 %v1368, %v1368
        %v1480 = vpack.c.bf16 %v1370, %v1370
        %v1481 = vpack.c.bf16 %v1372, %v1372
        %v1482 = vpack.c.bf16 %v1374, %v1374
        %v1483 = vpack.c.bf16 %v1376, %v1376
        %v1484 = vpack.c.bf16 %v1378, %v1378
        %v1485 = vpack.c.bf16 %v1380, %v1380
        %v1486 = vpack.c.bf16 %v1382, %v1382
        %v1487 = vpack.c.bf16 %v1384, %v1384
        %v1488 = vpack.c.bf16 %v1386, %v1386
        %v1489 = vpack.c.bf16 %v1388, %v1388
        %v1490 = vpack.c.bf16 %v1390, %v1390
        %v1491 = vpack.c.bf16 %v1392, %v1392
        %v1492 = vpack.c.bf16 %v1394, %v1394
        %v1493 = vpack.c.bf16 %v1396, %v1396
        %v1494 = vpack.c.bf16 %v1398, %v1398
        %v1495 = vld [vmem:[%s609] sm:$0xf]
        %v1496 = vld [vmem:[%s609 + $0x4] sm:$0xf]
        %v1497 = vld [vmem:[%s609 + $0x8] sm:$0xf]
        %v1498 = vld [vmem:[%s609 + $0xc] sm:$0xf]
        %v1499 = vld [vmem:[%s609 + $0x10] sm:$0xf]
        %v1500 = vld [vmem:[%s609 + $0x14] sm:$0xf]
        %v1501 = vld [vmem:[%s609 + $0x18] sm:$0xf]
        %v1502 = vld [vmem:[%s609 + $0x1c] sm:$0xf]
        %v1503 = vld [vmem:[%s609 + $0x20] sm:$0xf]
        %v1504 = vld [vmem:[%s609 + $0x24] sm:$0xf]
        %v1505 = vld [vmem:[%s609 + $0x28] sm:$0xf]
        %v1506 = vld [vmem:[%s609 + $0x2c] sm:$0xf]
        %v1507 = vld [vmem:[%s609 + $0x30] sm:$0xf]
        %v1508 = vld [vmem:[%s609 + $0x34] sm:$0xf]
        %v1509 = vld [vmem:[%s609 + $0x38] sm:$0xf]
        %v1510 = vld [vmem:[%s609 + $0x3c] sm:$0xf]
        %v1511 = vld [vmem:[%s609 + $0x40] sm:$0xf]
        %v1512 = vld [vmem:[%s609 + $0x44] sm:$0xf]
        %v1513 = vld [vmem:[%s609 + $0x48] sm:$0xf]
        %v1514 = vld [vmem:[%s609 + $0x4c] sm:$0xf]
        %v1515 = vld [vmem:[%s609 + $0x50] sm:$0xf]
        %v1516 = vld [vmem:[%s609 + $0x54] sm:$0xf]
        %v1517 = vld [vmem:[%s609 + $0x58] sm:$0xf]
        %v1518 = vld [vmem:[%s609 + $0x5c] sm:$0xf]
        %v1519 = vld [vmem:[%s609 + $0x60] sm:$0xf]
        %v1520 = vld [vmem:[%s609 + $0x64] sm:$0xf]
        %v1521 = vld [vmem:[%s609 + $0x68] sm:$0xf]
        %v1522 = vld [vmem:[%s609 + $0x6c] sm:$0xf]
        %v1523 = vld [vmem:[%s609 + $0x70] sm:$0xf]
        %v1524 = vld [vmem:[%s609 + $0x74] sm:$0xf]
        %v1525 = vld [vmem:[%s609 + $0x78] sm:$0xf]
        %v1526 = vld [vmem:[%s609 + $0x7c] sm:$0xf]
        %v1527 = vld [vmem:[%s609 + $0x80] sm:$0xf]
        %v1528 = vld [vmem:[%s609 + $0x84] sm:$0xf]
        %v1529 = vld [vmem:[%s609 + $0x88] sm:$0xf]
        %v1530 = vld [vmem:[%s609 + $0x8c] sm:$0xf]
        %v1531 = vld [vmem:[%s609 + $0x90] sm:$0xf]
        %v1532 = vld [vmem:[%s609 + $0x94] sm:$0xf]
        %v1533 = vld [vmem:[%s609 + $0x98] sm:$0xf]
        %v1534 = vld [vmem:[%s609 + $0x9c] sm:$0xf]
        %v1535 = vld [vmem:[%s609 + $0xa0] sm:$0xf]
        %v1536 = vld [vmem:[%s609 + $0xa4] sm:$0xf]
        %v1537 = vld [vmem:[%s609 + $0xa8] sm:$0xf]
        %v1538 = vld [vmem:[%s609 + $0xac] sm:$0xf]
        %v1539 = vld [vmem:[%s609 + $0xb0] sm:$0xf]
        %v1540 = vld [vmem:[%s609 + $0xb4] sm:$0xf]
        %v1541 = vld [vmem:[%s609 + $0xb8] sm:$0xf]
        %v1542 = vld [vmem:[%s609 + $0xbc] sm:$0xf]
        %v1543 = vld [vmem:[%s609 + $0xc0] sm:$0xf]
        %v1544 = vld [vmem:[%s609 + $0xc4] sm:$0xf]
        %v1545 = vld [vmem:[%s609 + $0xc8] sm:$0xf]
        %v1546 = vld [vmem:[%s609 + $0xcc] sm:$0xf]
        %v1547 = vld [vmem:[%s609 + $0xd0] sm:$0xf]
        %v1548 = vld [vmem:[%s609 + $0xd4] sm:$0xf]
        %v1549 = vld [vmem:[%s609 + $0xd8] sm:$0xf]
        %v1550 = vld [vmem:[%s609 + $0xdc] sm:$0xf]
        %v1551 = vld [vmem:[%s609 + $0xe0] sm:$0xf]
        %v1552 = vld [vmem:[%s609 + $0xe4] sm:$0xf]
        %v1553 = vld [vmem:[%s609 + $0xe8] sm:$0xf]
        %v1554 = vld [vmem:[%s609 + $0xec] sm:$0xf]
        %v1555 = vld [vmem:[%s609 + $0xf0] sm:$0xf]
        %v1556 = vld [vmem:[%s609 + $0xf4] sm:$0xf]
        %v1557 = vld [vmem:[%s609 + $0xf8] sm:$0xf]
        %v1558 = vld [vmem:[%s609 + $0xfc] sm:$0xf]
        %v1567 = vunpack.c.l.b16 %v1463
        %v1568 = vunpack.c.l.b16 %v1464
        %v1569 = vunpack.c.l.b16 %v1465
        %v1570 = vunpack.c.l.b16 %v1466
        %v1571 = vunpack.c.l.b16 %v1467
        %v1572 = vunpack.c.l.b16 %v1468
        %v1573 = vunpack.c.l.b16 %v1469
        %v1574 = vunpack.c.l.b16 %v1470
        %v1575 = vpack.c.b16 %v1568, %v1567
        %v1576 = vpack.c.b16 %v1570, %v1569
        %v1577 = vpack.c.b16 %v1572, %v1571
        %v1578 = vpack.c.b16 %v1574, %v1573
        %v1599 = vunpack.c.l.b16 %v1495
        %v1600 = vunpack.c.l.b16 %v1496
        %v1601 = vunpack.c.l.b16 %v1497
        %v1602 = vunpack.c.l.b16 %v1498
        %v1603 = vunpack.c.l.b16 %v1499
        %v1604 = vunpack.c.l.b16 %v1500
        %v1605 = vunpack.c.l.b16 %v1501
        %v1606 = vunpack.c.l.b16 %v1502
        %v1607 = vunpack.c.l.b16 %v1503
        %v1608 = vunpack.c.l.b16 %v1504
        %v1609 = vunpack.c.l.b16 %v1505
        %v1610 = vunpack.c.l.b16 %v1506
        %v1611 = vunpack.c.l.b16 %v1507
        %v1612 = vunpack.c.l.b16 %v1508
        %v1613 = vunpack.c.l.b16 %v1509
        %v1614 = vunpack.c.l.b16 %v1510
        %v1615 = vpack.c.b16 %v1600, %v1599
        %v1616 = vpack.c.b16 %v1602, %v1601
        %v1617 = vpack.c.b16 %v1604, %v1603
        %v1618 = vpack.c.b16 %v1606, %v1605
        %v1619 = vpack.c.b16 %v1608, %v1607
        %v1620 = vpack.c.b16 %v1610, %v1609
        %v1621 = vpack.c.b16 %v1612, %v1611
        %v1622 = vpack.c.b16 %v1614, %v1613
        %1631 = vmatpush.bf16.msra.mxu0 %v1622
        %1632 = vmatpush.bf16.msra.mxu0 %v1621
        %1633 = vmatpush.bf16.msra.mxu0 %v1620
        %1634 = vmatpush.bf16.msra.mxu0 %v1619
        %1635 = vmatpush.bf16.msra.mxu0 %v1618
        %1636 = vmatpush.bf16.msra.mxu0 %v1617
        %1637 = vmatpush.bf16.msra.mxu0 %v1616
        %1638 = vmatpush.bf16.msra.mxu0 %v1615
        %1639 = vmatmul.bf16.gmra.mxu0 %v1575
        %v1640 = vpop.f32.mrf.mxu0
        %v1641 = vadd.f32 0.0, %v1640
        %v1642 = vpop.f32.mrf.mxu0
        %v1643 = vadd.f32 0.0, %v1642
        %1644 = vmatmul.bf16.gmra.mxu0 %v1576
        %v1645 = vpop.f32.mrf.mxu0
        %v1646 = vadd.f32 0.0, %v1645
        %v1647 = vpop.f32.mrf.mxu0
        %v1648 = vadd.f32 0.0, %v1647
        %1649 = vmatmul.bf16.gmra.mxu0 %v1577
        %v1650 = vpop.f32.mrf.mxu0
        %v1651 = vadd.f32 0.0, %v1650
        %v1652 = vpop.f32.mrf.mxu0
        %v1653 = vadd.f32 0.0, %v1652
        %1654 = vmatmul.bf16.gmra.mxu0 %v1578
        %v1655 = vpop.f32.mrf.mxu0
        %v1656 = vadd.f32 0.0, %v1655
        %v1657 = vpop.f32.mrf.mxu0
        %v1658 = vadd.f32 0.0, %v1657
        %1659 = vdwg.mxu0
        %v1668 = vunpack.c.l.b16 %v1471
        %v1669 = vunpack.c.l.b16 %v1472
        %v1670 = vunpack.c.l.b16 %v1473
        %v1671 = vunpack.c.l.b16 %v1474
        %v1672 = vunpack.c.l.b16 %v1475
        %v1673 = vunpack.c.l.b16 %v1476
        %v1674 = vunpack.c.l.b16 %v1477
        %v1675 = vunpack.c.l.b16 %v1478
        %v1676 = vpack.c.b16 %v1669, %v1668
        %v1677 = vpack.c.b16 %v1671, %v1670
        %v1678 = vpack.c.b16 %v1673, %v1672
        %v1679 = vpack.c.b16 %v1675, %v1674
        %v1700 = vunpack.c.l.b16 %v1511
        %v1701 = vunpack.c.l.b16 %v1512
        %v1702 = vunpack.c.l.b16 %v1513
        %v1703 = vunpack.c.l.b16 %v1514
        %v1704 = vunpack.c.l.b16 %v1515
        %v1705 = vunpack.c.l.b16 %v1516
        %v1706 = vunpack.c.l.b16 %v1517
        %v1707 = vunpack.c.l.b16 %v1518
        %v1708 = vunpack.c.l.b16 %v1519
        %v1709 = vunpack.c.l.b16 %v1520
        %v1710 = vunpack.c.l.b16 %v1521
        %v1711 = vunpack.c.l.b16 %v1522
        %v1712 = vunpack.c.l.b16 %v1523
        %v1713 = vunpack.c.l.b16 %v1524
        %v1714 = vunpack.c.l.b16 %v1525
        %v1715 = vunpack.c.l.b16 %v1526
        %v1716 = vpack.c.b16 %v1701, %v1700
        %v1717 = vpack.c.b16 %v1703, %v1702
        %v1718 = vpack.c.b16 %v1705, %v1704
        %v1719 = vpack.c.b16 %v1707, %v1706
        %v1720 = vpack.c.b16 %v1709, %v1708
        %v1721 = vpack.c.b16 %v1711, %v1710
        %v1722 = vpack.c.b16 %v1713, %v1712
        %v1723 = vpack.c.b16 %v1715, %v1714
        %1732 = vmatpush.bf16.msra.mxu0 %v1723
        %1733 = vmatpush.bf16.msra.mxu0 %v1722
        %1734 = vmatpush.bf16.msra.mxu0 %v1721
        %1735 = vmatpush.bf16.msra.mxu0 %v1720
        %1736 = vmatpush.bf16.msra.mxu0 %v1719
        %1737 = vmatpush.bf16.msra.mxu0 %v1718
        %1738 = vmatpush.bf16.msra.mxu0 %v1717
        %1739 = vmatpush.bf16.msra.mxu0 %v1716
        %1740 = vmatmul.bf16.gmra.mxu0 %v1676
        %v1741 = vpop.f32.mrf.mxu0
        %v1742 = vadd.f32 0.0, %v1741
        %v1743 = vpop.f32.mrf.mxu0
        %v1744 = vadd.f32 0.0, %v1743
        %1745 = vmatmul.bf16.gmra.mxu0 %v1677
        %v1746 = vpop.f32.mrf.mxu0
        %v1747 = vadd.f32 0.0, %v1746
        %v1748 = vpop.f32.mrf.mxu0
        %v1749 = vadd.f32 0.0, %v1748
        %1750 = vmatmul.bf16.gmra.mxu0 %v1678
        %v1751 = vpop.f32.mrf.mxu0
        %v1752 = vadd.f32 0.0, %v1751
        %v1753 = vpop.f32.mrf.mxu0
        %v1754 = vadd.f32 0.0, %v1753
        %1755 = vmatmul.bf16.gmra.mxu0 %v1679
        %v1756 = vpop.f32.mrf.mxu0
        %v1757 = vadd.f32 0.0, %v1756
        %v1758 = vpop.f32.mrf.mxu0
        %v1759 = vadd.f32 0.0, %v1758
        %1760 = vdwg.mxu0
        %v1769 = vunpack.c.l.b16 %v1479
        %v1770 = vunpack.c.l.b16 %v1480
        %v1771 = vunpack.c.l.b16 %v1481
        %v1772 = vunpack.c.l.b16 %v1482
        %v1773 = vunpack.c.l.b16 %v1483
        %v1774 = vunpack.c.l.b16 %v1484
        %v1775 = vunpack.c.l.b16 %v1485
        %v1776 = vunpack.c.l.b16 %v1486
        %v1777 = vpack.c.b16 %v1770, %v1769
        %v1778 = vpack.c.b16 %v1772, %v1771
        %v1779 = vpack.c.b16 %v1774, %v1773
        %v1780 = vpack.c.b16 %v1776, %v1775
        %v1801 = vunpack.c.l.b16 %v1527
        %v1802 = vunpack.c.l.b16 %v1528
        %v1803 = vunpack.c.l.b16 %v1529
        %v1804 = vunpack.c.l.b16 %v1530
        %v1805 = vunpack.c.l.b16 %v1531
        %v1806 = vunpack.c.l.b16 %v1532
        %v1807 = vunpack.c.l.b16 %v1533
        %v1808 = vunpack.c.l.b16 %v1534
        %v1809 = vunpack.c.l.b16 %v1535
        %v1810 = vunpack.c.l.b16 %v1536
        %v1811 = vunpack.c.l.b16 %v1537
        %v1812 = vunpack.c.l.b16 %v1538
        %v1813 = vunpack.c.l.b16 %v1539
        %v1814 = vunpack.c.l.b16 %v1540
        %v1815 = vunpack.c.l.b16 %v1541
        %v1816 = vunpack.c.l.b16 %v1542
        %v1817 = vpack.c.b16 %v1802, %v1801
        %v1818 = vpack.c.b16 %v1804, %v1803
        %v1819 = vpack.c.b16 %v1806, %v1805
        %v1820 = vpack.c.b16 %v1808, %v1807
        %v1821 = vpack.c.b16 %v1810, %v1809
        %v1822 = vpack.c.b16 %v1812, %v1811
        %v1823 = vpack.c.b16 %v1814, %v1813
        %v1824 = vpack.c.b16 %v1816, %v1815
        %1833 = vmatpush.bf16.msra.mxu0 %v1824
        %1834 = vmatpush.bf16.msra.mxu0 %v1823
        %1835 = vmatpush.bf16.msra.mxu0 %v1822
        %1836 = vmatpush.bf16.msra.mxu0 %v1821
        %1837 = vmatpush.bf16.msra.mxu0 %v1820
        %1838 = vmatpush.bf16.msra.mxu0 %v1819
        %1839 = vmatpush.bf16.msra.mxu0 %v1818
        %1840 = vmatpush.bf16.msra.mxu0 %v1817
        %1841 = vmatmul.bf16.gmra.mxu0 %v1777
        %v1842 = vpop.f32.mrf.mxu0
        %v1843 = vadd.f32 0.0, %v1842
        %v1844 = vpop.f32.mrf.mxu0
        %v1845 = vadd.f32 0.0, %v1844
        %1846 = vmatmul.bf16.gmra.mxu0 %v1778
        %v1847 = vpop.f32.mrf.mxu0
        %v1848 = vadd.f32 0.0, %v1847
        %v1849 = vpop.f32.mrf.mxu0
        %v1850 = vadd.f32 0.0, %v1849
        %1851 = vmatmul.bf16.gmra.mxu0 %v1779
        %v1852 = vpop.f32.mrf.mxu0
        %v1853 = vadd.f32 0.0, %v1852
        %v1854 = vpop.f32.mrf.mxu0
        %v1855 = vadd.f32 0.0, %v1854
        %1856 = vmatmul.bf16.gmra.mxu0 %v1780
        %v1857 = vpop.f32.mrf.mxu0
        %v1858 = vadd.f32 0.0, %v1857
        %v1859 = vpop.f32.mrf.mxu0
        %v1860 = vadd.f32 0.0, %v1859
        %1861 = vdwg.mxu0
        %v1870 = vunpack.c.l.b16 %v1487
        %v1871 = vunpack.c.l.b16 %v1488
        %v1872 = vunpack.c.l.b16 %v1489
        %v1873 = vunpack.c.l.b16 %v1490
        %v1874 = vunpack.c.l.b16 %v1491
        %v1875 = vunpack.c.l.b16 %v1492
        %v1876 = vunpack.c.l.b16 %v1493
        %v1877 = vunpack.c.l.b16 %v1494
        %v1878 = vpack.c.b16 %v1871, %v1870
        %v1879 = vpack.c.b16 %v1873, %v1872
        %v1880 = vpack.c.b16 %v1875, %v1874
        %v1881 = vpack.c.b16 %v1877, %v1876
        %v1902 = vunpack.c.l.b16 %v1543
        %v1903 = vunpack.c.l.b16 %v1544
        %v1904 = vunpack.c.l.b16 %v1545
        %v1905 = vunpack.c.l.b16 %v1546
        %v1906 = vunpack.c.l.b16 %v1547
        %v1907 = vunpack.c.l.b16 %v1548
        %v1908 = vunpack.c.l.b16 %v1549
        %v1909 = vunpack.c.l.b16 %v1550
        %v1910 = vunpack.c.l.b16 %v1551
        %v1911 = vunpack.c.l.b16 %v1552
        %v1912 = vunpack.c.l.b16 %v1553
        %v1913 = vunpack.c.l.b16 %v1554
        %v1914 = vunpack.c.l.b16 %v1555
        %v1915 = vunpack.c.l.b16 %v1556
        %v1916 = vunpack.c.l.b16 %v1557
        %v1917 = vunpack.c.l.b16 %v1558
        %v1918 = vpack.c.b16 %v1903, %v1902
        %v1919 = vpack.c.b16 %v1905, %v1904
        %v1920 = vpack.c.b16 %v1907, %v1906
        %v1921 = vpack.c.b16 %v1909, %v1908
        %v1922 = vpack.c.b16 %v1911, %v1910
        %v1923 = vpack.c.b16 %v1913, %v1912
        %v1924 = vpack.c.b16 %v1915, %v1914
        %v1925 = vpack.c.b16 %v1917, %v1916
        %1934 = vmatpush.bf16.msra.mxu0 %v1925
        %1935 = vmatpush.bf16.msra.mxu0 %v1924
        %1936 = vmatpush.bf16.msra.mxu0 %v1923
        %1937 = vmatpush.bf16.msra.mxu0 %v1922
        %1938 = vmatpush.bf16.msra.mxu0 %v1921
        %1939 = vmatpush.bf16.msra.mxu0 %v1920
        %1940 = vmatpush.bf16.msra.mxu0 %v1919
        %1941 = vmatpush.bf16.msra.mxu0 %v1918
        %1942 = vmatmul.bf16.gmra.mxu0 %v1878
        %v1943 = vpop.f32.mrf.mxu0
        %v1944 = vadd.f32 0.0, %v1943
        %v1945 = vpop.f32.mrf.mxu0
        %v1946 = vadd.f32 0.0, %v1945
        %1947 = vmatmul.bf16.gmra.mxu0 %v1879
        %v1948 = vpop.f32.mrf.mxu0
        %v1949 = vadd.f32 0.0, %v1948
        %v1950 = vpop.f32.mrf.mxu0
        %v1951 = vadd.f32 0.0, %v1950
        %1952 = vmatmul.bf16.gmra.mxu0 %v1880
        %v1953 = vpop.f32.mrf.mxu0
        %v1954 = vadd.f32 0.0, %v1953
        %v1955 = vpop.f32.mrf.mxu0
        %v1956 = vadd.f32 0.0, %v1955
        %1957 = vmatmul.bf16.gmra.mxu0 %v1881
        %v1958 = vpop.f32.mrf.mxu0
        %v1959 = vadd.f32 0.0, %v1958
        %v1960 = vpop.f32.mrf.mxu0
        %v1961 = vadd.f32 0.0, %v1960
        %1962 = vdwg.mxu0
        %v1963 = vrcp.pop %v1400
        %v1964 = vrcp.pop %v1402
        %v1965 = vrcp.pop %v1404
        %v1966 = vrcp.pop %v1406
        %v1967 = vrcp.pop %v1408
        %v1968 = vrcp.pop %v1410
        %v1969 = vrcp.pop %v1412
        %v1970 = vrcp.pop %v1414
        %v1971 = vrcp.pop %v1416
        %v1972 = vrcp.pop %v1418
        %v1973 = vrcp.pop %v1420
        %v1974 = vrcp.pop %v1422
        %v1975 = vrcp.pop %v1424
        %v1976 = vrcp.pop %v1426
        %v1977 = vrcp.pop %v1428
        %v1978 = vrcp.pop %v1430
        %v1979 = vrcp.pop %v1432
        %v1980 = vrcp.pop %v1434
        %v1981 = vrcp.pop %v1436
        %v1982 = vrcp.pop %v1438
        %v1983 = vrcp.pop %v1440
        %v1984 = vrcp.pop %v1442
        %v1985 = vrcp.pop %v1444
        %v1986 = vrcp.pop %v1446
        %v1987 = vrcp.pop %v1448
        %v1988 = vrcp.pop %v1450
        %v1989 = vrcp.pop %v1452
        %v1990 = vrcp.pop %v1454
        %v1991 = vrcp.pop %v1456
        %v1992 = vrcp.pop %v1458
        %v1993 = vrcp.pop %v1460
        %v1994 = vrcp.pop %v1462
        %v1995 = vmul.f32 %v1641, %v1963
        %v1996 = vmul.f32 %v1643, %v1964
        %v1997 = vmul.f32 %v1646, %v1965
        %v1998 = vmul.f32 %v1648, %v1966
        %v1999 = vmul.f32 %v1651, %v1967
        %v2000 = vmul.f32 %v1653, %v1968
        %v2001 = vmul.f32 %v1656, %v1969
        %v2002 = vmul.f32 %v1658, %v1970
        %v2003 = vmul.f32 %v1742, %v1971
        %v2004 = vmul.f32 %v1744, %v1972
        %v2005 = vmul.f32 %v1747, %v1973
        %v2006 = vmul.f32 %v1749, %v1974
        %v2007 = vmul.f32 %v1752, %v1975
        %v2008 = vmul.f32 %v1754, %v1976
        %v2009 = vmul.f32 %v1757, %v1977
        %v2010 = vmul.f32 %v1759, %v1978
        %v2011 = vmul.f32 %v1843, %v1979
        %v2012 = vmul.f32 %v1845, %v1980
        %v2013 = vmul.f32 %v1848, %v1981
        %v2014 = vmul.f32 %v1850, %v1982
        %v2015 = vmul.f32 %v1853, %v1983
        %v2016 = vmul.f32 %v1855, %v1984
        %v2017 = vmul.f32 %v1858, %v1985
        %v2018 = vmul.f32 %v1860, %v1986
        %v2019 = vmul.f32 %v1944, %v1987
        %v2020 = vmul.f32 %v1946, %v1988
        %v2021 = vmul.f32 %v1949, %v1989
        %v2022 = vmul.f32 %v1951, %v1990
        %v2023 = vmul.f32 %v1954, %v1991
        %v2024 = vmul.f32 %v1956, %v1992
        %v2025 = vmul.f32 %v1959, %v1993
        %v2026 = vmul.f32 %v1961, %v1994
        %v2027 = vpack.c.bf16 %v1995, %v1995
        %v2028 = vpack.c.bf16 %v1996, %v1996
        %v2029 = vpack.c.bf16 %v1997, %v1997
        %v2030 = vpack.c.bf16 %v1998, %v1998
        %v2031 = vpack.c.bf16 %v1999, %v1999
        %v2032 = vpack.c.bf16 %v2000, %v2000
        %v2033 = vpack.c.bf16 %v2001, %v2001
        %v2034 = vpack.c.bf16 %v2002, %v2002
        %v2035 = vpack.c.bf16 %v2003, %v2003
        %v2036 = vpack.c.bf16 %v2004, %v2004
        %v2037 = vpack.c.bf16 %v2005, %v2005
        %v2038 = vpack.c.bf16 %v2006, %v2006
        %v2039 = vpack.c.bf16 %v2007, %v2007
        %v2040 = vpack.c.bf16 %v2008, %v2008
        %v2041 = vpack.c.bf16 %v2009, %v2009
        %v2042 = vpack.c.bf16 %v2010, %v2010
        %v2043 = vpack.c.bf16 %v2011, %v2011
        %v2044 = vpack.c.bf16 %v2012, %v2012
        %v2045 = vpack.c.bf16 %v2013, %v2013
        %v2046 = vpack.c.bf16 %v2014, %v2014
        %v2047 = vpack.c.bf16 %v2015, %v2015
        %v2048 = vpack.c.bf16 %v2016, %v2016
        %v2049 = vpack.c.bf16 %v2017, %v2017
        %v2050 = vpack.c.bf16 %v2018, %v2018
        %v2051 = vpack.c.bf16 %v2019, %v2019
        %v2052 = vpack.c.bf16 %v2020, %v2020
        %v2053 = vpack.c.bf16 %v2021, %v2021
        %v2054 = vpack.c.bf16 %v2022, %v2022
        %v2055 = vpack.c.bf16 %v2023, %v2023
        %v2056 = vpack.c.bf16 %v2024, %v2024
        %v2057 = vpack.c.bf16 %v2025, %v2025
        %v2058 = vpack.c.bf16 %v2026, %v2026
        %v2059 = vld [vmem:[%s4] sm:$0xf]
        %v2060 = vld [vmem:[%s4 + $0x4] sm:$0xf]
        %v2061 = vld [vmem:[%s4 + $0x8] sm:$0xf]
        %v2062 = vld [vmem:[%s4 + $0xc] sm:$0xf]
        %v2063 = vld [vmem:[%s4 + $0x10] sm:$0xf]
        %v2064 = vld [vmem:[%s4 + $0x14] sm:$0xf]
        %v2065 = vld [vmem:[%s4 + $0x18] sm:$0xf]
        %v2066 = vld [vmem:[%s4 + $0x1c] sm:$0xf]
        %v2067 = vld [vmem:[%s4 + $0x20] sm:$0xf]
        %v2068 = vld [vmem:[%s4 + $0x24] sm:$0xf]
        %v2069 = vld [vmem:[%s4 + $0x28] sm:$0xf]
        %v2070 = vld [vmem:[%s4 + $0x2c] sm:$0xf]
        %v2071 = vld [vmem:[%s4 + $0x30] sm:$0xf]
        %v2072 = vld [vmem:[%s4 + $0x34] sm:$0xf]
        %v2073 = vld [vmem:[%s4 + $0x38] sm:$0xf]
        %v2074 = vld [vmem:[%s4 + $0x3c] sm:$0xf]
        %v2083 = vunpack.c.l.b16 %v2027
        %v2084 = vunpack.c.l.b16 %v2028
        %v2085 = vunpack.c.l.b16 %v2029
        %v2086 = vunpack.c.l.b16 %v2030
        %v2087 = vunpack.c.l.b16 %v2031
        %v2088 = vunpack.c.l.b16 %v2032
        %v2089 = vunpack.c.l.b16 %v2033
        %v2090 = vunpack.c.l.b16 %v2034
        %v2091 = vpack.c.b16 %v2084, %v2083
        %v2092 = vpack.c.b16 %v2086, %v2085
        %v2093 = vpack.c.b16 %v2088, %v2087
        %v2094 = vpack.c.b16 %v2090, %v2089
        %v2099 = vunpack.c.l.b16 %v2059
        %v2100 = vunpack.c.l.b16 %v2060
        %v2101 = vunpack.c.l.b16 %v2061
        %v2102 = vunpack.c.l.b16 %v2062
        %v2103 = vpack.c.b16 %v2100, %v2099
        %v2104 = vpack.c.b16 %v2102, %v2101
        %v2108 = vsel %vm798, %v2091, 0
        %v2111 = vsel %vm798, %v2092, 0
        %v2114 = vsel %vm798, %v2093, 0
        %v2117 = vsel %vm798, %v2094, 0
        %2119 = vmatpush.bf16.msra.mxu0 0
        %2120 = vmatpush.bf16.msra.mxu0 0
        %2121 = vmatpush.bf16.msra.mxu0 0
        %2122 = vmatpush.bf16.msra.mxu0 0
        %2123 = vmatpush.bf16.msra.mxu0 0
        %2124 = vmatpush.bf16.msra.mxu0 0
        %2125 = vmatpush.bf16.msra.mxu0 %v2104
        %2126 = vmatpush.bf16.msra.mxu0 %v2103
        %2127 = vmatmul.bf16.gmra.mxu0 %v2108
        %v2128 = vpop.f32.mrf.mxu0
        %v2129 = vadd.f32 0.0, %v2128
        %v2130 = vpop.f32.mrf.mxu0
        %v2131 = vadd.f32 0.0, %v2130
        %2132 = vmatmul.bf16.gmra.mxu0 %v2111
        %v2133 = vpop.f32.mrf.mxu0
        %v2134 = vadd.f32 0.0, %v2133
        %v2135 = vpop.f32.mrf.mxu0
        %v2136 = vadd.f32 0.0, %v2135
        %2137 = vmatmul.bf16.gmra.mxu0 %v2114
        %v2138 = vpop.f32.mrf.mxu0
        %v2139 = vadd.f32 0.0, %v2138
        %v2140 = vpop.f32.mrf.mxu0
        %v2141 = vadd.f32 0.0, %v2140
        %2142 = vmatmul.bf16.gmra.mxu0 %v2117
        %v2143 = vpop.f32.mrf.mxu0
        %v2144 = vadd.f32 0.0, %v2143
        %v2145 = vpop.f32.mrf.mxu0
        %v2146 = vadd.f32 0.0, %v2145
        %2147 = vdwg.mxu0
        %v2156 = vunpack.c.l.b16 %v2035
        %v2157 = vunpack.c.l.b16 %v2036
        %v2158 = vunpack.c.l.b16 %v2037
        %v2159 = vunpack.c.l.b16 %v2038
        %v2160 = vunpack.c.l.b16 %v2039
        %v2161 = vunpack.c.l.b16 %v2040
        %v2162 = vunpack.c.l.b16 %v2041
        %v2163 = vunpack.c.l.b16 %v2042
        %v2164 = vpack.c.b16 %v2157, %v2156
        %v2165 = vpack.c.b16 %v2159, %v2158
        %v2166 = vpack.c.b16 %v2161, %v2160
        %v2167 = vpack.c.b16 %v2163, %v2162
        %v2172 = vunpack.c.l.b16 %v2063
        %v2173 = vunpack.c.l.b16 %v2064
        %v2174 = vunpack.c.l.b16 %v2065
        %v2175 = vunpack.c.l.b16 %v2066
        %v2176 = vpack.c.b16 %v2173, %v2172
        %v2177 = vpack.c.b16 %v2175, %v2174
        %v2181 = vsel %vm798, %v2164, 0
        %v2184 = vsel %vm798, %v2165, 0
        %v2187 = vsel %vm798, %v2166, 0
        %v2190 = vsel %vm798, %v2167, 0
        %2192 = vmatpush.bf16.msra.mxu0 0
        %2193 = vmatpush.bf16.msra.mxu0 0
        %2194 = vmatpush.bf16.msra.mxu0 0
        %2195 = vmatpush.bf16.msra.mxu0 0
        %2196 = vmatpush.bf16.msra.mxu0 0
        %2197 = vmatpush.bf16.msra.mxu0 0
        %2198 = vmatpush.bf16.msra.mxu0 %v2177
        %2199 = vmatpush.bf16.msra.mxu0 %v2176
        %2200 = vmatmul.bf16.gmra.mxu0 %v2181
        %v2201 = vpop.f32.mrf.mxu0
        %v2202 = vadd.f32 0.0, %v2201
        %v2203 = vpop.f32.mrf.mxu0
        %v2204 = vadd.f32 0.0, %v2203
        %2205 = vmatmul.bf16.gmra.mxu0 %v2184
        %v2206 = vpop.f32.mrf.mxu0
        %v2207 = vadd.f32 0.0, %v2206
        %v2208 = vpop.f32.mrf.mxu0
        %v2209 = vadd.f32 0.0, %v2208
        %2210 = vmatmul.bf16.gmra.mxu0 %v2187
        %v2211 = vpop.f32.mrf.mxu0
        %v2212 = vadd.f32 0.0, %v2211
        %v2213 = vpop.f32.mrf.mxu0
        %v2214 = vadd.f32 0.0, %v2213
        %2215 = vmatmul.bf16.gmra.mxu0 %v2190
        %v2216 = vpop.f32.mrf.mxu0
        %v2217 = vadd.f32 0.0, %v2216
        %v2218 = vpop.f32.mrf.mxu0
        %v2219 = vadd.f32 0.0, %v2218
        %2220 = vdwg.mxu0
        %v2229 = vunpack.c.l.b16 %v2043
        %v2230 = vunpack.c.l.b16 %v2044
        %v2231 = vunpack.c.l.b16 %v2045
        %v2232 = vunpack.c.l.b16 %v2046
        %v2233 = vunpack.c.l.b16 %v2047
        %v2234 = vunpack.c.l.b16 %v2048
        %v2235 = vunpack.c.l.b16 %v2049
        %v2236 = vunpack.c.l.b16 %v2050
        %v2237 = vpack.c.b16 %v2230, %v2229
        %v2238 = vpack.c.b16 %v2232, %v2231
        %v2239 = vpack.c.b16 %v2234, %v2233
        %v2240 = vpack.c.b16 %v2236, %v2235
        %v2245 = vunpack.c.l.b16 %v2067
        %v2246 = vunpack.c.l.b16 %v2068
        %v2247 = vunpack.c.l.b16 %v2069
        %v2248 = vunpack.c.l.b16 %v2070
        %v2249 = vpack.c.b16 %v2246, %v2245
        %v2250 = vpack.c.b16 %v2248, %v2247
        %v2254 = vsel %vm798, %v2237, 0
        %v2257 = vsel %vm798, %v2238, 0
        %v2260 = vsel %vm798, %v2239, 0
        %v2263 = vsel %vm798, %v2240, 0
        %2265 = vmatpush.bf16.msra.mxu0 0
        %2266 = vmatpush.bf16.msra.mxu0 0
        %2267 = vmatpush.bf16.msra.mxu0 0
        %2268 = vmatpush.bf16.msra.mxu0 0
        %2269 = vmatpush.bf16.msra.mxu0 0
        %2270 = vmatpush.bf16.msra.mxu0 0
        %2271 = vmatpush.bf16.msra.mxu0 %v2250
        %2272 = vmatpush.bf16.msra.mxu0 %v2249
        %2273 = vmatmul.bf16.gmra.mxu0 %v2254
        %v2274 = vpop.f32.mrf.mxu0
        %v2275 = vadd.f32 0.0, %v2274
        %v2276 = vpop.f32.mrf.mxu0
        %v2277 = vadd.f32 0.0, %v2276
        %2278 = vmatmul.bf16.gmra.mxu0 %v2257
        %v2279 = vpop.f32.mrf.mxu0
        %v2280 = vadd.f32 0.0, %v2279
        %v2281 = vpop.f32.mrf.mxu0
        %v2282 = vadd.f32 0.0, %v2281
        %2283 = vmatmul.bf16.gmra.mxu0 %v2260
        %v2284 = vpop.f32.mrf.mxu0
        %v2285 = vadd.f32 0.0, %v2284
        %v2286 = vpop.f32.mrf.mxu0
        %v2287 = vadd.f32 0.0, %v2286
        %2288 = vmatmul.bf16.gmra.mxu0 %v2263
        %v2289 = vpop.f32.mrf.mxu0
        %v2290 = vadd.f32 0.0, %v2289
        %v2291 = vpop.f32.mrf.mxu0
        %v2292 = vadd.f32 0.0, %v2291
        %2293 = vdwg.mxu0
        %v2302 = vunpack.c.l.b16 %v2051
        %v2303 = vunpack.c.l.b16 %v2052
        %v2304 = vunpack.c.l.b16 %v2053
        %v2305 = vunpack.c.l.b16 %v2054
        %v2306 = vunpack.c.l.b16 %v2055
        %v2307 = vunpack.c.l.b16 %v2056
        %v2308 = vunpack.c.l.b16 %v2057
        %v2309 = vunpack.c.l.b16 %v2058
        %v2310 = vpack.c.b16 %v2303, %v2302
        %v2311 = vpack.c.b16 %v2305, %v2304
        %v2312 = vpack.c.b16 %v2307, %v2306
        %v2313 = vpack.c.b16 %v2309, %v2308
        %v2318 = vunpack.c.l.b16 %v2071
        %v2319 = vunpack.c.l.b16 %v2072
        %v2320 = vunpack.c.l.b16 %v2073
        %v2321 = vunpack.c.l.b16 %v2074
        %v2322 = vpack.c.b16 %v2319, %v2318
        %v2323 = vpack.c.b16 %v2321, %v2320
        %v2327 = vsel %vm798, %v2310, 0
        %v2330 = vsel %vm798, %v2311, 0
        %v2333 = vsel %vm798, %v2312, 0
        %v2336 = vsel %vm798, %v2313, 0
        %2338 = vmatpush.bf16.msra.mxu0 0
        %2339 = vmatpush.bf16.msra.mxu0 0
        %2340 = vmatpush.bf16.msra.mxu0 0
        %2341 = vmatpush.bf16.msra.mxu0 0
        %2342 = vmatpush.bf16.msra.mxu0 0
        %2343 = vmatpush.bf16.msra.mxu0 0
        %2344 = vmatpush.bf16.msra.mxu0 %v2323
        %2345 = vmatpush.bf16.msra.mxu0 %v2322
        %2346 = vmatmul.bf16.gmra.mxu0 %v2327
        %v2347 = vpop.f32.mrf.mxu0
        %v2348 = vadd.f32 0.0, %v2347
        %v2349 = vpop.f32.mrf.mxu0
        %v2350 = vadd.f32 0.0, %v2349
        %2351 = vmatmul.bf16.gmra.mxu0 %v2330
        %v2352 = vpop.f32.mrf.mxu0
        %v2353 = vadd.f32 0.0, %v2352
        %v2354 = vpop.f32.mrf.mxu0
        %v2355 = vadd.f32 0.0, %v2354
        %2356 = vmatmul.bf16.gmra.mxu0 %v2333
        %v2357 = vpop.f32.mrf.mxu0
        %v2358 = vadd.f32 0.0, %v2357
        %v2359 = vpop.f32.mrf.mxu0
        %v2360 = vadd.f32 0.0, %v2359
        %2361 = vmatmul.bf16.gmra.mxu0 %v2336
        %v2362 = vpop.f32.mrf.mxu0
        %v2363 = vadd.f32 0.0, %v2362
        %v2364 = vpop.f32.mrf.mxu0
        %v2365 = vadd.f32 0.0, %v2364
        %2366 = vdwg.mxu0
        %v2367 = vadd.f32 %v2129, %v2202
        %v2368 = vadd.f32 %v2367, %v2275
        %v2369 = vadd.f32 %v2368, %v2348
        %v2370 = vadd.f32 %v2131, %v2204
        %v2371 = vadd.f32 %v2370, %v2277
        %v2372 = vadd.f32 %v2371, %v2350
        %v2373 = vadd.f32 %v2134, %v2207
        %v2374 = vadd.f32 %v2373, %v2280
        %v2375 = vadd.f32 %v2374, %v2353
        %v2376 = vadd.f32 %v2136, %v2209
        %v2377 = vadd.f32 %v2376, %v2282
        %v2378 = vadd.f32 %v2377, %v2355
        %v2379 = vadd.f32 %v2139, %v2212
        %v2380 = vadd.f32 %v2379, %v2285
        %v2381 = vadd.f32 %v2380, %v2358
        %v2382 = vadd.f32 %v2141, %v2214
        %v2383 = vadd.f32 %v2382, %v2287
        %v2384 = vadd.f32 %v2383, %v2360
        %v2385 = vadd.f32 %v2144, %v2217
        %v2386 = vadd.f32 %v2385, %v2290
        %v2387 = vadd.f32 %v2386, %v2363
        %v2388 = vadd.f32 %v2146, %v2219
        %v2389 = vadd.f32 %v2388, %v2292
        %v2390 = vadd.f32 %v2389, %v2365
        %v2391 = vld [vmem:[%s5] sm:$0x1]
        %v2393 = vperm.slane %v2391, 0
        %v2395 = vadd.f32 %v2369, %v2393
        %v2396 = vadd.f32 %v2372, %v2393
        %v2397 = vadd.f32 %v2375, %v2393
        %v2398 = vadd.f32 %v2378, %v2393
        %v2399 = vadd.f32 %v2381, %v2393
        %v2400 = vadd.f32 %v2384, %v2393
        %v2401 = vadd.f32 %v2387, %v2393
        %v2402 = vadd.f32 %v2390, %v2393
        %v2403 = vld [vmem:[%s617] sm:$0xff]
        %v2404 = vld [vmem:[%s617 + $0x8] sm:$0xff]
        %v2405 = vld [vmem:[%s617 + $0x10] sm:$0xff]
        %v2406 = vld [vmem:[%s617 + $0x18] sm:$0xff]
        %v2407 = vld [vmem:[%s617 + $0x20] sm:$0xff]
        %v2408 = vld [vmem:[%s617 + $0x28] sm:$0xff]
        %v2409 = vld [vmem:[%s617 + $0x30] sm:$0xff]
        %v2410 = vld [vmem:[%s617 + $0x38] sm:$0xff]
        %v2411 = vadd.f32 %v2403, %v2395
        %v2412 = vadd.f32 %v2404, %v2396
        %v2413 = vadd.f32 %v2405, %v2397
        %v2414 = vadd.f32 %v2406, %v2398
        %v2415 = vadd.f32 %v2407, %v2399
        %v2416 = vadd.f32 %v2408, %v2400
        %v2417 = vadd.f32 %v2409, %v2401
        %v2418 = vadd.f32 %v2410, %v2402
        %2419 = vst [vmem:[%s627] sm:$0xff] %v2411
        %2420 = vst [vmem:[%s627 + $0x8] sm:$0xff] %v2412
        %2421 = vst [vmem:[%s627 + $0x10] sm:$0xff] %v2413
        %2422 = vst [vmem:[%s627 + $0x18] sm:$0xff] %v2414
        %2423 = vst [vmem:[%s627 + $0x20] sm:$0xff] %v2415
        %2424 = vst [vmem:[%s627 + $0x28] sm:$0xff] %v2416
        %2425 = vst [vmem:[%s627 + $0x30] sm:$0xff] %v2417
        %2426 = vst [vmem:[%s627 + $0x38] sm:$0xff] %v2418
        %v2427 = vld [vmem:[%s6] sm:$0x1]
        %v2428 = vld [vmem:[%s7] sm:$0x1]
        %2429 = vadd.xlane.f32.xlu0 %v2411
        %v2430 = vpop.xlane.xlu0 %2429
        %2431 = vadd.xlane.f32.xlu0 %v2412
        %v2432 = vpop.xlane.xlu0 %2431
        %2433 = vadd.xlane.f32.xlu0 %v2413
        %v2434 = vpop.xlane.xlu0 %2433
        %2435 = vadd.xlane.f32.xlu0 %v2414
        %v2436 = vpop.xlane.xlu0 %2435
        %2437 = vadd.xlane.f32.xlu0 %v2415
        %v2438 = vpop.xlane.xlu0 %2437
        %2439 = vadd.xlane.f32.xlu0 %v2416
        %v2440 = vpop.xlane.xlu0 %2439
        %2441 = vadd.xlane.f32.xlu0 %v2417
        %v2442 = vpop.xlane.xlu0 %2441
        %2443 = vadd.xlane.f32.xlu0 %v2418
        %v2444 = vpop.xlane.xlu0 %2443
        %v2445 = vrcp.pop 128.0
        %v2446 = vmul.f32 128.0, %v2445
        %v2447 = vsub.f32 1.0, %v2446
        %v2448 = vmul.f32 %v2445, %v2447
        %v2449 = vadd.f32 %v2445, %v2448
        %vm2450 = vweird.f32 %v2445
        %v2451 = vsel %vm2450, %v2445, %v2449
        %v2452 = vmul.f32 %v2430, %v2451
        %v2453 = vmul.f32 %v2432, %v2451
        %v2454 = vmul.f32 %v2434, %v2451
        %v2455 = vmul.f32 %v2436, %v2451
        %v2456 = vmul.f32 %v2438, %v2451
        %v2457 = vmul.f32 %v2440, %v2451
        %v2458 = vmul.f32 %v2442, %v2451
        %v2459 = vmul.f32 %v2444, %v2451
        %v2460 = vsub.f32 %v2411, %v2452
        %v2461 = vsub.f32 %v2412, %v2453
        %v2462 = vsub.f32 %v2413, %v2454
        %v2463 = vsub.f32 %v2414, %v2455
        %v2464 = vsub.f32 %v2415, %v2456
        %v2465 = vsub.f32 %v2416, %v2457
        %v2466 = vsub.f32 %v2417, %v2458
        %v2467 = vsub.f32 %v2418, %v2459
        %v2468 = vmul.f32 %v2460, %v2460
        %v2469 = vmul.f32 %v2461, %v2461
        %v2470 = vmul.f32 %v2462, %v2462
        %v2471 = vmul.f32 %v2463, %v2463
        %v2472 = vmul.f32 %v2464, %v2464
        %v2473 = vmul.f32 %v2465, %v2465
        %v2474 = vmul.f32 %v2466, %v2466
        %v2475 = vmul.f32 %v2467, %v2467
        %2476 = vadd.xlane.f32.xlu0 %v2468
        %v2477 = vpop.xlane.xlu0 %2476
        %2478 = vadd.xlane.f32.xlu0 %v2469
        %v2479 = vpop.xlane.xlu0 %2478
        %2480 = vadd.xlane.f32.xlu0 %v2470
        %v2481 = vpop.xlane.xlu0 %2480
        %2482 = vadd.xlane.f32.xlu0 %v2471
        %v2483 = vpop.xlane.xlu0 %2482
        %2484 = vadd.xlane.f32.xlu0 %v2472
        %v2485 = vpop.xlane.xlu0 %2484
        %2486 = vadd.xlane.f32.xlu0 %v2473
        %v2487 = vpop.xlane.xlu0 %2486
        %2488 = vadd.xlane.f32.xlu0 %v2474
        %v2489 = vpop.xlane.xlu0 %2488
        %2490 = vadd.xlane.f32.xlu0 %v2475
        %v2491 = vpop.xlane.xlu0 %2490
        %v2492 = vmul.f32 %v2477, %v2451
        %v2493 = vmul.f32 %v2479, %v2451
        %v2494 = vmul.f32 %v2481, %v2451
        %v2495 = vmul.f32 %v2483, %v2451
        %v2496 = vmul.f32 %v2485, %v2451
        %v2497 = vmul.f32 %v2487, %v2451
        %v2498 = vmul.f32 %v2489, %v2451
        %v2499 = vmul.f32 %v2491, %v2451
        %v2500 = vadd.f32 %v2492, 1e-05
        %v2501 = vadd.f32 %v2493, 1e-05
        %v2502 = vadd.f32 %v2494, 1e-05
        %v2503 = vadd.f32 %v2495, 1e-05
        %v2504 = vadd.f32 %v2496, 1e-05
        %v2505 = vadd.f32 %v2497, 1e-05
        %v2506 = vadd.f32 %v2498, 1e-05
        %v2507 = vadd.f32 %v2499, 1e-05
        %v2508 = vrsqrt.pop %v2500
        %v2509 = vmul.f32 %v2508, %v2500
        %v2510 = vmul.f32 %v2509, %v2508
        %v2511 = vmul.f32 0.5, %v2510
        %v2512 = vsub.f32 1.5, %v2511
        %v2513 = vmul.f32 %v2508, %v2512
        %vm2514 = vweird.f32 %v2500
        %vm2515 = vweird.f32 %v2508
        %vm2516 = vmor %vm2514, %vm2515
        %v2517 = vsel %vm2516, %v2508, %v2513
        %v2518 = vrsqrt.pop %v2501
        %v2519 = vmul.f32 %v2518, %v2501
        %v2520 = vmul.f32 %v2519, %v2518
        %v2521 = vmul.f32 0.5, %v2520
        %v2522 = vsub.f32 1.5, %v2521
        %v2523 = vmul.f32 %v2518, %v2522
        %vm2524 = vweird.f32 %v2501
        %vm2525 = vweird.f32 %v2518
        %vm2526 = vmor %vm2524, %vm2525
        %v2527 = vsel %vm2526, %v2518, %v2523
        %v2528 = vrsqrt.pop %v2502
        %v2529 = vmul.f32 %v2528, %v2502
        %v2530 = vmul.f32 %v2529, %v2528
        %v2531 = vmul.f32 0.5, %v2530
        %v2532 = vsub.f32 1.5, %v2531
        %v2533 = vmul.f32 %v2528, %v2532
        %vm2534 = vweird.f32 %v2502
        %vm2535 = vweird.f32 %v2528
        %vm2536 = vmor %vm2534, %vm2535
        %v2537 = vsel %vm2536, %v2528, %v2533
        %v2538 = vrsqrt.pop %v2503
        %v2539 = vmul.f32 %v2538, %v2503
        %v2540 = vmul.f32 %v2539, %v2538
        %v2541 = vmul.f32 0.5, %v2540
        %v2542 = vsub.f32 1.5, %v2541
        %v2543 = vmul.f32 %v2538, %v2542
        %vm2544 = vweird.f32 %v2503
        %vm2545 = vweird.f32 %v2538
        %vm2546 = vmor %vm2544, %vm2545
        %v2547 = vsel %vm2546, %v2538, %v2543
        %v2548 = vrsqrt.pop %v2504
        %v2549 = vmul.f32 %v2548, %v2504
        %v2550 = vmul.f32 %v2549, %v2548
        %v2551 = vmul.f32 0.5, %v2550
        %v2552 = vsub.f32 1.5, %v2551
        %v2553 = vmul.f32 %v2548, %v2552
        %vm2554 = vweird.f32 %v2504
        %vm2555 = vweird.f32 %v2548
        %vm2556 = vmor %vm2554, %vm2555
        %v2557 = vsel %vm2556, %v2548, %v2553
        %v2558 = vrsqrt.pop %v2505
        %v2559 = vmul.f32 %v2558, %v2505
        %v2560 = vmul.f32 %v2559, %v2558
        %v2561 = vmul.f32 0.5, %v2560
        %v2562 = vsub.f32 1.5, %v2561
        %v2563 = vmul.f32 %v2558, %v2562
        %vm2564 = vweird.f32 %v2505
        %vm2565 = vweird.f32 %v2558
        %vm2566 = vmor %vm2564, %vm2565
        %v2567 = vsel %vm2566, %v2558, %v2563
        %v2568 = vrsqrt.pop %v2506
        %v2569 = vmul.f32 %v2568, %v2506
        %v2570 = vmul.f32 %v2569, %v2568
        %v2571 = vmul.f32 0.5, %v2570
        %v2572 = vsub.f32 1.5, %v2571
        %v2573 = vmul.f32 %v2568, %v2572
        %vm2574 = vweird.f32 %v2506
        %vm2575 = vweird.f32 %v2568
        %vm2576 = vmor %vm2574, %vm2575
        %v2577 = vsel %vm2576, %v2568, %v2573
        %v2578 = vrsqrt.pop %v2507
        %v2579 = vmul.f32 %v2578, %v2507
        %v2580 = vmul.f32 %v2579, %v2578
        %v2581 = vmul.f32 0.5, %v2580
        %v2582 = vsub.f32 1.5, %v2581
        %v2583 = vmul.f32 %v2578, %v2582
        %vm2584 = vweird.f32 %v2507
        %vm2585 = vweird.f32 %v2578
        %vm2586 = vmor %vm2584, %vm2585
        %v2587 = vsel %vm2586, %v2578, %v2583
        %v2588 = vmul.f32 %v2460, %v2517
        %v2589 = vmul.f32 %v2461, %v2527
        %v2590 = vmul.f32 %v2462, %v2537
        %v2591 = vmul.f32 %v2463, %v2547
        %v2592 = vmul.f32 %v2464, %v2557
        %v2593 = vmul.f32 %v2465, %v2567
        %v2594 = vmul.f32 %v2466, %v2577
        %v2595 = vmul.f32 %v2467, %v2587
        %v2597 = vperm.slane %v2427, 0
        %v2599 = vmul.f32 %v2588, %v2597
        %v2600 = vmul.f32 %v2589, %v2597
        %v2601 = vmul.f32 %v2590, %v2597
        %v2602 = vmul.f32 %v2591, %v2597
        %v2603 = vmul.f32 %v2592, %v2597
        %v2604 = vmul.f32 %v2593, %v2597
        %v2605 = vmul.f32 %v2594, %v2597
        %v2606 = vmul.f32 %v2595, %v2597
        %v2608 = vperm.slane %v2428, 0
        %v2610 = vadd.f32 %v2599, %v2608
        %v2611 = vadd.f32 %v2600, %v2608
        %v2612 = vadd.f32 %v2601, %v2608
        %v2613 = vadd.f32 %v2602, %v2608
        %v2614 = vadd.f32 %v2603, %v2608
        %v2615 = vadd.f32 %v2604, %v2608
        %v2616 = vadd.f32 %v2605, %v2608
        %v2617 = vadd.f32 %v2606, %v2608
        %v2618 = vpack.c.bf16 %v2610, %v2610
        %v2619 = vpack.c.bf16 %v2611, %v2611
        %v2620 = vpack.c.bf16 %v2612, %v2612
        %v2621 = vpack.c.bf16 %v2613, %v2613
        %v2622 = vpack.c.bf16 %v2614, %v2614
        %v2623 = vpack.c.bf16 %v2615, %v2615
        %v2624 = vpack.c.bf16 %v2616, %v2616
        %v2625 = vpack.c.bf16 %v2617, %v2617
        %2626 = vst [vmem:[%s637] sm:$0xf] %v2618
        %2627 = vst [vmem:[%s637 + $0x4] sm:$0xf] %v2619
        %2628 = vst [vmem:[%s637 + $0x8] sm:$0xf] %v2620
        %2629 = vst [vmem:[%s637 + $0xc] sm:$0xf] %v2621
        %2630 = vst [vmem:[%s637 + $0x10] sm:$0xf] %v2622
        %2631 = vst [vmem:[%s637 + $0x14] sm:$0xf] %v2623
        %2632 = vst [vmem:[%s637 + $0x18] sm:$0xf] %v2624
        %2633 = vst [vmem:[%s637 + $0x1c] sm:$0xf] %v2625
        %s2634 = smul.u32 %s25, 2
        %s2635 = sadd.s32 %s2634, %s26
        %s2636 = smul.u32 8, %s2635
        %p2637 = scmp.lt.s32.totalorder %s2636, 31
        %s2638 = scalar_select %p2637, %s2636, 31
        %s2639 = smul.addr %s2638, 8
        %s2640 = scalar_lea.vmem %s8, %s2639
        %s2641 = smul.u32 %s25, 2
        %s2642 = sadd.s32 %s2641, %s26
        %s2643 = smul.u32 8, %s2642
        %p2644 = scmp.lt.s32.totalorder %s2643, 31
        %s2645 = scalar_select %p2644, %s2643, 31
        %s2646 = smul.addr %s2645, 4
        %s2647 = scalar_lea.vmem %s9, %s2646
        // Predicated region
        $region94: #{flash_attention_block.4} parent=88 // pred_check
          %p2648 = pneg %p249
        $region95: #{flash_attention_block.4} parent=88 // pred_check_branch
          %2650 = sbr.rel (%p2648) target = $region97
        $region96: #{flash_attention_block.4} parent=88 // pred_region
          %s2651 = smul.u32 %s25, 2
          %s2652 = sadd.s32 %s2651, %s26
          %s2653 = smul.u32 8, %s2652
        $region97: #{flash_attention_block.4} parent=88 // pred_fallthru
          _
        // Predicated region
        $region98: #{flash_attention_block.4} parent=88 // pred_check
          %p2654 = pneg %p279
        $region99: #{flash_attention_block.4} parent=88 // pred_check_branch
          %2656 = sbr.rel (%p2654) target = $region101
        $region100: #{flash_attention_block.4} parent=88 // pred_region
          %s2657 = smul.u32 %s25, 2
          %s2658 = sadd.s32 %s2657, %s26
          %s2659 = smul.u32 8, %s2658
        $region101: #{flash_attention_block.4} parent=88 // pred_fallthru
          _
      $region89: #{flash_attention_block.4} parent=5 // pred_fallthru
        _
      %p2660 = scmp.le.s32.totalorder 2, %s16
      // Predicated region
      $region102: #{flash_attention_block.4} parent=5 // pred_check
        %p2661 = pneg %p2660
      $region103: #{flash_attention_block.4} parent=5 // pred_check_branch
        %2663 = sbr.rel (%p2661) target = $region105
      $region104: #{flash_attention_block.4} parent=5 // pred_region
        %s2664 = ssub.s32 %s16, 2
        // Predicated region
        $region106: #{flash_attention_block.4} parent=104 // pred_check
          %p2665 = pneg %p255
        $region107: #{flash_attention_block.4} parent=104 // pred_check_branch
          %2667 = sbr.rel (%p2665) target = $region109
        $region108: #{flash_attention_block.4} parent=104 // pred_region
          %s2668 = smul.u32 %s27, 2
          %s2669 = sadd.s32 %s2668, %s28
          %s2670 = smul.u32 8, %s2669
          %p2671 = scmp.lt.s32.totalorder %s2670, 31
          %s2672 = scalar_select %p2671, %s2670, 31
          %s2673 = smul.addr %s2672, 8
          %s2674 = scalar_lea.vmem %s8, %s2673
        $region109: #{flash_attention_block.4} parent=104 // pred_fallthru
          _
        // Predicated region
        $region110: #{flash_attention_block.4} parent=104 // pred_check
          %p2675 = pneg %p285
        $region111: #{flash_attention_block.4} parent=104 // pred_check_branch
          %2677 = sbr.rel (%p2675) target = $region113
        $region112: #{flash_attention_block.4} parent=104 // pred_region
          %s2678 = smul.u32 %s27, 2
          %s2679 = sadd.s32 %s2678, %s28
          %s2680 = smul.u32 8, %s2679
          %p2681 = scmp.lt.s32.totalorder %s2680, 31
          %s2682 = scalar_select %p2681, %s2680, 31
          %s2683 = smul.addr %s2682, 4
          %s2684 = scalar_lea.vmem %s9, %s2683
        $region113: #{flash_attention_block.4} parent=104 // pred_fallthru
          _
      $region105: #{flash_attention_block.4} parent=5 // pred_fallthru
        _
    $region6: #{flash_attention_block.4} parent=1 // loop_footer
      %s20 = sadd.s32 1, %s16
    $region7: #{flash_attention_block.4} parent=1 // loop_footer_branch
      %15 = sbr.rel target = $region3
    $region8: #{flash_attention_block.4} parent=1 // loop_exit
      _

</llo_original>
